<compile_context>
chip_gen: v7x
topology: tpu7x:2x2x1
jax: 0.10.0
libtpu: 0.0.40
codegen_flags: <defaults>
</compile_context>

<pallas_src>
import math
import functools

import jax
import jax.numpy as jnp
from jax import lax
from jax.experimental import pallas as pl
from jax.experimental.pallas import tpu as pltpu

# ----------------------- model config (small, test-sized) -----------------------
BATCH      = 2
SEQ        = 8
LLM_DIM    = 128
LLM_HEADS  = 4
HEAD_DIM   = LLM_DIM // LLM_HEADS
LLM_DEPTH  = 2
MLP_RATIO  = 4.0
MLP_DIM    = int(LLM_DIM * MLP_RATIO)
VOCAB      = 256
VOCAB_TILE = 128   # TODO(synk): at real vocab use ~512-1024 (v7x) / 1024-2048 (v5e/v6e)
RMS_EPS    = 1e-6
VMEM_LIMIT = 48 * 1024 * 1024   # explicit per-call VMEM budget (headroom below v7x's 64 MiB)


# ----------------------------- kernel helpers ------------------------------------

def _rmsnorm(x, w):
    # f32 mean-square reduction + rsqrt (VPU/EUP), weight broadcast over rows.
    ms = jnp.mean(x * x, axis=-1, keepdims=True)
    return x * lax.rsqrt(ms + RMS_EPS) * w


# ----------------------------- Pallas kernels ------------------------------------

def llm_blocks_kernel(x_ref, n1_ref, wqkv_ref, bqkv_ref, wo_ref, bo_ref,
                      n2_ref, w1_ref, b1_ref, w2_ref, b2_ref, fn_ref,
                      h32_ref, hbf_ref, *, batch, seq, num_heads):
    """All transformer layers + final RMSNorm; one grid step per layer.

    x_ref   : (B*S, D) f32 token embeddings (constant block, fetched once)
    *_ref   : stacked per-layer params, layer selected by index_map
    fn_ref  : (1, D)   f32 final llm_norm weight (constant block)
    h32_ref : (B*S, D) f32 output; constant block index => VMEM-resident, used
              as the residual accumulator across layers; holds the final
              normalized hidden states after the last layer.
    hbf_ref : (B*S, D) bf16 copy of the normalized hidden states (lm_head input).
    """
    layer = pl.program_id(0)
    nlayers = pl.num_programs(0)

    @pl.when(layer == 0)
    def _():
        h32_ref[...] = x_ref[...]

    x = h32_ref[...]                              # (BS, D) f32 residual
    BS, D = x.shape
    hd = D // num_heads

    # ---------------- attention sub-block ----------------
    h = _rmsnorm(x, n1_ref[0])                    # f32
    qkv = jnp.dot(h.astype(jnp.bfloat16), wqkv_ref[0],
                  preferred_element_type=jnp.float32) + bqkv_ref[0]   # (BS, 3D) f32
    qkv = qkv.reshape(batch, seq, 3 * D)

    # lane-aligned 128-wide q/k/v splits; 1/sqrt(hd) is pre-folded into wq/bq.
    q = qkv[:, :, 0 * D:1 * D].astype(jnp.bfloat16)
    k = qkv[:, :, 1 * D:2 * D].astype(jnp.bfloat16)
    v = qkv[:, :, 2 * D:3 * D].astype(jnp.bfloat16)

    # TODO(synk): replace with flash-style KV tiling (and batched-over-heads
    # contractions) at real sequence lengths; kept as a static head loop with
    # single-batch-dim einsums, the only form validated to lower on Mosaic.
    head_outs = []
    for hh in range(num_heads):                   # static unroll over heads
        sl = slice(hh * hd, (hh + 1) * hd)
        qh, kh, vh = q[:, :, sl], k[:, :, sl], v[:, :, sl]           # (B, S, hd) bf16
        s = jnp.einsum('bqd,bkd->bqk', qh, kh,
                       preferred_element_type=jnp.float32)           # (B, S, S) f32
        # TODO(synk): no causal mask / RoPE(MRoPE) -- TransformerLayer source not given.
        m = jnp.max(s, axis=-1, keepdims=True)
        e = jnp.exp(s - m)                                           # f32, EUP
        denom = jnp.sum(e, axis=-1, keepdims=True)
        p = (e * pl.reciprocal(denom, approx=True)).astype(jnp.bfloat16)
        head_outs.append(jnp.einsum('bqk,bkd->bqd', p, vh,
                                    preferred_element_type=jnp.float32))
    attn = jnp.concatenate(head_outs, axis=-1).reshape(BS, D)        # (BS, D) f32

    attn = jnp.dot(attn.astype(jnp.bfloat16), wo_ref[0],
                   preferred_element_type=jnp.float32) + bo_ref[0]
    x = x + attn

    # ---------------- MLP sub-block ----------------
    h2 = _rmsnorm(x, n2_ref[0])
    m1 = jnp.dot(h2.astype(jnp.bfloat16), w1_ref[0],
                 preferred_element_type=jnp.float32) + b1_ref[0]
    # tanh-GELU lowers to the EUP slot.  TODO(synk): torch default is exact erf.
    m1 = jax.nn.gelu(m1, approximate=True)
    m2 = jnp.dot(m1.astype(jnp.bfloat16), w2_ref[0],
                 preferred_element_type=jnp.float32) + b2_ref[0]
    x = x + m2

    # carry the residual in the resident output block (no scratch accumulator)
    h32_ref[...] = x

    @pl.when(layer == nlayers - 1)
    def _():
        hn = _rmsnorm(x, fn_ref[...])             # final llm_norm, computed once
        h32_ref[...] = hn
        hbf_ref[...] = hn.astype(jnp.bfloat16)


def lmhead_kernel(h_ref, wlm_ref, logits_ref):
    """One lane-dense vocab tile of the lm_head projection.

    h_ref      : (B*S, D)  bf16 normalized hidden states (constant block)
    wlm_ref    : (D, TV)   bf16 vocab tile of the lm_head weight
    logits_ref : (B*S, TV) f32 logits tile
    """
    logits_ref[...] = jnp.dot(h_ref[...], wlm_ref[...],
                              preferred_element_type=jnp.float32)


# ----------------------------- pallas_call wrappers ------------------------------

def _layer_spec(arr):
    """Stacked-per-layer param: block = one layer slice, indexed by grid axis 0."""
    nd = arr.ndim
    return pl.BlockSpec((1,) + tuple(arr.shape[1:]),
                        lambda l, _nd=nd: (l,) + (0,) * (_nd - 1))


def run_llm_blocks(x_flat, p, *, batch, seq, num_heads):
    BS, D = x_flat.shape
    L = p["wqkv"].shape[0]
    M = p["w1"].shape[2]

    kern = functools.partial(llm_blocks_kernel, batch=batch, seq=seq,
                             num_heads=num_heads)

    # advisory cost estimate for the whole fused call
    flops = L * (2 * BS * D * (3 * D)                              # qkv proj
                 + 2 * BS * D * D                                  # out proj
                 + 4 * batch * num_heads * seq * seq * (D // num_heads)  # qk^T + pv
                 + 4 * BS * D * M)                                 # mlp
    transcendentals = L * (batch * num_heads * seq * seq + BS * M)
    w_bytes = sum(int(p[k].size) * p[k].dtype.itemsize
                  for k in ("n1", "wqkv", "bqkv", "wo", "bo",
                            "n2", "w1", "b1", "w2", "b2", "llm_norm"))
    bytes_accessed = w_bytes + int(x_flat.size) * 4 + int(BS * D) * (4 + 2)

    return pl.pallas_call(
        kern,
        out_shape=(jax.ShapeDtypeStruct((BS, D), jnp.float32),
                   jax.ShapeDtypeStruct((BS, D), jnp.bfloat16)),
        grid_spec=pltpu.PrefetchScalarGridSpec(
            num_scalar_prefetch=0,
            grid=(L,),
            in_specs=[
                pl.BlockSpec((BS, D), lambda l: (0, 0)),   # residual input (fetched once)
                _layer_spec(p["n1"]),
                _layer_spec(p["wqkv"]),
                _layer_spec(p["bqkv"]),
                _layer_spec(p["wo"]),
                _layer_spec(p["bo"]),
                _layer_spec(p["n2"]),
                _layer_spec(p["w1"]),
                _layer_spec(p["b1"]),
                _layer_spec(p["w2"]),
                _layer_spec(p["b2"]),
                pl.BlockSpec((1, D), lambda l: (0, 0)),    # final llm_norm weight
            ],
            out_specs=[pl.BlockSpec((BS, D), lambda l: (0, 0)),   # f32 resident residual
                       pl.BlockSpec((BS, D), lambda l: (0, 0))],  # bf16 normed hidden
        ),
        compiler_params=pltpu.CompilerParams(
            dimension_semantics=("arbitrary",),            # layers are sequential
            vmem_limit_bytes=VMEM_LIMIT),
        input_output_aliases={0: 0},                       # reuse residual HBM buffer
        cost_estimate=pl.CostEstimate(flops=flops,
                                      transcendentals=transcendentals,
                                      bytes_accessed=bytes_accessed),
    )(x_flat, p["n1"], p["wqkv"], p["bqkv"], p["wo"], p["bo"],
      p["n2"], p["w1"], p["b1"], p["w2"], p["b2"], p["llm_norm"])


def run_lm_head(h_bf16, w_lm):
    BS, D = h_bf16.shape
    V = w_lm.shape[1]
    TV = VOCAB_TILE if (V % VOCAB_TILE == 0) else V
    flops = 2 * BS * D * V
    bytes_accessed = int(h_bf16.size) * 2 + int(w_lm.size) * 2 + BS * V * 4
    return pl.pallas_call(
        lmhead_kernel,
        out_shape=jax.ShapeDtypeStruct((BS, V), jnp.float32),
        grid_spec=pltpu.PrefetchScalarGridSpec(
            num_scalar_prefetch=0,
            grid=(V // TV,),
            in_specs=[
                pl.BlockSpec((BS, D), lambda j: (0, 0)),   # normed hidden (bf16)
                pl.BlockSpec((D, TV), lambda j: (0, j)),   # vocab-tiled lm_head weight
            ],
            out_specs=pl.BlockSpec((BS, TV), lambda j: (0, j)),  # lane-dense logits tile
        ),
        compiler_params=pltpu.CompilerParams(
            dimension_semantics=("parallel",),             # vocab tiles are independent
            vmem_limit_bytes=VMEM_LIMIT),
        cost_estimate=pl.CostEstimate(flops=flops, transcendentals=0,
                                      bytes_accessed=bytes_accessed),
    )(h_bf16, w_lm)


# ----------------------------- parameter init ------------------------------------

def init_params(key):
    ks = jax.random.split(key, 6)
    scale = 0.02
    L, D, M, V = LLM_DEPTH, LLM_DIM, MLP_DIM, VOCAB
    bf16 = jnp.bfloat16
    q_scale = 1.0 / math.sqrt(HEAD_DIM)

    p = {}
    p["tok_emb"] = scale * jax.random.normal(ks[0], (V, D), dtype=jnp.float32)
    # stacked per-layer params (leading layer axis); MXU weights in bf16
    p["n1"] = jnp.ones((L, 1, D), jnp.float32)
    wqkv = scale * jax.random.normal(ks[1], (L, D, 3 * D), jnp.float32)
    wqkv = wqkv.at[:, :, :D].multiply(q_scale)     # fold 1/sqrt(hd) into the q projection
    p["wqkv"] = wqkv.astype(bf16)
    bqkv = jnp.zeros((L, 1, 3 * D), jnp.float32)
    p["bqkv"] = bqkv.at[:, :, :D].multiply(q_scale)
    p["wo"] = (scale * jax.random.normal(ks[2], (L, D, D), jnp.float32)).astype(bf16)
    p["bo"] = jnp.zeros((L, 1, D), jnp.float32)
    p["n2"] = jnp.ones((L, 1, D), jnp.float32)
    p["w1"] = (scale * jax.random.normal(ks[3], (L, D, M), jnp.float32)).astype(bf16)
    p["b1"] = jnp.zeros((L, 1, M), jnp.float32)
    p["w2"] = (scale * jax.random.normal(ks[4], (L, M, D), jnp.float32)).astype(bf16)
    p["b2"] = jnp.zeros((L, 1, D), jnp.float32)
    p["llm_norm"] = jnp.ones((1, D), jnp.float32)
    p["w_lm"] = (scale * jax.random.normal(ks[5], (D, V), jnp.float32)).astype(bf16)
    return p


# ----------------------------- full forward --------------------------------------

@jax.jit
def qwen25vl_forward(params, input_ids):
    # text-only path: vision_input=None, attention_mask=None, labels=None
    B, S = input_ids.shape
    # embedding gather stays in XLA glue (irregular gather; no clean tiny-kernel win)
    hidden = jnp.take(params["tok_emb"], input_ids, axis=0)     # (B, S, D)
    hidden = hidden.reshape(B * S, LLM_DIM)                     # fold batch into matmul M
    h32, hbf = run_llm_blocks(hidden, params, batch=B, seq=S, num_heads=LLM_HEADS)
    logits = run_lm_head(hbf, params["w_lm"])
    return {"loss": None,
            "logits": logits.reshape(B, S, VOCAB),
            "hidden_states": h32.reshape(B, S, LLM_DIM)}


# ----------------------------------- main -----------------------------------------

if __name__ == "__main__":
    key = jax.random.PRNGKey(0)
    pkey, dkey = jax.random.split(key)
    params = init_params(pkey)

    input_ids = jax.random.randint(dkey, (BATCH, SEQ), 0, VOCAB, dtype=jnp.int32)

    out = qwen25vl_forward(params, input_ids)
    logits = jax.block_until_ready(out["logits"])
    hidden = jax.block_until_ready(out["hidden_states"])

    assert logits.shape == (BATCH, SEQ, VOCAB)
    assert hidden.shape == (BATCH, SEQ, LLM_DIM)
    assert bool(jnp.all(jnp.isfinite(logits))) and bool(jnp.all(jnp.isfinite(hidden)))

    print("KERNEL_OK")
</pallas_src>

<mosaic_0001>
module attributes {stable_mosaic.version = 11 : i64} {
  func.func @lmhead_kernel(%arg0: i32, %arg1: memref<16x128xbf16, #tpu.memory_space<vmem>>, %arg2: memref<128x128xbf16, #tpu.memory_space<vmem>>, %arg3: memref<16x128xf32, #tpu.memory_space<vmem>>) attributes {dimension_semantics = [#tpu.dimension_semantics<parallel>], iteration_bounds = array<i64: 2>, scalar_prefetch = 0 : i64, scratch_operands = 0 : i64, tpu.core_type = #tpu.core_type<tc>, window_params = [{pipeline_mode = #tpu.pipeline_mode<synchronous>, transform_indices = @transform_0, window_bounds = array<i64: 16, 128>}, {transform_indices = @transform_1, window_bounds = array<i64: 128, 128>}, {transform_indices = @transform_2, window_bounds = array<i64: 16, 128>}]} {
    %c0 = arith.constant 0 : index
    %c0_0 = arith.constant 0 : index
    %0 = vector.load %arg1[%c0, %c0_0] : memref<16x128xbf16, #tpu.memory_space<vmem>>, vector<16x128xbf16>
    %c0_1 = arith.constant 0 : index
    %c0_2 = arith.constant 0 : index
    %1 = vector.load %arg2[%c0_1, %c0_2] : memref<128x128xbf16, #tpu.memory_space<vmem>>, vector<128x128xbf16>
    %cst = arith.constant dense<0.000000e+00> : vector<16x128xf32>
    %2 = tpu.matmul %0, %1, %cst {dimension_numbers = #tpu.dot_dimension_numbers<[1], [0], [0], [1], [0, 0, 1, 1], [], []>} : vector<16x128xbf16>, vector<128x128xbf16>, vector<16x128xf32> -> vector<16x128xf32>
    %c0_3 = arith.constant 0 : index
    %c0_4 = arith.constant 0 : index
    %3 = vector.load %arg3[%c0_3, %c0_4] : memref<16x128xf32, #tpu.memory_space<vmem>>, vector<16x128xf32>
    tpu.vector_store %arg3[%c0_3, %c0_4], %2 {strides = array<i32>} : memref<16x128xf32, #tpu.memory_space<vmem>>, vector<16x128xf32>,
    return
  }
  func.func @transform_0(%arg0: i32) -> (i32, i32) {
    %c0_i32 = arith.constant 0 : i32
    %c0_i32_0 = arith.constant 0 : i32
    %c0_i32_1 = arith.constant 0 : i32
    return %c0_i32, %c0_i32_0 : i32, i32
  }
  func.func @transform_1(%arg0: i32) -> (i32, i32) {
    %c0_i32 = arith.constant 0 : i32
    %c0_i32_0 = arith.constant 0 : i32
    return %c0_i32, %arg0 : i32, i32
  }
  func.func @transform_2(%arg0: i32) -> (i32, i32) {
    %c0_i32 = arith.constant 0 : i32
    %c0_i32_0 = arith.constant 0 : i32
    return %c0_i32, %arg0 : i32, i32
  }
}

module attributes {stable_mosaic.version = 11 : i64} {
  func.func @llm_blocks_kernel(%arg0: i32, %arg1: memref<16x128xf32, #tpu.memory_space<vmem>>, %arg2: memref<1x1x128xf32, #tpu.memory_space<vmem>>, %arg3: memref<1x128x384xbf16, #tpu.memory_space<vmem>>, %arg4: memref<1x1x384xf32, #tpu.memory_space<vmem>>, %arg5: memref<1x128x128xbf16, #tpu.memory_space<vmem>>, %arg6: memref<1x1x128xf32, #tpu.memory_space<vmem>>, %arg7: memref<1x1x128xf32, #tpu.memory_space<vmem>>, %arg8: memref<1x128x512xbf16, #tpu.memory_space<vmem>>, %arg9: memref<1x1x512xf32, #tpu.memory_space<vmem>>, %arg10: memref<1x512x128xbf16, #tpu.memory_space<vmem>>, %arg11: memref<1x1x128xf32, #tpu.memory_space<vmem>>, %arg12: memref<1x128xf32, #tpu.memory_space<vmem>>, %arg13: memref<16x128xf32, #tpu.memory_space<vmem>>, %arg14: memref<16x128xbf16, #tpu.memory_space<vmem>>) attributes {dimension_semantics = [#tpu.dimension_semantics<arbitrary>], iteration_bounds = array<i64: 2>, scalar_prefetch = 0 : i64, scratch_operands = 0 : i64, tpu.core_type = #tpu.core_type<tc>, window_params = [{pipeline_mode = #tpu.pipeline_mode<synchronous>, transform_indices = @transform_0, window_bounds = array<i64: 16, 128>}, {transform_indices = @transform_1, window_bounds = array<i64: 1, 1, 128>}, {transform_indices = @transform_2, window_bounds = array<i64: 1, 128, 384>}, {transform_indices = @transform_3, window_bounds = array<i64: 1, 1, 384>}, {transform_indices = @transform_4, window_bounds = array<i64: 1, 128, 128>}, {transform_indices = @transform_5, window_bounds = array<i64: 1, 1, 128>}, {transform_indices = @transform_6, window_bounds = array<i64: 1, 1, 128>}, {transform_indices = @transform_7, window_bounds = array<i64: 1, 128, 512>}, {transform_indices = @transform_8, window_bounds = array<i64: 1, 1, 512>}, {transform_indices = @transform_9, window_bounds = array<i64: 1, 512, 128>}, {transform_indices = @transform_10, window_bounds = array<i64: 1, 1, 128>}, {pipeline_mode = #tpu.pipeline_mode<synchronous>, transform_indices = @transform_11, window_bounds = array<i64: 1, 128>}, {pipeline_mode = #tpu.pipeline_mode<synchronous>, transform_indices = @transform_12, window_bounds = array<i64: 16, 128>}, {pipeline_mode = #tpu.pipeline_mode<synchronous>, transform_indices = @transform_13, window_bounds = array<i64: 16, 128>}]} {
    %c0_i32 = arith.constant 0 : i32
    %0 = arith.cmpi eq, %arg0, %c0_i32 : i32
    %1 = arith.extui %0 : i1 to i32
    %c0_i32_0 = arith.constant 0 : i32
    %2 = arith.cmpi ne, %1, %c0_i32_0 : i32
    scf.if %2 {
      %c0_64 = arith.constant 0 : index
      %c0_65 = arith.constant 0 : index
      %156 = vector.load %arg1[%c0_64, %c0_65] : memref<16x128xf32, #tpu.memory_space<vmem>>, vector<16x128xf32>
      %c0_66 = arith.constant 0 : index
      %c0_67 = arith.constant 0 : index
      %157 = vector.load %arg13[%c0_66, %c0_67] : memref<16x128xf32, #tpu.memory_space<vmem>>, vector<16x128xf32>
      tpu.vector_store %arg13[%c0_66, %c0_67], %156 {strides = array<i32>} : memref<16x128xf32, #tpu.memory_space<vmem>>, vector<16x128xf32>,
    } else {
    }
    %c0 = arith.constant 0 : index
    %c0_1 = arith.constant 0 : index
    %3 = vector.load %arg13[%c0, %c0_1] : memref<16x128xf32, #tpu.memory_space<vmem>>, vector<16x128xf32>
    %c0_2 = arith.constant 0 : index
    %c0_3 = arith.constant 0 : index
    %c0_4 = arith.constant 0 : index
    %4 = vector.load %arg2[%c0_2, %c0_3, %c0_4] : memref<1x1x128xf32, #tpu.memory_space<vmem>>, vector<1x1x128xf32>
    %5 = vector.shape_cast %4 : vector<1x1x128xf32> to vector<1x128xf32>
    %6 = arith.mulf %3, %3 : vector<16x128xf32>
    %cst = arith.constant dense<0.000000e+00> : vector<16xf32>
    %7 = vector.multi_reduction <add>, %6, %cst [1] : vector<16x128xf32> to vector<16xf32>
    %8 = vector.shape_cast %7 : vector<16xf32> to vector<16x1xf32>
    %cst_5 = arith.constant 1.280000e+02 : f32
    %9 = vector.broadcast %cst_5 : f32 to vector<16x1xf32>
    %10 = arith.divf %8, %9 : vector<16x1xf32>
    %cst_6 = arith.constant 9.99999997E-7 : f32
    %11 = vector.broadcast %cst_6 : f32 to vector<16x1xf32>
    %12 = arith.addf %10, %11 : vector<16x1xf32>
    %13 = math.rsqrt %12 : vector<16x1xf32>
    %14 = vector.broadcast %13 : vector<16x1xf32> to vector<16x128xf32>
    %15 = arith.mulf %3, %14 : vector<16x128xf32>
    %16 = vector.broadcast %5 : vector<1x128xf32> to vector<16x128xf32>
    %17 = arith.mulf %15, %16 : vector<16x128xf32>
    %18 = arith.truncf %17 : vector<16x128xf32> to vector<16x128xbf16>
    %c0_7 = arith.constant 0 : index
    %c0_8 = arith.constant 0 : index
    %c0_9 = arith.constant 0 : index
    %19 = vector.load %arg3[%c0_7, %c0_8, %c0_9] : memref<1x128x384xbf16, #tpu.memory_space<vmem>>, vector<1x128x384xbf16>
    %20 = vector.shape_cast %19 : vector<1x128x384xbf16> to vector<128x384xbf16>
    %cst_10 = arith.constant dense<0.000000e+00> : vector<16x384xf32>
    %21 = tpu.matmul %18, %20, %cst_10 {dimension_numbers = #tpu.dot_dimension_numbers<[1], [0], [0], [1], [0, 0, 1, 1], [], []>} : vector<16x128xbf16>, vector<128x384xbf16>, vector<16x384xf32> -> vector<16x384xf32>
    %c0_11 = arith.constant 0 : index
    %c0_12 = arith.constant 0 : index
    %c0_13 = arith.constant 0 : index
    %22 = vector.load %arg4[%c0_11, %c0_12, %c0_13] : memref<1x1x384xf32, #tpu.memory_space<vmem>>, vector<1x1x384xf32>
    %23 = vector.shape_cast %22 : vector<1x1x384xf32> to vector<1x384xf32>
    %24 = vector.broadcast %23 : vector<1x384xf32> to vector<16x384xf32>
    %25 = arith.addf %21, %24 : vector<16x384xf32>
    %26 = vector.shape_cast %25 : vector<16x384xf32> to vector<2x8x384xf32>
    %27 = vector.extract_strided_slice %26 {offsets = [0, 0, 0], sizes = [2, 8, 128], strides = [1, 1, 1]} : vector<2x8x384xf32> to vector<2x8x128xf32>
    %28 = arith.truncf %27 : vector<2x8x128xf32> to vector<2x8x128xbf16>
    %29 = vector.extract_strided_slice %26 {offsets = [0, 0, 128], sizes = [2, 8, 128], strides = [1, 1, 1]} : vector<2x8x384xf32> to vector<2x8x128xf32>
    %30 = arith.truncf %29 : vector<2x8x128xf32> to vector<2x8x128xbf16>
    %31 = vector.extract_strided_slice %26 {offsets = [0, 0, 256], sizes = [2, 8, 128], strides = [1, 1, 1]} : vector<2x8x384xf32> to vector<2x8x128xf32>
    %32 = arith.truncf %31 : vector<2x8x128xf32> to vector<2x8x128xbf16>
    %33 = vector.extract_strided_slice %28 {offsets = [0, 0, 0], sizes = [2, 8, 32], strides = [1, 1, 1]} : vector<2x8x128xbf16> to vector<2x8x32xbf16>
    %34 = vector.extract_strided_slice %30 {offsets = [0, 0, 0], sizes = [2, 8, 32], strides = [1, 1, 1]} : vector<2x8x128xbf16> to vector<2x8x32xbf16>
    %35 = vector.extract_strided_slice %32 {offsets = [0, 0, 0], sizes = [2, 8, 32], strides = [1, 1, 1]} : vector<2x8x128xbf16> to vector<2x8x32xbf16>
    "tpu.trace_start"() <{level = 10 : i32, message = "bqd,bkd->bqk"}> : () -> ()
    %cst_14 = arith.constant dense<0.000000e+00> : vector<2x8x8xf32>
    %36 = tpu.matmul %33, %34, %cst_14 {dimension_numbers = #tpu.dot_dimension_numbers<[2], [2], [1], [1], [0, 0, 0, 1, 1, 1], [0], [0]>} : vector<2x8x32xbf16>, vector<2x8x32xbf16>, vector<2x8x8xf32> -> vector<2x8x8xf32>
    "tpu.trace_stop"() : () -> ()
    %cst_15 = arith.constant dense<0xFF800000> : vector<2x8xf32>
    %37 = vector.multi_reduction <maximumf>, %36, %cst_15 [2] : vector<2x8x8xf32> to vector<2x8xf32>
    %38 = vector.shape_cast %37 : vector<2x8xf32> to vector<2x8x1xf32>
    %39 = vector.broadcast %38 : vector<2x8x1xf32> to vector<2x8x8xf32>
    %40 = arith.subf %36, %39 : vector<2x8x8xf32>
    %41 = math.exp %40 : vector<2x8x8xf32>
    %cst_16 = arith.constant dense<0.000000e+00> : vector<2x8xf32>
    %42 = vector.multi_reduction <add>, %41, %cst_16 [2] : vector<2x8x8xf32> to vector<2x8xf32>
    %43 = vector.shape_cast %42 : vector<2x8xf32> to vector<2x8x1xf32>
    %44 = tpu.reciprocal %43 {approx = true} : vector<2x8x1xf32> -> vector<2x8x1xf32>
    %45 = vector.broadcast %44 : vector<2x8x1xf32> to vector<2x8x8xf32>
    %46 = arith.mulf %41, %45 : vector<2x8x8xf32>
    %47 = arith.truncf %46 : vector<2x8x8xf32> to vector<2x8x8xbf16>
    "tpu.trace_start"() <{level = 10 : i32, message = "bqk,bkd->bqd"}> : () -> ()
    %cst_17 = arith.constant dense<0.000000e+00> : vector<2x8x32xf32>
    %48 = tpu.matmul %47, %35, %cst_17 {dimension_numbers = #tpu.dot_dimension_numbers<[2], [1], [1], [2], [0, 0, 0, 1, 1, 2], [0], [0]>} : vector<2x8x8xbf16>, vector<2x8x32xbf16>, vector<2x8x32xf32> -> vector<2x8x32xf32>
    "tpu.trace_stop"() : () -> ()
    %49 = vector.extract_strided_slice %28 {offsets = [0, 0, 32], sizes = [2, 8, 32], strides = [1, 1, 1]} : vector<2x8x128xbf16> to vector<2x8x32xbf16>
    %50 = vector.extract_strided_slice %30 {offsets = [0, 0, 32], sizes = [2, 8, 32], strides = [1, 1, 1]} : vector<2x8x128xbf16> to vector<2x8x32xbf16>
    %51 = vector.extract_strided_slice %32 {offsets = [0, 0, 32], sizes = [2, 8, 32], strides = [1, 1, 1]} : vector<2x8x128xbf16> to vector<2x8x32xbf16>
    "tpu.trace_start"() <{level = 10 : i32, message = "bqd,bkd->bqk"}> : () -> ()
    %cst_18 = arith.constant dense<0.000000e+00> : vector<2x8x8xf32>
    %52 = tpu.matmul %49, %50, %cst_18 {dimension_numbers = #tpu.dot_dimension_numbers<[2], [2], [1], [1], [0, 0, 0, 1, 1, 1], [0], [0]>} : vector<2x8x32xbf16>, vector<2x8x32xbf16>, vector<2x8x8xf32> -> vector<2x8x8xf32>
    "tpu.trace_stop"() : () -> ()
    %cst_19 = arith.constant dense<0xFF800000> : vector<2x8xf32>
    %53 = vector.multi_reduction <maximumf>, %52, %cst_19 [2] : vector<2x8x8xf32> to vector<2x8xf32>
    %54 = vector.shape_cast %53 : vector<2x8xf32> to vector<2x8x1xf32>
    %55 = vector.broadcast %54 : vector<2x8x1xf32> to vector<2x8x8xf32>
    %56 = arith.subf %52, %55 : vector<2x8x8xf32>
    %57 = math.exp %56 : vector<2x8x8xf32>
    %cst_20 = arith.constant dense<0.000000e+00> : vector<2x8xf32>
    %58 = vector.multi_reduction <add>, %57, %cst_20 [2] : vector<2x8x8xf32> to vector<2x8xf32>
    %59 = vector.shape_cast %58 : vector<2x8xf32> to vector<2x8x1xf32>
    %60 = tpu.reciprocal %59 {approx = true} : vector<2x8x1xf32> -> vector<2x8x1xf32>
    %61 = vector.broadcast %60 : vector<2x8x1xf32> to vector<2x8x8xf32>
    %62 = arith.mulf %57, %61 : vector<2x8x8xf32>
    %63 = arith.truncf %62 : vector<2x8x8xf32> to vector<2x8x8xbf16>
    "tpu.trace_start"() <{level = 10 : i32, message = "bqk,bkd->bqd"}> : () -> ()
    %cst_21 = arith.constant dense<0.000000e+00> : vector<2x8x32xf32>
    %64 = tpu.matmul %63, %51, %cst_21 {dimension_numbers = #tpu.dot_dimension_numbers<[2], [1], [1], [2], [0, 0, 0, 1, 1, 2], [0], [0]>} : vector<2x8x8xbf16>, vector<2x8x32xbf16>, vector<2x8x32xf32> -> vector<2x8x32xf32>
    "tpu.trace_stop"() : () -> ()
    %65 = vector.extract_strided_slice %28 {offsets = [0, 0, 64], sizes = [2, 8, 32], strides = [1, 1, 1]} : vector<2x8x128xbf16> to vector<2x8x32xbf16>
    %66 = vector.extract_strided_slice %30 {offsets = [0, 0, 64], sizes = [2, 8, 32], strides = [1, 1, 1]} : vector<2x8x128xbf16> to vector<2x8x32xbf16>
    %67 = vector.extract_strided_slice %32 {offsets = [0, 0, 64], sizes = [2, 8, 32], strides = [1, 1, 1]} : vector<2x8x128xbf16> to vector<2x8x32xbf16>
    "tpu.trace_start"() <{level = 10 : i32, message = "bqd,bkd->bqk"}> : () -> ()
    %cst_22 = arith.constant dense<0.000000e+00> : vector<2x8x8xf32>
    %68 = tpu.matmul %65, %66, %cst_22 {dimension_numbers = #tpu.dot_dimension_numbers<[2], [2], [1], [1], [0, 0, 0, 1, 1, 1], [0], [0]>} : vector<2x8x32xbf16>, vector<2x8x32xbf16>, vector<2x8x8xf32> -> vector<2x8x8xf32>
    "tpu.trace_stop"() : () -> ()
    %cst_23 = arith.constant dense<0xFF800000> : vector<2x8xf32>
    %69 = vector.multi_reduction <maximumf>, %68, %cst_23 [2] : vector<2x8x8xf32> to vector<2x8xf32>
    %70 = vector.shape_cast %69 : vector<2x8xf32> to vector<2x8x1xf32>
    %71 = vector.broadcast %70 : vector<2x8x1xf32> to vector<2x8x8xf32>
    %72 = arith.subf %68, %71 : vector<2x8x8xf32>
    %73 = math.exp %72 : vector<2x8x8xf32>
    %cst_24 = arith.constant dense<0.000000e+00> : vector<2x8xf32>
    %74 = vector.multi_reduction <add>, %73, %cst_24 [2] : vector<2x8x8xf32> to vector<2x8xf32>
    %75 = vector.shape_cast %74 : vector<2x8xf32> to vector<2x8x1xf32>
    %76 = tpu.reciprocal %75 {approx = true} : vector<2x8x1xf32> -> vector<2x8x1xf32>
    %77 = vector.broadcast %76 : vector<2x8x1xf32> to vector<2x8x8xf32>
    %78 = arith.mulf %73, %77 : vector<2x8x8xf32>
    %79 = arith.truncf %78 : vector<2x8x8xf32> to vector<2x8x8xbf16>
    "tpu.trace_start"() <{level = 10 : i32, message = "bqk,bkd->bqd"}> : () -> ()
    %cst_25 = arith.constant dense<0.000000e+00> : vector<2x8x32xf32>
    %80 = tpu.matmul %79, %67, %cst_25 {dimension_numbers = #tpu.dot_dimension_numbers<[2], [1], [1], [2], [0, 0, 0, 1, 1, 2], [0], [0]>} : vector<2x8x8xbf16>, vector<2x8x32xbf16>, vector<2x8x32xf32> -> vector<2x8x32xf32>
    "tpu.trace_stop"() : () -> ()
    %81 = vector.extract_strided_slice %28 {offsets = [0, 0, 96], sizes = [2, 8, 32], strides = [1, 1, 1]} : vector<2x8x128xbf16> to vector<2x8x32xbf16>
    %82 = vector.extract_strided_slice %30 {offsets = [0, 0, 96], sizes = [2, 8, 32], strides = [1, 1, 1]} : vector<2x8x128xbf16> to vector<2x8x32xbf16>
    %83 = vector.extract_strided_slice %32 {offsets = [0, 0, 96], sizes = [2, 8, 32], strides = [1, 1, 1]} : vector<2x8x128xbf16> to vector<2x8x32xbf16>
    "tpu.trace_start"() <{level = 10 : i32, message = "bqd,bkd->bqk"}> : () -> ()
    %cst_26 = arith.constant dense<0.000000e+00> : vector<2x8x8xf32>
    %84 = tpu.matmul %81, %82, %cst_26 {dimension_numbers = #tpu.dot_dimension_numbers<[2], [2], [1], [1], [0, 0, 0, 1, 1, 1], [0], [0]>} : vector<2x8x32xbf16>, vector<2x8x32xbf16>, vector<2x8x8xf32> -> vector<2x8x8xf32>
    "tpu.trace_stop"() : () -> ()
    %cst_27 = arith.constant dense<0xFF800000> : vector<2x8xf32>
    %85 = vector.multi_reduction <maximumf>, %84, %cst_27 [2] : vector<2x8x8xf32> to vector<2x8xf32>
    %86 = vector.shape_cast %85 : vector<2x8xf32> to vector<2x8x1xf32>
    %87 = vector.broadcast %86 : vector<2x8x1xf32> to vector<2x8x8xf32>
    %88 = arith.subf %84, %87 : vector<2x8x8xf32>
    %89 = math.exp %88 : vector<2x8x8xf32>
    %cst_28 = arith.constant dense<0.000000e+00> : vector<2x8xf32>
    %90 = vector.multi_reduction <add>, %89, %cst_28 [2] : vector<2x8x8xf32> to vector<2x8xf32>
    %91 = vector.shape_cast %90 : vector<2x8xf32> to vector<2x8x1xf32>
    %92 = tpu.reciprocal %91 {approx = true} : vector<2x8x1xf32> -> vector<2x8x1xf32>
    %93 = vector.broadcast %92 : vector<2x8x1xf32> to vector<2x8x8xf32>
    %94 = arith.mulf %89, %93 : vector<2x8x8xf32>
    %95 = arith.truncf %94 : vector<2x8x8xf32> to vector<2x8x8xbf16>
    "tpu.trace_start"() <{level = 10 : i32, message = "bqk,bkd->bqd"}> : () -> ()
    %cst_29 = arith.constant dense<0.000000e+00> : vector<2x8x32xf32>
    %96 = tpu.matmul %95, %83, %cst_29 {dimension_numbers = #tpu.dot_dimension_numbers<[2], [1], [1], [2], [0, 0, 0, 1, 1, 2], [0], [0]>} : vector<2x8x8xbf16>, vector<2x8x32xbf16>, vector<2x8x32xf32> -> vector<2x8x32xf32>
    "tpu.trace_stop"() : () -> ()
    %97 = tpu.concatenate %48, %64, %80, %96 in 2 : vector<2x8x32xf32>, vector<2x8x32xf32>, vector<2x8x32xf32>, vector<2x8x32xf32> -> vector<2x8x128xf32>
    %98 = vector.shape_cast %97 : vector<2x8x128xf32> to vector<16x128xf32>
    %99 = arith.truncf %98 : vector<16x128xf32> to vector<16x128xbf16>
    %c0_30 = arith.constant 0 : index
    %c0_31 = arith.constant 0 : index
    %c0_32 = arith.constant 0 : index
    %100 = vector.load %arg5[%c0_30, %c0_31, %c0_32] : memref<1x128x128xbf16, #tpu.memory_space<vmem>>, vector<1x128x128xbf16>
    %101 = vector.shape_cast %100 : vector<1x128x128xbf16> to vector<128x128xbf16>
    %cst_33 = arith.constant dense<0.000000e+00> : vector<16x128xf32>
    %102 = tpu.matmul %99, %101, %cst_33 {dimension_numbers = #tpu.dot_dimension_numbers<[1], [0], [0], [1], [0, 0, 1, 1], [], []>} : vector<16x128xbf16>, vector<128x128xbf16>, vector<16x128xf32> -> vector<16x128xf32>
    %c0_34 = arith.constant 0 : index
    %c0_35 = arith.constant 0 : index
    %c0_36 = arith.constant 0 : index
    %103 = vector.load %arg6[%c0_34, %c0_35, %c0_36] : memref<1x1x128xf32, #tpu.memory_space<vmem>>, vector<1x1x128xf32>
    %104 = vector.shape_cast %103 : vector<1x1x128xf32> to vector<1x128xf32>
    %105 = vector.broadcast %104 : vector<1x128xf32> to vector<16x128xf32>
    %106 = arith.addf %102, %105 : vector<16x128xf32>
    %107 = arith.addf %3, %106 : vector<16x128xf32>
    %c0_37 = arith.constant 0 : index
    %c0_38 = arith.constant 0 : index
    %c0_39 = arith.constant 0 : index
    %108 = vector.load %arg7[%c0_37, %c0_38, %c0_39] : memref<1x1x128xf32, #tpu.memory_space<vmem>>, vector<1x1x128xf32>
    %109 = vector.shape_cast %108 : vector<1x1x128xf32> to vector<1x128xf32>
    %110 = arith.mulf %107, %107 : vector<16x128xf32>
    %cst_40 = arith.constant dense<0.000000e+00> : vector<16xf32>
    %111 = vector.multi_reduction <add>, %110, %cst_40 [1] : vector<16x128xf32> to vector<16xf32>
    %112 = vector.shape_cast %111 : vector<16xf32> to vector<16x1xf32>
    %cst_41 = arith.constant 1.280000e+02 : f32
    %113 = vector.broadcast %cst_41 : f32 to vector<16x1xf32>
    %114 = arith.divf %112, %113 : vector<16x1xf32>
    %cst_42 = arith.constant 9.99999997E-7 : f32
    %115 = vector.broadcast %cst_42 : f32 to vector<16x1xf32>
    %116 = arith.addf %114, %115 : vector<16x1xf32>
    %117 = math.rsqrt %116 : vector<16x1xf32>
    %118 = vector.broadcast %117 : vector<16x1xf32> to vector<16x128xf32>
    %119 = arith.mulf %107, %118 : vector<16x128xf32>
    %120 = vector.broadcast %109 : vector<1x128xf32> to vector<16x128xf32>
    %121 = arith.mulf %119, %120 : vector<16x128xf32>
    %122 = arith.truncf %121 : vector<16x128xf32> to vector<16x128xbf16>
    %c0_43 = arith.constant 0 : index
    %c0_44 = arith.constant 0 : index
    %c0_45 = arith.constant 0 : index
    %123 = vector.load %arg8[%c0_43, %c0_44, %c0_45] : memref<1x128x512xbf16, #tpu.memory_space<vmem>>, vector<1x128x512xbf16>
    %124 = vector.shape_cast %123 : vector<1x128x512xbf16> to vector<128x512xbf16>
    %cst_46 = arith.constant dense<0.000000e+00> : vector<16x512xf32>
    %125 = tpu.matmul %122, %124, %cst_46 {dimension_numbers = #tpu.dot_dimension_numbers<[1], [0], [0], [1], [0, 0, 1, 1], [], []>} : vector<16x128xbf16>, vector<128x512xbf16>, vector<16x512xf32> -> vector<16x512xf32>
    %c0_47 = arith.constant 0 : index
    %c0_48 = arith.constant 0 : index
    %c0_49 = arith.constant 0 : index
    %126 = vector.load %arg9[%c0_47, %c0_48, %c0_49] : memref<1x1x512xf32, #tpu.memory_space<vmem>>, vector<1x1x512xf32>
    %127 = vector.shape_cast %126 : vector<1x1x512xf32> to vector<1x512xf32>
    %128 = vector.broadcast %127 : vector<1x512xf32> to vector<16x512xf32>
    %129 = arith.addf %125, %128 : vector<16x512xf32>
    %130 = arith.mulf %129, %129 : vector<16x512xf32>
    %131 = arith.mulf %129, %130 : vector<16x512xf32>
    %cst_50 = arith.constant 4.471500e-02 : f32
    %132 = vector.broadcast %cst_50 : f32 to vector<16x512xf32>
    %133 = arith.mulf %132, %131 : vector<16x512xf32>
    %134 = arith.addf %129, %133 : vector<16x512xf32>
    %cst_51 = arith.constant 0.797884583 : f32
    %135 = vector.broadcast %cst_51 : f32 to vector<16x512xf32>
    %136 = arith.mulf %135, %134 : vector<16x512xf32>
    %137 = math.tanh %136 : vector<16x512xf32>
    %cst_52 = arith.constant 1.000000e+00 : f32
    %138 = vector.broadcast %cst_52 : f32 to vector<16x512xf32>
    %139 = arith.addf %138, %137 : vector<16x512xf32>
    %cst_53 = arith.constant 5.000000e-01 : f32
    %140 = vector.broadcast %cst_53 : f32 to vector<16x512xf32>
    %141 = arith.mulf %140, %139 : vector<16x512xf32>
    %142 = arith.mulf %129, %141 : vector<16x512xf32>
    %143 = arith.truncf %142 : vector<16x512xf32> to vector<16x512xbf16>
    %c0_54 = arith.constant 0 : index
    %c0_55 = arith.constant 0 : index
    %c0_56 = arith.constant 0 : index
    %144 = vector.load %arg10[%c0_54, %c0_55, %c0_56] : memref<1x512x128xbf16, #tpu.memory_space<vmem>>, vector<1x512x128xbf16>
    %145 = vector.shape_cast %144 : vector<1x512x128xbf16> to vector<512x128xbf16>
    %cst_57 = arith.constant dense<0.000000e+00> : vector<16x128xf32>
    %146 = tpu.matmul %143, %145, %cst_57 {dimension_numbers = #tpu.dot_dimension_numbers<[1], [0], [0], [1], [0, 0, 1, 1], [], []>} : vector<16x512xbf16>, vector<512x128xbf16>, vector<16x128xf32> -> vector<16x128xf32>
    %c0_58 = arith.constant 0 : index
    %c0_59 = arith.constant 0 : index
    %c0_60 = arith.constant 0 : index
    %147 = vector.load %arg11[%c0_58, %c0_59, %c0_60] : memref<1x1x128xf32, #tpu.memory_space<vmem>>, vector<1x1x128xf32>
    %148 = vector.shape_cast %147 : vector<1x1x128xf32> to vector<1x128xf32>
    %149 = vector.broadcast %148 : vector<1x128xf32> to vector<16x128xf32>
    %150 = arith.addf %146, %149 : vector<16x128xf32>
    %151 = arith.addf %107, %150 : vector<16x128xf32>
    %c0_61 = arith.constant 0 : index
    %c0_62 = arith.constant 0 : index
    %152 = vector.load %arg13[%c0_61, %c0_62] : memref<16x128xf32, #tpu.memory_space<vmem>>, vector<16x128xf32>
    tpu.vector_store %arg13[%c0_61, %c0_62], %151 {strides = array<i32>} : memref<16x128xf32, #tpu.memory_space<vmem>>, vector<16x128xf32>,
    %c1_i32 = arith.constant 1 : i32
    %153 = arith.cmpi eq, %arg0, %c1_i32 : i32
    %154 = arith.extui %153 : i1 to i32
    %c0_i32_63 = arith.constant 0 : i32
    %155 = arith.cmpi ne, %154, %c0_i32_63 : i32
    scf.if %155 {
      %c0_64 = arith.constant 0 : index
      %c0_65 = arith.constant 0 : index
      %156 = vector.load %arg12[%c0_64, %c0_65] : memref<1x128xf32, #tpu.memory_space<vmem>>, vector<1x128xf32>
      %157 = arith.mulf %151, %151 : vector<16x128xf32>
      %cst_66 = arith.constant dense<0.000000e+00> : vector<16xf32>
      %158 = vector.multi_reduction <add>, %157, %cst_66 [1] : vector<16x128xf32> to vector<16xf32>
      %159 = vector.shape_cast %158 : vector<16xf32> to vector<16x1xf32>
      %cst_67 = arith.constant 1.280000e+02 : f32
      %160 = vector.broadcast %cst_67 : f32 to vector<16x1xf32>
      %161 = arith.divf %159, %160 : vector<16x1xf32>
      %cst_68 = arith.constant 9.99999997E-7 : f32
      %162 = vector.broadcast %cst_68 : f32 to vector<16x1xf32>
      %163 = arith.addf %161, %162 : vector<16x1xf32>
      %164 = math.rsqrt %163 : vector<16x1xf32>
      %165 = vector.broadcast %164 : vector<16x1xf32> to vector<16x128xf32>
      %166 = arith.mulf %151, %165 : vector<16x128xf32>
      %167 = vector.broadcast %156 : vector<1x128xf32> to vector<16x128xf32>
      %168 = arith.mulf %166, %167 : vector<16x128xf32>
      %c0_69 = arith.constant 0 : index
      %c0_70 = arith.constant 0 : index
      %169 = vector.load %arg13[%c0_69, %c0_70] : memref<16x128xf32, #tpu.memory_space<vmem>>, vector<16x128xf32>
      tpu.vector_store %arg13[%c0_69, %c0_70], %168 {strides = array<i32>} : memref<16x128xf32, #tpu.memory_space<vmem>>, vector<16x128xf32>,
      %170 = arith.truncf %168 : vector<16x128xf32> to vector<16x128xbf16>
      %c0_71 = arith.constant 0 : index
      %c0_72 = arith.constant 0 : index
      %171 = vector.load %arg14[%c0_71, %c0_72] : memref<16x128xbf16, #tpu.memory_space<vmem>>, vector<16x128xbf16>
      tpu.vector_store %arg14[%c0_71, %c0_72], %170 {strides = array<i32>} : memref<16x128xbf16, #tpu.memory_space<vmem>>, vector<16x128xbf16>,
    } else {
    }
    return
  }
  func.func @transform_0(%arg0: i32) -> (i32, i32) {
    %c0_i32 = arith.constant 0 : i32
    %c0_i32_0 = arith.constant 0 : i32
    %c0_i32_1 = arith.constant 0 : i32
    return %c0_i32, %c0_i32_0 : i32, i32
  }
  func.func @transform_1(%arg0: i32) -> (i32, i32, i32) {
    %c0_i32 = arith.constant 0 : i32
    %c0_i32_0 = arith.constant 0 : i32
    %c0_i32_1 = arith.constant 0 : i32
    return %arg0, %c0_i32, %c0_i32_0 : i32, i32, i32
  }
  func.func @transform_2(%arg0: i32) -> (i32, i32, i32) {
    %c0_i32 = arith.constant 0 : i32
    %c0_i32_0 = arith.constant 0 : i32
    %c0_i32_1 = arith.constant 0 : i32
    return %arg0, %c0_i32, %c0_i32_0 : i32, i32, i32
  }
  func.func @transform_3(%arg0: i32) -> (i32, i32, i32) {
    %c0_i32 = arith.constant 0 : i32
    %c0_i32_0 = arith.constant 0 : i32
    %c0_i32_1 = arith.constant 0 : i32
    return %arg0, %c0_i32, %c0_i32_0 : i32, i32, i32
  }
  func.func @transform_4(%arg0: i32) -> (i32, i32, i32) {
    %c0_i32 = arith.constant 0 : i32
    %c0_i32_0 = arith.constant 0 : i32
    %c0_i32_1 = arith.constant 0 : i32
    return %arg0, %c0_i32, %c0_i32_0 : i32, i32, i32
  }
  func.func @transform_5(%arg0: i32) -> (i32, i32, i32) {
    %c0_i32 = arith.constant 0 : i32
    %c0_i32_0 = arith.constant 0 : i32
    %c0_i32_1 = arith.constant 0 : i32
    return %arg0, %c0_i32, %c0_i32_0 : i32, i32, i32
  }
  func.func @transform_6(%arg0: i32) -> (i32, i32, i32) {
    %c0_i32 = arith.constant 0 : i32
    %c0_i32_0 = arith.constant 0 : i32
    %c0_i32_1 = arith.constant 0 : i32
    return %arg0, %c0_i32, %c0_i32_0 : i32, i32, i32
  }
  func.func @transform_7(%arg0: i32) -> (i32, i32, i32) {
    %c0_i32 = arith.constant 0 : i32
    %c0_i32_0 = arith.constant 0 : i32
    %c0_i32_1 = arith.constant 0 : i32
    return %arg0, %c0_i32, %c0_i32_0 : i32, i32, i32
  }
  func.func @transform_8(%arg0: i32) -> (i32, i32, i32) {
    %c0_i32 = arith.constant 0 : i32
    %c0_i32_0 = arith.constant 0 : i32
    %c0_i32_1 = arith.constant 0 : i32
    return %arg0, %c0_i32, %c0_i32_0 : i32, i32, i32
  }
  func.func @transform_9(%arg0: i32) -> (i32, i32, i32) {
    %c0_i32 = arith.constant 0 : i32
    %c0_i32_0 = arith.constant 0 : i32
    %c0_i32_1 = arith.constant 0 : i32
    return %arg0, %c0_i32, %c0_i32_0 : i32, i32, i32
  }
  func.func @transform_10(%arg0: i32) -> (i32, i32, i32) {
    %c0_i32 = arith.constant 0 : i32
    %c0_i32_0 = arith.constant 0 : i32
    %c0_i32_1 = arith.constant 0 : i32
    return %arg0, %c0_i32, %c0_i32_0 : i32, i32, i32
  }
  func.func @transform_11(%arg0: i32) -> (i32, i32) {
    %c0_i32 = arith.constant 0 : i32
    %c0_i32_0 = arith.constant 0 : i32
    %c0_i32_1 = arith.constant 0 : i32
    return %c0_i32, %c0_i32_0 : i32, i32
  }
  func.func @transform_12(%arg0: i32) -> (i32, i32) {
    %c0_i32 = arith.constant 0 : i32
    %c0_i32_0 = arith.constant 0 : i32
    %c0_i32_1 = arith.constant 0 : i32
    return %c0_i32, %c0_i32_0 : i32, i32
  }
  func.func @transform_13(%arg0: i32) -> (i32, i32) {
    %c0_i32 = arith.constant 0 : i32
    %c0_i32_0 = arith.constant 0 : i32
    %c0_i32_1 = arith.constant 0 : i32
    return %c0_i32, %c0_i32_0 : i32, i32
  }
}

</mosaic_0001>

<llo_original>
// kernel: qwen25vl_forward.3
$region0: #{qwen25vl_forward.3}
  #allocation0 [shape = 'u32[]', space=smem, size = 0x4, offset = 0x4, fixed_abs, tag = 'smem constant byte address 0x4 - core index']
  #allocation1 [shape = 'u32[144,128]{1,0:T(1,128)}', space=vmem, size = 0x12000, scoped, tag = 'internal scratch']
  %s0 = inlined_call_operand.vmem [shape: bf16[16,128], index: 0, kind: input, shape index: {}]
  %s1 = inlined_call_operand.vmem [shape: bf16[128,256], index: 1, kind: input, shape index: {}]
  %s2 = inlined_call_operand.hbm [shape: f32[16,256], index: 2, kind: output, shape index: {}]
  %s3 = sld [smem:[#allocation0]]
  $region82: #{qwen25vl_forward.3} parent=0
    _
  %s5 = ssub.s32 1, %s3
  %s6 = scalar_select 0, %s5, %s3
  $region1: #{qwen25vl_forward.3} parent=0
    #allocation2 [shape = 'u8[65536]{0}', space=vmem, size = 0x10000, scoped, tag = 'input window, operand 1']
    #allocation3 [shape = 'u8[16384]{0}', space=vmem, size = 0x4000, scoped, tag = 'output window, operand 0']
    #allocation4 [shape = 's32[2]{0}', space=sflag, size = 0x8, scoped, tag = 'scoped memory for qwen25vl_forward.3']
    %7 = vsyncpa [#allocation4], 0
    %s8 = scalar_lea.sflag [#allocation4], 1
    %9 = vsyncpa %s8, 0
    loop: start=0, step=1, limit=4
    $region2: #{qwen25vl_forward.3} parent=1 // loop_pre_header
      _
    $region3: #{qwen25vl_forward.3} parent=1 // loop_header
      %s11 = sphi 0, %s15
      %p12 = scmp.ge.s32.totalorder %s11, 4
      %s19 = sphi 0, %s19
      %s21 = sphi 0, %s19
      %s22 = sphi 0, %s21
      %s36 = sphi 0, %s22
      %s42 = sphi 0, %s44
      %s45 = sphi 0, %s42
      %s46 = sphi 0, %s45
      %s62 = sphi 0, %s46
      %s68 = sphi 0, %s70
      %s71 = sphi 0, %s68
      %s72 = sphi 0, %s71
      %s88 = sphi 0, %s72
    $region4: #{qwen25vl_forward.3} parent=1 // loop_header_branch
      %14 = sbr.rel (%p12) target = $region8
    $region5: #{qwen25vl_forward.3} parent=1 // loop_body
      %s16 = ssub.s32 %s11, 1
      %s17 = ssub.s32 %s11, 2
      %s18 = sadd.s32 %s11, 1
      %s20 = sadd.s32 %s19, 1
      %p23 = scmp.eq.s32.totalorder %s11, 1
      %p24 = scmp.ne.s32.totalorder %s19, %s21
      %p25 = scmp.eq.s32.totalorder %s11, 0
      %p26 = por %p24, %p25
      %p27 = scmp.ne.s32.totalorder %s19, %s21
      %p28 = scmp.eq.s32.totalorder %s16, 1
      %p29 = por %p27, %p28
      %p30 = scmp.ne.s32.totalorder %s21, %s22
      %p31 = scmp.eq.s32.totalorder %s16, 0
      %p32 = por %p30, %p31
      %p33 = scmp.ne.s32.totalorder %s21, %s22
      %p34 = scmp.eq.s32.totalorder %s17, 1
      %p35 = por %p33, %p34
      %p37 = scmp.ne.s32.totalorder %s22, %s36
      %p38 = scmp.eq.s32.totalorder %s17, 0
      %p39 = por %p37, %p38
      %s40 = ssub.s32 %s11, %s18
      %p41 = scmp.eq.s32.totalorder %s40, 0
      %s43 = sadd.s32 %s42, 1
      %s44 = scalar_select %p41, %s42, %s43
      %p47 = pneg %p41
      %p48 = scmp.eq.s32.totalorder %s11, 1
      %p49 = por %p47, %p48
      %p50 = scmp.ne.s32.totalorder %s42, %s45
      %p51 = scmp.eq.s32.totalorder %s11, 0
      %p52 = por %p50, %p51
      %p53 = scmp.ne.s32.totalorder %s42, %s45
      %p54 = scmp.eq.s32.totalorder %s16, 1
      %p55 = por %p53, %p54
      %p56 = scmp.ne.s32.totalorder %s45, %s46
      %p57 = scmp.eq.s32.totalorder %s16, 0
      %p58 = por %p56, %p57
      %p59 = scmp.ne.s32.totalorder %s45, %s46
      %p60 = scmp.eq.s32.totalorder %s17, 1
      %p61 = por %p59, %p60
      %p63 = scmp.ne.s32.totalorder %s46, %s62
      %p64 = scmp.eq.s32.totalorder %s17, 0
      %p65 = por %p63, %p64
      %s66 = ssub.s32 %s11, %s18
      %p67 = scmp.eq.s32.totalorder %s66, 0
      %s69 = sadd.s32 %s68, 1
      %s70 = scalar_select %p67, %s68, %s69
      %p73 = pneg %p67
      %p74 = scmp.eq.s32.totalorder %s11, 1
      %p75 = por %p73, %p74
      %p76 = scmp.ne.s32.totalorder %s68, %s71
      %p77 = scmp.eq.s32.totalorder %s11, 0
      %p78 = por %p76, %p77
      %p79 = scmp.ne.s32.totalorder %s68, %s71
      %p80 = scmp.eq.s32.totalorder %s16, 1
      %p81 = por %p79, %p80
      %p82 = scmp.ne.s32.totalorder %s71, %s72
      %p83 = scmp.eq.s32.totalorder %s16, 0
      %p84 = por %p82, %p83
      %p85 = scmp.ne.s32.totalorder %s71, %s72
      %p86 = scmp.eq.s32.totalorder %s17, 1
      %p87 = por %p85, %p86
      %p89 = scmp.ne.s32.totalorder %s72, %s88
      %p90 = scmp.eq.s32.totalorder %s17, 0
      %p91 = por %p89, %p90
      %p92 = scmp.le.s32.totalorder 1, %s11
      %p93 = scmp.lt.s32.totalorder %s11, 3
      %p94 = pnand %p92, %p93
      %p95 = pneg %p94
      // Predicated region
      $region9: #{qwen25vl_forward.3} parent=5 // pred_check
        _
      $region10: #{qwen25vl_forward.3} parent=5 // pred_check_branch
        %97 = sbr.rel (%p94) target = $region12
      $region11: #{qwen25vl_forward.3} parent=5 // pred_region
        %s98 = ssub.s32 %s11, 1
        // Predicated region
        $region13: #{qwen25vl_forward.3} parent=11 // pred_check
          %p99 = pneg %p32
        $region14: #{qwen25vl_forward.3} parent=11 // pred_check_branch
          %101 = sbr.rel (%p99) target = $region16
        $region15: #{qwen25vl_forward.3} parent=11 // pred_region
          _
        $region16: #{qwen25vl_forward.3} parent=11 // pred_fallthru
          _
      $region12: #{qwen25vl_forward.3} parent=5 // pred_fallthru
        _
      %p102 = scmp.lt.s32.totalorder %s11, 2
      // Predicated region
      $region17: #{qwen25vl_forward.3} parent=5 // pred_check
        %p103 = pneg %p102
      $region18: #{qwen25vl_forward.3} parent=5 // pred_check_branch
        %105 = sbr.rel (%p103) target = $region20
      $region19: #{qwen25vl_forward.3} parent=5 // pred_region
        // Predicated region
        $region21: #{qwen25vl_forward.3} parent=19 // pred_check
          %p106 = pneg %p52
        $region22: #{qwen25vl_forward.3} parent=19 // pred_check_branch
          %108 = sbr.rel (%p106) target = $region24
        $region23: #{qwen25vl_forward.3} parent=19 // pred_region
          %s109 = sand.u32 %s42, 1
          %s110 = sand.u32 %s42, 1
          %s111 = smul.addr %s110, 64
          %s112 = scalar_lea.vmem [#allocation2], %s111
          %s113 = smul.addr %s11, 4
          %s114 = scalar_lea.vmem %s1, %s113
          // Predicated region
          $region25: #{qwen25vl_forward.3} parent=23 // pred_check
            _
          $region26: #{qwen25vl_forward.3} parent=23 // pred_check_branch
            %116 = sbr.rel (0) target = $region28
          $region27: #{qwen25vl_forward.3} parent=23 // pred_region
            // Predicated region
            $region29: #{qwen25vl_forward.3} parent=27 // pred_check
              _
            $region30: #{qwen25vl_forward.3} parent=27 // pred_check_branch
              %118 = sbr.rel target = $region32
            $region31: #{qwen25vl_forward.3} parent=27 // pred_region
              // Predicated region
              $region44: #{qwen25vl_forward.3} parent=31 // pred_check
                _
              $region45: #{qwen25vl_forward.3} parent=31 // pred_check_branch
                %163 = sbr.rel (0) target = $region47
              $region46: #{qwen25vl_forward.3} parent=31 // pred_region
                loop: start=0, step=1, limit=1
                $region48: #{qwen25vl_forward.3} parent=46 // loop_pre_header
                  _
                $region49: #{qwen25vl_forward.3} parent=46 // loop_header
                  %s165 = sphi 0, %s169
                  %p166 = scmp.ge.s32.totalorder %s165, 1
                  %s170 = sphi %s114, %s114
                  %s171 = sphi %s112, %s112
                $region50: #{qwen25vl_forward.3} parent=46 // loop_header_branch
                  %168 = sbr.rel (%p166) target = $region54
                $region51: #{qwen25vl_forward.3} parent=46 // loop_body
                  _
                $region52: #{qwen25vl_forward.3} parent=46 // loop_footer
                  %s169 = sadd.s32 1, %s165
                $region53: #{qwen25vl_forward.3} parent=46 // loop_footer_branch
                  %164 = sbr.rel target = $region49
                $region54: #{qwen25vl_forward.3} parent=46 // loop_exit
                  _
                loop: start=0, step=1, limit=1
                $region55: #{qwen25vl_forward.3} parent=46 // loop_pre_header
                  _
                $region56: #{qwen25vl_forward.3} parent=46 // loop_header
                  %s174 = sphi 0, %s178
                  %p175 = scmp.ge.s32.totalorder %s174, 1
                  %s179 = sphi %s114, %s114
                  %s180 = sphi %s112, %s112
                $region57: #{qwen25vl_forward.3} parent=46 // loop_header_branch
                  %177 = sbr.rel (%p175) target = $region61
                $region58: #{qwen25vl_forward.3} parent=46 // loop_body
                  %v181 = vld [vmem:[%s179] sm:$0xf]
                  %182 = vst [vmem:[%s180] sm:$0xf] %v181
                  %v183 = vld [vmem:[%s179 + $0x8] sm:$0xf]
                  %184 = vst [vmem:[%s180 + $0x4] sm:$0xf] %v183
                  %v185 = vld [vmem:[%s179 + $0x10] sm:$0xf]
                  %186 = vst [vmem:[%s180 + $0x8] sm:$0xf] %v185
                  %v187 = vld [vmem:[%s179 + $0x18] sm:$0xf]
                  %188 = vst [vmem:[%s180 + $0xc] sm:$0xf] %v187
                  %v189 = vld [vmem:[%s179 + $0x20] sm:$0xf]
                  %190 = vst [vmem:[%s180 + $0x10] sm:$0xf] %v189
                  %v191 = vld [vmem:[%s179 + $0x28] sm:$0xf]
                  %192 = vst [vmem:[%s180 + $0x14] sm:$0xf] %v191
                  %v193 = vld [vmem:[%s179 + $0x30] sm:$0xf]
                  %194 = vst [vmem:[%s180 + $0x18] sm:$0xf] %v193
                  %v195 = vld [vmem:[%s179 + $0x38] sm:$0xf]
                  %196 = vst [vmem:[%s180 + $0x1c] sm:$0xf] %v195
                  %v197 = vld [vmem:[%s179 + $0x40] sm:$0xf]
                  %198 = vst [vmem:[%s180 + $0x20] sm:$0xf] %v197
                  %v199 = vld [vmem:[%s179 + $0x48] sm:$0xf]
                  %200 = vst [vmem:[%s180 + $0x24] sm:$0xf] %v199
                  %v201 = vld [vmem:[%s179 + $0x50] sm:$0xf]
                  %202 = vst [vmem:[%s180 + $0x28] sm:$0xf] %v201
                  %v203 = vld [vmem:[%s179 + $0x58] sm:$0xf]
                  %204 = vst [vmem:[%s180 + $0x2c] sm:$0xf] %v203
                  %v205 = vld [vmem:[%s179 + $0x60] sm:$0xf]
                  %206 = vst [vmem:[%s180 + $0x30] sm:$0xf] %v205
                  %v207 = vld [vmem:[%s179 + $0x68] sm:$0xf]
                  %208 = vst [vmem:[%s180 + $0x34] sm:$0xf] %v207
                  %v209 = vld [vmem:[%s179 + $0x70] sm:$0xf]
                  %210 = vst [vmem:[%s180 + $0x38] sm:$0xf] %v209
                  %v211 = vld [vmem:[%s179 + $0x78] sm:$0xf]
                  %212 = vst [vmem:[%s180 + $0x3c] sm:$0xf] %v211
                $region59: #{qwen25vl_forward.3} parent=46 // loop_footer
                  %s178 = sadd.s32 1, %s174
                $region60: #{qwen25vl_forward.3} parent=46 // loop_footer_branch
                  %173 = sbr.rel target = $region56
                $region61: #{qwen25vl_forward.3} parent=46 // loop_exit
                  _
              $region47: #{qwen25vl_forward.3} parent=31 // pred_fallthru
                _
            $region32: #{qwen25vl_forward.3} parent=27 // pred_fallthru
              _
            // Predicated region
            $region33: #{qwen25vl_forward.3} parent=27 // pred_check
              _
            $region34: #{qwen25vl_forward.3} parent=27 // pred_check_branch
              %120 = sbr.rel (0) target = $region36
            $region35: #{qwen25vl_forward.3} parent=27 // pred_region
              loop: start=0, step=1, limit=1
              $region37: #{qwen25vl_forward.3} parent=35 // loop_pre_header
                _
              $region38: #{qwen25vl_forward.3} parent=35 // loop_header
                %s123 = sphi 0, %s127
                %p124 = scmp.ge.s32.totalorder %s123, 1
                %s128 = sphi %s114, %s114
                %s129 = sphi %s112, %s112
              $region39: #{qwen25vl_forward.3} parent=35 // loop_header_branch
                %126 = sbr.rel (%p124) target = $region43
              $region40: #{qwen25vl_forward.3} parent=35 // loop_body
                %v130 = vld [vmem:[%s128] sm:$0xf]
                %131 = vst [vmem:[%s129] sm:$0xf] %v130
                %v132 = vld [vmem:[%s128 + $0x8] sm:$0xf]
                %133 = vst [vmem:[%s129 + $0x4] sm:$0xf] %v132
                %v134 = vld [vmem:[%s128 + $0x10] sm:$0xf]
                %135 = vst [vmem:[%s129 + $0x8] sm:$0xf] %v134
                %v136 = vld [vmem:[%s128 + $0x18] sm:$0xf]
                %137 = vst [vmem:[%s129 + $0xc] sm:$0xf] %v136
                %v138 = vld [vmem:[%s128 + $0x20] sm:$0xf]
                %139 = vst [vmem:[%s129 + $0x10] sm:$0xf] %v138
                %v140 = vld [vmem:[%s128 + $0x28] sm:$0xf]
                %141 = vst [vmem:[%s129 + $0x14] sm:$0xf] %v140
                %v142 = vld [vmem:[%s128 + $0x30] sm:$0xf]
                %143 = vst [vmem:[%s129 + $0x18] sm:$0xf] %v142
                %v144 = vld [vmem:[%s128 + $0x38] sm:$0xf]
                %145 = vst [vmem:[%s129 + $0x1c] sm:$0xf] %v144
                %v146 = vld [vmem:[%s128 + $0x40] sm:$0xf]
                %147 = vst [vmem:[%s129 + $0x20] sm:$0xf] %v146
                %v148 = vld [vmem:[%s128 + $0x48] sm:$0xf]
                %149 = vst [vmem:[%s129 + $0x24] sm:$0xf] %v148
                %v150 = vld [vmem:[%s128 + $0x50] sm:$0xf]
                %151 = vst [vmem:[%s129 + $0x28] sm:$0xf] %v150
                %v152 = vld [vmem:[%s128 + $0x58] sm:$0xf]
                %153 = vst [vmem:[%s129 + $0x2c] sm:$0xf] %v152
                %v154 = vld [vmem:[%s128 + $0x60] sm:$0xf]
                %155 = vst [vmem:[%s129 + $0x30] sm:$0xf] %v154
                %v156 = vld [vmem:[%s128 + $0x68] sm:$0xf]
                %157 = vst [vmem:[%s129 + $0x34] sm:$0xf] %v156
                %v158 = vld [vmem:[%s128 + $0x70] sm:$0xf]
                %159 = vst [vmem:[%s129 + $0x38] sm:$0xf] %v158
                %v160 = vld [vmem:[%s128 + $0x78] sm:$0xf]
                %161 = vst [vmem:[%s129 + $0x3c] sm:$0xf] %v160
              $region41: #{qwen25vl_forward.3} parent=35 // loop_footer
                %s127 = sadd.s32 1, %s123
              $region42: #{qwen25vl_forward.3} parent=35 // loop_footer_branch
                %122 = sbr.rel target = $region38
              $region43: #{qwen25vl_forward.3} parent=35 // loop_exit
                _
            $region36: #{qwen25vl_forward.3} parent=27 // pred_fallthru
              _
          $region28: #{qwen25vl_forward.3} parent=23 // pred_fallthru
            _
          %213 = vnop
        $region24: #{qwen25vl_forward.3} parent=19 // pred_fallthru
          _
      $region20: #{qwen25vl_forward.3} parent=5 // pred_fallthru
        _
      %p214 = scmp.le.s32.totalorder 1, %s11
      %p215 = scmp.lt.s32.totalorder %s11, 3
      %p216 = pnand %p214, %p215
      %p217 = pneg %p216
      // Predicated region
      $region62: #{qwen25vl_forward.3} parent=5 // pred_check
        _
      $region63: #{qwen25vl_forward.3} parent=5 // pred_check_branch
        %219 = sbr.rel (%p216) target = $region65
      $region64: #{qwen25vl_forward.3} parent=5 // pred_region
        %s220 = ssub.s32 %s11, 1
        %s221 = sand.u32 %s45, 1
        %s222 = sand.u32 %s45, 1
        %s223 = smul.addr %s222, 64
        %s224 = scalar_lea.vmem [#allocation2], %s223
        // Predicated region
        $region66: #{qwen25vl_forward.3} parent=64 // pred_check
          %p225 = pneg %p58
        $region67: #{qwen25vl_forward.3} parent=64 // pred_check_branch
          %227 = sbr.rel (%p225) target = $region69
        $region68: #{qwen25vl_forward.3} parent=64 // pred_region
          _
        $region69: #{qwen25vl_forward.3} parent=64 // pred_fallthru
          _
        %p228 = pneg %p32
        %p229 = pneg %p29
        %s230 = sand.u32 %s45, 1
        %s231 = sand.u32 %s45, 1
        %s232 = smul.addr %s231, 64
        %s233 = scalar_lea.vmem [#allocation2], %s232
        %p234 = pneg %p58
        %p235 = pneg %p55
        %p236 = pneg %p84
        %p237 = pneg %p81
        %s238 = sand.u32 %s71, 1
        %s239 = scalar_lea.sflag [#allocation4], %s238
        %s240 = sand.u32 %s71, 1
        %s241 = smul.addr %s240, 16
        %s242 = scalar_lea.vmem [#allocation3], %s241
        %v244 = vld [vmem:[%s0] sm:$0xf]
        %v245 = vld [vmem:[%s0 + $0x4] sm:$0xf]
        %v246 = vld [vmem:[%s224] sm:$0xf]
        %v247 = vld [vmem:[%s224 + $0x4] sm:$0xf]
        %v248 = vld [vmem:[%s224 + $0x8] sm:$0xf]
        %v249 = vld [vmem:[%s224 + $0xc] sm:$0xf]
        %v250 = vld [vmem:[%s224 + $0x10] sm:$0xf]
        %v251 = vld [vmem:[%s224 + $0x14] sm:$0xf]
        %v252 = vld [vmem:[%s224 + $0x18] sm:$0xf]
        %v253 = vld [vmem:[%s224 + $0x1c] sm:$0xf]
        %v254 = vld [vmem:[%s224 + $0x20] sm:$0xf]
        %v255 = vld [vmem:[%s224 + $0x24] sm:$0xf]
        %v256 = vld [vmem:[%s224 + $0x28] sm:$0xf]
        %v257 = vld [vmem:[%s224 + $0x2c] sm:$0xf]
        %v258 = vld [vmem:[%s224 + $0x30] sm:$0xf]
        %v259 = vld [vmem:[%s224 + $0x34] sm:$0xf]
        %v260 = vld [vmem:[%s224 + $0x38] sm:$0xf]
        %v261 = vld [vmem:[%s224 + $0x3c] sm:$0xf]
        %v264 = vunpack.c.l.b16 %v244
        %v265 = vunpack.c.l.b16 %v245
        %v266 = vpack.c.b16 %v265, %v264
        %v284 = vunpack.c.l.b16 %v246
        %v285 = vunpack.c.l.b16 %v247
        %v286 = vunpack.c.l.b16 %v248
        %v287 = vunpack.c.l.b16 %v249
        %v288 = vunpack.c.l.b16 %v250
        %v289 = vunpack.c.l.b16 %v251
        %v290 = vunpack.c.l.b16 %v252
        %v291 = vunpack.c.l.b16 %v253
        %v292 = vunpack.c.l.b16 %v254
        %v293 = vunpack.c.l.b16 %v255
        %v294 = vunpack.c.l.b16 %v256
        %v295 = vunpack.c.l.b16 %v257
        %v296 = vunpack.c.l.b16 %v258
        %v297 = vunpack.c.l.b16 %v259
        %v298 = vunpack.c.l.b16 %v260
        %v299 = vunpack.c.l.b16 %v261
        %v300 = vpack.c.b16 %v285, %v284
        %v301 = vpack.c.b16 %v287, %v286
        %v302 = vpack.c.b16 %v289, %v288
        %v303 = vpack.c.b16 %v291, %v290
        %v304 = vpack.c.b16 %v293, %v292
        %v305 = vpack.c.b16 %v295, %v294
        %v306 = vpack.c.b16 %v297, %v296
        %v307 = vpack.c.b16 %v299, %v298
        %316 = vmatprep.subr.bf16.mxu0 0
        %317 = vmatpush1.bf16.msra.mxu0 %v300
        %318 = vmatprep.subr.bf16.mxu0 0
        %319 = vmatpush1.bf16.msra.mxu0 %v301
        %320 = vmatprep.subr.bf16.mxu0 0
        %321 = vmatpush1.bf16.msra.mxu0 %v302
        %322 = vmatprep.subr.bf16.mxu0 0
        %323 = vmatpush1.bf16.msra.mxu0 %v303
        %324 = vmatprep.subr.bf16.mxu0 0
        %325 = vmatpush1.bf16.msra.mxu0 %v304
        %326 = vmatprep.subr.bf16.mxu0 0
        %327 = vmatpush1.bf16.msra.mxu0 %v305
        %328 = vmatprep.subr.bf16.mxu0 0
        %329 = vmatpush1.bf16.msra.mxu0 %v306
        %330 = vmatprep.subr.bf16.mxu0 0
        %331 = vmatpush1.bf16.msra.mxu0 %v307
        %332 = vmatprep.subr.bf16.mxu0 0
        %333 = vmatpush1.bf16.msra.mxu0 0
        %334 = vmatprep.subr.bf16.mxu0 0
        %335 = vmatpush1.bf16.msra.mxu0 0
        %336 = vmatprep.subr.bf16.mxu0 0
        %337 = vmatpush1.bf16.msra.mxu0 0
        %338 = vmatprep.subr.bf16.mxu0 0
        %339 = vmatpush1.bf16.msra.mxu0 0
        %340 = vmatprep.subr.bf16.mxu0 0
        %341 = vmatpush1.bf16.msra.mxu0 0
        %342 = vmatprep.subr.bf16.mxu0 0
        %343 = vmatpush1.bf16.msra.mxu0 0
        %344 = vmatprep.subr.bf16.mxu0 0
        %345 = vmatpush1.bf16.msra.mxu0 0
        %346 = vmatprep.subr.bf16.mxu0 0
        %347 = vmatpush1.bf16.msra.mxu0 0
        %348 = vmatprep.mubr.bf16.mxu0 0
        %349 = vmatmul.mubr.bf16.gmra.mrb[0].mxu0 %v266
        %v350 = vpop.f32.mrb[0].mxu0
        %v351 = vadd.f32 0.0, %v350
        %v352 = vpop.f32.mrb[0].mxu0
        %v353 = vpop.f32.mrb[0].mxu0
        %v354 = vadd.f32 0.0, %v353
        %v355 = vpop.f32.mrb[0].mxu0
        %356 = vdwg.mxu0
        %357 = vst [vmem:[%s242] sm:$0xff] %v351
        %358 = vst [vmem:[%s242 + $0x8] sm:$0xff] %v354
        %s359 = sand.u32 %s71, 1
        %s360 = scalar_lea.sflag [#allocation4], %s359
        %s361 = sand.u32 %s71, 1
        %s362 = smul.addr %s361, 16
        %s363 = scalar_lea.vmem [#allocation3], %s362
        // Predicated region
        $region70: #{qwen25vl_forward.3} parent=64 // pred_check
          %p364 = pneg %p81
        $region71: #{qwen25vl_forward.3} parent=64 // pred_check_branch
          %366 = sbr.rel (%p364) target = $region73
        $region72: #{qwen25vl_forward.3} parent=64 // pred_region
          %s368 = ssub.s32 256, 256
          %369 = vsyncadd %s360, %s368
          %s370 = smul.addr %s16, 128
          %s371 = scalar_lea.hbm %s2, %s370
          %s372 = sshll.u32 %s363, 4
          %s373 = int_to_ptr.vmem [resolvable:$true] %s372
          %378 = dma.vmem_to_hbm [thread:$0]  %s373, 256, %s371, %s360, 128, 256, 8
        $region73: #{qwen25vl_forward.3} parent=64 // pred_fallthru
          _
      $region65: #{qwen25vl_forward.3} parent=5 // pred_fallthru
        _
      %p379 = scmp.le.s32.totalorder 2, %s11
      // Predicated region
      $region74: #{qwen25vl_forward.3} parent=5 // pred_check
        %p380 = pneg %p379
      $region75: #{qwen25vl_forward.3} parent=5 // pred_check_branch
        %382 = sbr.rel (%p380) target = $region77
      $region76: #{qwen25vl_forward.3} parent=5 // pred_region
        %s383 = ssub.s32 %s11, 2
        // Predicated region
        $region78: #{qwen25vl_forward.3} parent=76 // pred_check
          %p384 = pneg %p87
        $region79: #{qwen25vl_forward.3} parent=76 // pred_check_branch
          %386 = sbr.rel (%p384) target = $region81
        $region80: #{qwen25vl_forward.3} parent=76 // pred_region
          %s387 = sand.u32 %s72, 1
          %s388 = scalar_lea.sflag [#allocation4], %s387
          %s389 = sand.u32 %s72, 1
          %s390 = smul.addr %s389, 16
          %s391 = scalar_lea.vmem [#allocation3], %s390
          %392 = dma.done %s388, 256
        $region81: #{qwen25vl_forward.3} parent=76 // pred_fallthru
          _
      $region77: #{qwen25vl_forward.3} parent=5 // pred_fallthru
        _
    $region6: #{qwen25vl_forward.3} parent=1 // loop_footer
      %s15 = sadd.s32 1, %s11
    $region7: #{qwen25vl_forward.3} parent=1 // loop_footer_branch
      %10 = sbr.rel target = $region3
    $region8: #{qwen25vl_forward.3} parent=1 // loop_exit
      _
    %393 = vsyncpa [#allocation4], 1
    %s394 = scalar_lea.sflag [#allocation4], 1
    %395 = vsyncpa %s394, 1

// kernel: qwen25vl_forward.2
$region0: #{qwen25vl_forward.2}
  #allocation0 [shape = 'u32[]', space=smem, size = 0x4, offset = 0x4, fixed_abs, tag = 'smem constant byte address 0x4 - core index']
  #allocation1 [shape = 'u32[144,128]{1,0:T(1,128)}', space=vmem, size = 0x12000, scoped, tag = 'internal scratch']
  %s0 = inlined_call_operand.vmem [shape: f32[16,128], index: 0, kind: input, shape index: {}, may-alias: {0,12}]
  %s1 = inlined_call_operand.vmem [shape: f32[2,1,128], index: 1, kind: input, shape index: {}]
  %s2 = inlined_call_operand.hbm [shape: bf16[2,128,384], index: 2, kind: input, shape index: {}]
  %s3 = inlined_call_operand.vmem [shape: f32[2,1,384], index: 3, kind: input, shape index: {}]
  %s4 = inlined_call_operand.vmem [shape: bf16[2,128,128], index: 4, kind: input, shape index: {}]
  %s5 = inlined_call_operand.vmem [shape: f32[2,1,128], index: 5, kind: input, shape index: {}]
  %s6 = inlined_call_operand.vmem [shape: f32[2,1,128], index: 6, kind: input, shape index: {}]
  %s7 = inlined_call_operand.hbm [shape: bf16[2,128,512], index: 7, kind: input, shape index: {}]
  %s8 = inlined_call_operand.vmem [shape: f32[2,1,512], index: 8, kind: input, shape index: {}]
  %s9 = inlined_call_operand.hbm [shape: bf16[2,512,128], index: 9, kind: input, shape index: {}]
  %s10 = inlined_call_operand.vmem [shape: f32[2,1,128], index: 10, kind: input, shape index: {}]
  %s11 = inlined_call_operand.vmem [shape: f32[1,128], index: 11, kind: input, shape index: {}]
  %s12 = inlined_call_operand.vmem [shape: f32[16,128], index: 12, kind: output, shape index: {0}, may-alias: {0,12}]
  %s13 = inlined_call_operand.vmem [shape: bf16[16,128], index: 13, kind: output, shape index: {1}]
  %14 = xla_tuple %s12, %s13
  %s15 = sld [smem:[#allocation0]]
  $region109: #{qwen25vl_forward.2} parent=0
    _
  %s17 = ssub.s32 1, %s15
  %s18 = scalar_select 0, %s17, %s15
  $region1: #{qwen25vl_forward.2} parent=0
    #allocation2 [shape = 'u8[196608]{0}', space=vmem, size = 0x30000, scoped, tag = 'input window, operand 2']
    #allocation3 [shape = 's32[2]{0}', space=sflag, size = 0x8, scoped, tag = 'scoped memory for qwen25vl_forward.2']
    #allocation4 [shape = 'u8[262144]{0}', space=vmem, size = 0x40000, scoped, tag = 'input window, operand 7']
    #allocation5 [shape = 's32[2]{0}', space=sflag, size = 0x8, scoped, tag = 'scoped memory for qwen25vl_forward.2']
    #allocation6 [shape = 'u8[262144]{0}', space=vmem, size = 0x40000, scoped, tag = 'input window, operand 9']
    %19 = vsyncpa [#allocation3], 0
    %s20 = scalar_lea.sflag [#allocation3], 1
    %21 = vsyncpa %s20, 0
    %22 = vsyncpa [#allocation5], 0
    %s23 = scalar_lea.sflag [#allocation5], 1
    %24 = vsyncpa %s23, 0
    loop: start=0, step=1, limit=4
    $region2: #{qwen25vl_forward.2} parent=1 // loop_pre_header
      _
    $region3: #{qwen25vl_forward.2} parent=1 // loop_header
      %s26 = sphi 0, %s30
      %p27 = scmp.ge.s32.totalorder %s26, 4
      %s34 = sphi 0, %s34
      %s36 = sphi 0, %s34
      %s37 = sphi 0, %s36
      %s51 = sphi 0, %s37
      %s57 = sphi 0, %s59
      %s60 = sphi 0, %s57
      %s61 = sphi 0, %s60
      %s77 = sphi 0, %s61
      %s83 = sphi 0, %s85
      %s86 = sphi 0, %s83
      %s87 = sphi 0, %s86
      %s103 = sphi 0, %s87
      %s109 = sphi 0, %s111
      %s112 = sphi 0, %s109
      %s113 = sphi 0, %s112
      %s129 = sphi 0, %s113
      %s135 = sphi 0, %s137
      %s138 = sphi 0, %s135
      %s139 = sphi 0, %s138
      %s155 = sphi 0, %s139
      %s161 = sphi 0, %s163
      %s164 = sphi 0, %s161
      %s165 = sphi 0, %s164
      %s181 = sphi 0, %s165
      %s187 = sphi 0, %s189
      %s190 = sphi 0, %s187
      %s191 = sphi 0, %s190
      %s207 = sphi 0, %s191
      %s213 = sphi 0, %s215
      %s216 = sphi 0, %s213
      %s217 = sphi 0, %s216
      %s233 = sphi 0, %s217
      %s239 = sphi 0, %s241
      %s242 = sphi 0, %s239
      %s243 = sphi 0, %s242
      %s259 = sphi 0, %s243
      %s265 = sphi 0, %s267
      %s268 = sphi 0, %s265
      %s269 = sphi 0, %s268
      %s285 = sphi 0, %s269
      %s291 = sphi 0, %s293
      %s294 = sphi 0, %s291
      %s295 = sphi 0, %s294
      %s311 = sphi 0, %s295
      %s315 = sphi 0, %s315
      %s317 = sphi 0, %s315
      %s318 = sphi 0, %s317
      %s332 = sphi 0, %s318
      %s336 = sphi 0, %s336
      %s338 = sphi 0, %s336
      %s339 = sphi 0, %s338
      %s353 = sphi 0, %s339
      %s357 = sphi 0, %s357
      %s359 = sphi 0, %s357
      %s360 = sphi 0, %s359
      %s374 = sphi 0, %s360
    $region4: #{qwen25vl_forward.2} parent=1 // loop_header_branch
      %29 = sbr.rel (%p27) target = $region8
    $region5: #{qwen25vl_forward.2} parent=1 // loop_body
      %s31 = ssub.s32 %s26, 1
      %s32 = ssub.s32 %s26, 2
      %s33 = sadd.s32 %s26, 1
      %s35 = sadd.s32 %s34, 1
      %p38 = scmp.eq.s32.totalorder %s26, 1
      %p39 = scmp.ne.s32.totalorder %s34, %s36
      %p40 = scmp.eq.s32.totalorder %s26, 0
      %p41 = por %p39, %p40
      %p42 = scmp.ne.s32.totalorder %s34, %s36
      %p43 = scmp.eq.s32.totalorder %s31, 1
      %p44 = por %p42, %p43
      %p45 = scmp.ne.s32.totalorder %s36, %s37
      %p46 = scmp.eq.s32.totalorder %s31, 0
      %p47 = por %p45, %p46
      %p48 = scmp.ne.s32.totalorder %s36, %s37
      %p49 = scmp.eq.s32.totalorder %s32, 1
      %p50 = por %p48, %p49
      %p52 = scmp.ne.s32.totalorder %s37, %s51
      %p53 = scmp.eq.s32.totalorder %s32, 0
      %p54 = por %p52, %p53
      %s55 = ssub.s32 %s26, %s33
      %p56 = scmp.eq.s32.totalorder %s55, 0
      %s58 = sadd.s32 %s57, 1
      %s59 = scalar_select %p56, %s57, %s58
      %p62 = pneg %p56
      %p63 = scmp.eq.s32.totalorder %s26, 1
      %p64 = por %p62, %p63
      %p65 = scmp.ne.s32.totalorder %s57, %s60
      %p66 = scmp.eq.s32.totalorder %s26, 0
      %p67 = por %p65, %p66
      %p68 = scmp.ne.s32.totalorder %s57, %s60
      %p69 = scmp.eq.s32.totalorder %s31, 1
      %p70 = por %p68, %p69
      %p71 = scmp.ne.s32.totalorder %s60, %s61
      %p72 = scmp.eq.s32.totalorder %s31, 0
      %p73 = por %p71, %p72
      %p74 = scmp.ne.s32.totalorder %s60, %s61
      %p75 = scmp.eq.s32.totalorder %s32, 1
      %p76 = por %p74, %p75
      %p78 = scmp.ne.s32.totalorder %s61, %s77
      %p79 = scmp.eq.s32.totalorder %s32, 0
      %p80 = por %p78, %p79
      %s81 = ssub.s32 %s26, %s33
      %p82 = scmp.eq.s32.totalorder %s81, 0
      %s84 = sadd.s32 %s83, 1
      %s85 = scalar_select %p82, %s83, %s84
      %p88 = pneg %p82
      %p89 = scmp.eq.s32.totalorder %s26, 1
      %p90 = por %p88, %p89
      %p91 = scmp.ne.s32.totalorder %s83, %s86
      %p92 = scmp.eq.s32.totalorder %s26, 0
      %p93 = por %p91, %p92
      %p94 = scmp.ne.s32.totalorder %s83, %s86
      %p95 = scmp.eq.s32.totalorder %s31, 1
      %p96 = por %p94, %p95
      %p97 = scmp.ne.s32.totalorder %s86, %s87
      %p98 = scmp.eq.s32.totalorder %s31, 0
      %p99 = por %p97, %p98
      %p100 = scmp.ne.s32.totalorder %s86, %s87
      %p101 = scmp.eq.s32.totalorder %s32, 1
      %p102 = por %p100, %p101
      %p104 = scmp.ne.s32.totalorder %s87, %s103
      %p105 = scmp.eq.s32.totalorder %s32, 0
      %p106 = por %p104, %p105
      %s107 = ssub.s32 %s26, %s33
      %p108 = scmp.eq.s32.totalorder %s107, 0
      %s110 = sadd.s32 %s109, 1
      %s111 = scalar_select %p108, %s109, %s110
      %p114 = pneg %p108
      %p115 = scmp.eq.s32.totalorder %s26, 1
      %p116 = por %p114, %p115
      %p117 = scmp.ne.s32.totalorder %s109, %s112
      %p118 = scmp.eq.s32.totalorder %s26, 0
      %p119 = por %p117, %p118
      %p120 = scmp.ne.s32.totalorder %s109, %s112
      %p121 = scmp.eq.s32.totalorder %s31, 1
      %p122 = por %p120, %p121
      %p123 = scmp.ne.s32.totalorder %s112, %s113
      %p124 = scmp.eq.s32.totalorder %s31, 0
      %p125 = por %p123, %p124
      %p126 = scmp.ne.s32.totalorder %s112, %s113
      %p127 = scmp.eq.s32.totalorder %s32, 1
      %p128 = por %p126, %p127
      %p130 = scmp.ne.s32.totalorder %s113, %s129
      %p131 = scmp.eq.s32.totalorder %s32, 0
      %p132 = por %p130, %p131
      %s133 = ssub.s32 %s26, %s33
      %p134 = scmp.eq.s32.totalorder %s133, 0
      %s136 = sadd.s32 %s135, 1
      %s137 = scalar_select %p134, %s135, %s136
      %p140 = pneg %p134
      %p141 = scmp.eq.s32.totalorder %s26, 1
      %p142 = por %p140, %p141
      %p143 = scmp.ne.s32.totalorder %s135, %s138
      %p144 = scmp.eq.s32.totalorder %s26, 0
      %p145 = por %p143, %p144
      %p146 = scmp.ne.s32.totalorder %s135, %s138
      %p147 = scmp.eq.s32.totalorder %s31, 1
      %p148 = por %p146, %p147
      %p149 = scmp.ne.s32.totalorder %s138, %s139
      %p150 = scmp.eq.s32.totalorder %s31, 0
      %p151 = por %p149, %p150
      %p152 = scmp.ne.s32.totalorder %s138, %s139
      %p153 = scmp.eq.s32.totalorder %s32, 1
      %p154 = por %p152, %p153
      %p156 = scmp.ne.s32.totalorder %s139, %s155
      %p157 = scmp.eq.s32.totalorder %s32, 0
      %p158 = por %p156, %p157
      %s159 = ssub.s32 %s26, %s33
      %p160 = scmp.eq.s32.totalorder %s159, 0
      %s162 = sadd.s32 %s161, 1
      %s163 = scalar_select %p160, %s161, %s162
      %p166 = pneg %p160
      %p167 = scmp.eq.s32.totalorder %s26, 1
      %p168 = por %p166, %p167
      %p169 = scmp.ne.s32.totalorder %s161, %s164
      %p170 = scmp.eq.s32.totalorder %s26, 0
      %p171 = por %p169, %p170
      %p172 = scmp.ne.s32.totalorder %s161, %s164
      %p173 = scmp.eq.s32.totalorder %s31, 1
      %p174 = por %p172, %p173
      %p175 = scmp.ne.s32.totalorder %s164, %s165
      %p176 = scmp.eq.s32.totalorder %s31, 0
      %p177 = por %p175, %p176
      %p178 = scmp.ne.s32.totalorder %s164, %s165
      %p179 = scmp.eq.s32.totalorder %s32, 1
      %p180 = por %p178, %p179
      %p182 = scmp.ne.s32.totalorder %s165, %s181
      %p183 = scmp.eq.s32.totalorder %s32, 0
      %p184 = por %p182, %p183
      %s185 = ssub.s32 %s26, %s33
      %p186 = scmp.eq.s32.totalorder %s185, 0
      %s188 = sadd.s32 %s187, 1
      %s189 = scalar_select %p186, %s187, %s188
      %p192 = pneg %p186
      %p193 = scmp.eq.s32.totalorder %s26, 1
      %p194 = por %p192, %p193
      %p195 = scmp.ne.s32.totalorder %s187, %s190
      %p196 = scmp.eq.s32.totalorder %s26, 0
      %p197 = por %p195, %p196
      %p198 = scmp.ne.s32.totalorder %s187, %s190
      %p199 = scmp.eq.s32.totalorder %s31, 1
      %p200 = por %p198, %p199
      %p201 = scmp.ne.s32.totalorder %s190, %s191
      %p202 = scmp.eq.s32.totalorder %s31, 0
      %p203 = por %p201, %p202
      %p204 = scmp.ne.s32.totalorder %s190, %s191
      %p205 = scmp.eq.s32.totalorder %s32, 1
      %p206 = por %p204, %p205
      %p208 = scmp.ne.s32.totalorder %s191, %s207
      %p209 = scmp.eq.s32.totalorder %s32, 0
      %p210 = por %p208, %p209
      %s211 = ssub.s32 %s26, %s33
      %p212 = scmp.eq.s32.totalorder %s211, 0
      %s214 = sadd.s32 %s213, 1
      %s215 = scalar_select %p212, %s213, %s214
      %p218 = pneg %p212
      %p219 = scmp.eq.s32.totalorder %s26, 1
      %p220 = por %p218, %p219
      %p221 = scmp.ne.s32.totalorder %s213, %s216
      %p222 = scmp.eq.s32.totalorder %s26, 0
      %p223 = por %p221, %p222
      %p224 = scmp.ne.s32.totalorder %s213, %s216
      %p225 = scmp.eq.s32.totalorder %s31, 1
      %p226 = por %p224, %p225
      %p227 = scmp.ne.s32.totalorder %s216, %s217
      %p228 = scmp.eq.s32.totalorder %s31, 0
      %p229 = por %p227, %p228
      %p230 = scmp.ne.s32.totalorder %s216, %s217
      %p231 = scmp.eq.s32.totalorder %s32, 1
      %p232 = por %p230, %p231
      %p234 = scmp.ne.s32.totalorder %s217, %s233
      %p235 = scmp.eq.s32.totalorder %s32, 0
      %p236 = por %p234, %p235
      %s237 = ssub.s32 %s26, %s33
      %p238 = scmp.eq.s32.totalorder %s237, 0
      %s240 = sadd.s32 %s239, 1
      %s241 = scalar_select %p238, %s239, %s240
      %p244 = pneg %p238
      %p245 = scmp.eq.s32.totalorder %s26, 1
      %p246 = por %p244, %p245
      %p247 = scmp.ne.s32.totalorder %s239, %s242
      %p248 = scmp.eq.s32.totalorder %s26, 0
      %p249 = por %p247, %p248
      %p250 = scmp.ne.s32.totalorder %s239, %s242
      %p251 = scmp.eq.s32.totalorder %s31, 1
      %p252 = por %p250, %p251
      %p253 = scmp.ne.s32.totalorder %s242, %s243
      %p254 = scmp.eq.s32.totalorder %s31, 0
      %p255 = por %p253, %p254
      %p256 = scmp.ne.s32.totalorder %s242, %s243
      %p257 = scmp.eq.s32.totalorder %s32, 1
      %p258 = por %p256, %p257
      %p260 = scmp.ne.s32.totalorder %s243, %s259
      %p261 = scmp.eq.s32.totalorder %s32, 0
      %p262 = por %p260, %p261
      %s263 = ssub.s32 %s26, %s33
      %p264 = scmp.eq.s32.totalorder %s263, 0
      %s266 = sadd.s32 %s265, 1
      %s267 = scalar_select %p264, %s265, %s266
      %p270 = pneg %p264
      %p271 = scmp.eq.s32.totalorder %s26, 1
      %p272 = por %p270, %p271
      %p273 = scmp.ne.s32.totalorder %s265, %s268
      %p274 = scmp.eq.s32.totalorder %s26, 0
      %p275 = por %p273, %p274
      %p276 = scmp.ne.s32.totalorder %s265, %s268
      %p277 = scmp.eq.s32.totalorder %s31, 1
      %p278 = por %p276, %p277
      %p279 = scmp.ne.s32.totalorder %s268, %s269
      %p280 = scmp.eq.s32.totalorder %s31, 0
      %p281 = por %p279, %p280
      %p282 = scmp.ne.s32.totalorder %s268, %s269
      %p283 = scmp.eq.s32.totalorder %s32, 1
      %p284 = por %p282, %p283
      %p286 = scmp.ne.s32.totalorder %s269, %s285
      %p287 = scmp.eq.s32.totalorder %s32, 0
      %p288 = por %p286, %p287
      %s289 = ssub.s32 %s26, %s33
      %p290 = scmp.eq.s32.totalorder %s289, 0
      %s292 = sadd.s32 %s291, 1
      %s293 = scalar_select %p290, %s291, %s292
      %p296 = pneg %p290
      %p297 = scmp.eq.s32.totalorder %s26, 1
      %p298 = por %p296, %p297
      %p299 = scmp.ne.s32.totalorder %s291, %s294
      %p300 = scmp.eq.s32.totalorder %s26, 0
      %p301 = por %p299, %p300
      %p302 = scmp.ne.s32.totalorder %s291, %s294
      %p303 = scmp.eq.s32.totalorder %s31, 1
      %p304 = por %p302, %p303
      %p305 = scmp.ne.s32.totalorder %s294, %s295
      %p306 = scmp.eq.s32.totalorder %s31, 0
      %p307 = por %p305, %p306
      %p308 = scmp.ne.s32.totalorder %s294, %s295
      %p309 = scmp.eq.s32.totalorder %s32, 1
      %p310 = por %p308, %p309
      %p312 = scmp.ne.s32.totalorder %s295, %s311
      %p313 = scmp.eq.s32.totalorder %s32, 0
      %p314 = por %p312, %p313
      %s316 = sadd.s32 %s315, 1
      %p319 = scmp.eq.s32.totalorder %s26, 1
      %p320 = scmp.ne.s32.totalorder %s315, %s317
      %p321 = scmp.eq.s32.totalorder %s26, 0
      %p322 = por %p320, %p321
      %p323 = scmp.ne.s32.totalorder %s315, %s317
      %p324 = scmp.eq.s32.totalorder %s31, 1
      %p325 = por %p323, %p324
      %p326 = scmp.ne.s32.totalorder %s317, %s318
      %p327 = scmp.eq.s32.totalorder %s31, 0
      %p328 = por %p326, %p327
      %p329 = scmp.ne.s32.totalorder %s317, %s318
      %p330 = scmp.eq.s32.totalorder %s32, 1
      %p331 = por %p329, %p330
      %p333 = scmp.ne.s32.totalorder %s318, %s332
      %p334 = scmp.eq.s32.totalorder %s32, 0
      %p335 = por %p333, %p334
      %s337 = sadd.s32 %s336, 1
      %p340 = scmp.eq.s32.totalorder %s26, 1
      %p341 = scmp.ne.s32.totalorder %s336, %s338
      %p342 = scmp.eq.s32.totalorder %s26, 0
      %p343 = por %p341, %p342
      %p344 = scmp.ne.s32.totalorder %s336, %s338
      %p345 = scmp.eq.s32.totalorder %s31, 1
      %p346 = por %p344, %p345
      %p347 = scmp.ne.s32.totalorder %s338, %s339
      %p348 = scmp.eq.s32.totalorder %s31, 0
      %p349 = por %p347, %p348
      %p350 = scmp.ne.s32.totalorder %s338, %s339
      %p351 = scmp.eq.s32.totalorder %s32, 1
      %p352 = por %p350, %p351
      %p354 = scmp.ne.s32.totalorder %s339, %s353
      %p355 = scmp.eq.s32.totalorder %s32, 0
      %p356 = por %p354, %p355
      %s358 = sadd.s32 %s357, 1
      %p361 = scmp.eq.s32.totalorder %s26, 1
      %p362 = scmp.ne.s32.totalorder %s357, %s359
      %p363 = scmp.eq.s32.totalorder %s26, 0
      %p364 = por %p362, %p363
      %p365 = scmp.ne.s32.totalorder %s357, %s359
      %p366 = scmp.eq.s32.totalorder %s31, 1
      %p367 = por %p365, %p366
      %p368 = scmp.ne.s32.totalorder %s359, %s360
      %p369 = scmp.eq.s32.totalorder %s31, 0
      %p370 = por %p368, %p369
      %p371 = scmp.ne.s32.totalorder %s359, %s360
      %p372 = scmp.eq.s32.totalorder %s32, 1
      %p373 = por %p371, %p372
      %p375 = scmp.ne.s32.totalorder %s360, %s374
      %p376 = scmp.eq.s32.totalorder %s32, 0
      %p377 = por %p375, %p376
      %p378 = scmp.le.s32.totalorder 1, %s26
      %p379 = scmp.lt.s32.totalorder %s26, 3
      %p380 = pnand %p378, %p379
      %p381 = pneg %p380
      // Predicated region
      $region9: #{qwen25vl_forward.2} parent=5 // pred_check
        _
      $region10: #{qwen25vl_forward.2} parent=5 // pred_check_branch
        %383 = sbr.rel (%p380) target = $region12
      $region11: #{qwen25vl_forward.2} parent=5 // pred_region
        %s384 = ssub.s32 %s26, 1
        // Predicated region
        $region13: #{qwen25vl_forward.2} parent=11 // pred_check
          %p385 = pneg %p47
        $region14: #{qwen25vl_forward.2} parent=11 // pred_check_branch
          %387 = sbr.rel (%p385) target = $region16
        $region15: #{qwen25vl_forward.2} parent=11 // pred_region
          _
        $region16: #{qwen25vl_forward.2} parent=11 // pred_fallthru
          _
        // Predicated region
        $region17: #{qwen25vl_forward.2} parent=11 // pred_check
          %p388 = pneg %p328
        $region18: #{qwen25vl_forward.2} parent=11 // pred_check_branch
          %390 = sbr.rel (%p388) target = $region20
        $region19: #{qwen25vl_forward.2} parent=11 // pred_region
          _
        $region20: #{qwen25vl_forward.2} parent=11 // pred_fallthru
          _
      $region12: #{qwen25vl_forward.2} parent=5 // pred_fallthru
        _
      %p391 = scmp.lt.s32.totalorder %s26, 2
      // Predicated region
      $region21: #{qwen25vl_forward.2} parent=5 // pred_check
        %p392 = pneg %p391
      $region22: #{qwen25vl_forward.2} parent=5 // pred_check_branch
        %394 = sbr.rel (%p392) target = $region24
      $region23: #{qwen25vl_forward.2} parent=5 // pred_region
        // Predicated region
        $region25: #{qwen25vl_forward.2} parent=23 // pred_check
          %p395 = pneg %p67
        $region26: #{qwen25vl_forward.2} parent=23 // pred_check_branch
          %397 = sbr.rel (%p395) target = $region28
        $region27: #{qwen25vl_forward.2} parent=23 // pred_region
          %p398 = scmp.lt.s32.totalorder %s26, 1
          %s399 = scalar_select %p398, %s26, 1
          %s400 = scalar_lea.vmem %s1, %s399
        $region28: #{qwen25vl_forward.2} parent=23 // pred_fallthru
          _
        // Predicated region
        $region29: #{qwen25vl_forward.2} parent=23 // pred_check
          %p401 = pneg %p93
        $region30: #{qwen25vl_forward.2} parent=23 // pred_check_branch
          %403 = sbr.rel (%p401) target = $region32
        $region31: #{qwen25vl_forward.2} parent=23 // pred_region
          %s404 = sand.u32 %s83, 1
          %s405 = scalar_lea.sflag [#allocation3], %s404
          %s406 = sand.u32 %s83, 1
          %s407 = smul.addr %s406, 192
          %s408 = scalar_lea.vmem [#allocation2], %s407
          %s410 = ssub.s32 3072, 3072
          %411 = vsyncadd %s405, %s410
          %s412 = smul.addr %s26, 48
          %s413 = smul.addr %s412, 64
          %s414 = scalar_lea.hbm %s2, %s413
          %s415 = sshll.u32 %s408, 4
          %s416 = int_to_ptr.vmem [resolvable:$true] %s415
          %421 = dma.hbm_to_vmem [thread:$0]  %s414, 3072, %s416, %s405, 192, 192, 12
        $region32: #{qwen25vl_forward.2} parent=23 // pred_fallthru
          _
        // Predicated region
        $region33: #{qwen25vl_forward.2} parent=23 // pred_check
          %p422 = pneg %p119
        $region34: #{qwen25vl_forward.2} parent=23 // pred_check_branch
          %424 = sbr.rel (%p422) target = $region36
        $region35: #{qwen25vl_forward.2} parent=23 // pred_region
          %p425 = scmp.lt.s32.totalorder %s26, 1
          %s426 = scalar_select %p425, %s26, 1
          %s427 = smul.addr %s426, 3
          %s428 = scalar_lea.vmem %s3, %s427
        $region36: #{qwen25vl_forward.2} parent=23 // pred_fallthru
          _
        // Predicated region
        $region37: #{qwen25vl_forward.2} parent=23 // pred_check
          %p429 = pneg %p145
        $region38: #{qwen25vl_forward.2} parent=23 // pred_check_branch
          %431 = sbr.rel (%p429) target = $region40
        $region39: #{qwen25vl_forward.2} parent=23 // pred_region
          %p432 = scmp.lt.s32.totalorder %s26, 1
          %s433 = scalar_select %p432, %s26, 1
          %s434 = smul.addr %s433, 16
          %s435 = smul.addr %s434, 4
          %s436 = scalar_lea.vmem %s4, %s435
        $region40: #{qwen25vl_forward.2} parent=23 // pred_fallthru
          _
        // Predicated region
        $region41: #{qwen25vl_forward.2} parent=23 // pred_check
          %p437 = pneg %p171
        $region42: #{qwen25vl_forward.2} parent=23 // pred_check_branch
          %439 = sbr.rel (%p437) target = $region44
        $region43: #{qwen25vl_forward.2} parent=23 // pred_region
          %p440 = scmp.lt.s32.totalorder %s26, 1
          %s441 = scalar_select %p440, %s26, 1
          %s442 = scalar_lea.vmem %s5, %s441
        $region44: #{qwen25vl_forward.2} parent=23 // pred_fallthru
          _
        // Predicated region
        $region45: #{qwen25vl_forward.2} parent=23 // pred_check
          %p443 = pneg %p197
        $region46: #{qwen25vl_forward.2} parent=23 // pred_check_branch
          %445 = sbr.rel (%p443) target = $region48
        $region47: #{qwen25vl_forward.2} parent=23 // pred_region
          %p446 = scmp.lt.s32.totalorder %s26, 1
          %s447 = scalar_select %p446, %s26, 1
          %s448 = scalar_lea.vmem %s6, %s447
        $region48: #{qwen25vl_forward.2} parent=23 // pred_fallthru
          _
        // Predicated region
        $region49: #{qwen25vl_forward.2} parent=23 // pred_check
          %p449 = pneg %p223
        $region50: #{qwen25vl_forward.2} parent=23 // pred_check_branch
          %451 = sbr.rel (%p449) target = $region52
        $region51: #{qwen25vl_forward.2} parent=23 // pred_region
          %s452 = sand.u32 %s26, 1
          %s453 = scalar_lea.sflag [#allocation5], %s452
          %s454 = sand.u32 %s213, 1
          %s455 = smul.addr %s454, 256
          %s456 = scalar_lea.vmem [#allocation4], %s455
          %s458 = ssub.s32 4096, 4096
          %459 = vsyncadd %s453, %s458
          %s460 = smul.addr %s26, 64
          %s461 = smul.addr %s460, 64
          %s462 = scalar_lea.hbm %s7, %s461
          %s463 = sshll.u32 %s456, 4
          %s464 = int_to_ptr.vmem [resolvable:$true] %s463
          %469 = dma.hbm_to_vmem [thread:$0]  %s462, 4096, %s464, %s453, 256, 256, 16
        $region52: #{qwen25vl_forward.2} parent=23 // pred_fallthru
          _
        // Predicated region
        $region53: #{qwen25vl_forward.2} parent=23 // pred_check
          %p470 = pneg %p249
        $region54: #{qwen25vl_forward.2} parent=23 // pred_check_branch
          %472 = sbr.rel (%p470) target = $region56
        $region55: #{qwen25vl_forward.2} parent=23 // pred_region
          %p473 = scmp.lt.s32.totalorder %s26, 1
          %s474 = scalar_select %p473, %s26, 1
          %s475 = smul.addr %s474, 4
          %s476 = scalar_lea.vmem %s8, %s475
        $region56: #{qwen25vl_forward.2} parent=23 // pred_fallthru
          _
        // Predicated region
        $region57: #{qwen25vl_forward.2} parent=23 // pred_check
          %p477 = pneg %p275
        $region58: #{qwen25vl_forward.2} parent=23 // pred_check_branch
          %479 = sbr.rel (%p477) target = $region60
        $region59: #{qwen25vl_forward.2} parent=23 // pred_region
          %s480 = sand.u32 %s26, 1
          %s481 = scalar_lea.sflag [#allocation5], %s480
          %s482 = sand.u32 %s265, 1
          %s483 = smul.addr %s482, 256
          %s484 = scalar_lea.vmem [#allocation6], %s483
          %s486 = ssub.s32 4096, 4096
          %487 = vsyncadd %s481, %s486
          %s488 = smul.addr %s26, 64
          %s489 = smul.addr %s488, 64
          %s490 = scalar_lea.hbm %s9, %s489
          %s491 = sshll.u32 %s484, 4
          %s492 = int_to_ptr.vmem [resolvable:$true] %s491
          %497 = dma.hbm_to_vmem [thread:$0]  %s490, 4096, %s492, %s481, 64, 64, 4
        $region60: #{qwen25vl_forward.2} parent=23 // pred_fallthru
          _
        // Predicated region
        $region61: #{qwen25vl_forward.2} parent=23 // pred_check
          %p498 = pneg %p301
        $region62: #{qwen25vl_forward.2} parent=23 // pred_check_branch
          %500 = sbr.rel (%p498) target = $region64
        $region63: #{qwen25vl_forward.2} parent=23 // pred_region
          %p501 = scmp.lt.s32.totalorder %s26, 1
          %s502 = scalar_select %p501, %s26, 1
          %s503 = scalar_lea.vmem %s10, %s502
        $region64: #{qwen25vl_forward.2} parent=23 // pred_fallthru
          _
      $region24: #{qwen25vl_forward.2} parent=5 // pred_fallthru
        _
      %p504 = scmp.le.s32.totalorder 1, %s26
      %p505 = scmp.lt.s32.totalorder %s26, 3
      %p506 = pnand %p504, %p505
      %p507 = pneg %p506
      // Predicated region
      $region65: #{qwen25vl_forward.2} parent=5 // pred_check
        _
      $region66: #{qwen25vl_forward.2} parent=5 // pred_check_branch
        %509 = sbr.rel (%p506) target = $region68
      $region67: #{qwen25vl_forward.2} parent=5 // pred_region
        %s510 = ssub.s32 %s26, 1
        %s511 = sand.u32 %s86, 1
        %s512 = scalar_lea.sflag [#allocation3], %s511
        %s513 = sand.u32 %s86, 1
        %s514 = smul.addr %s513, 192
        %s515 = scalar_lea.vmem [#allocation2], %s514
        // Predicated region
        $region69: #{qwen25vl_forward.2} parent=67 // pred_check
          %p516 = pneg %p99
        $region70: #{qwen25vl_forward.2} parent=67 // pred_check_branch
          %518 = sbr.rel (%p516) target = $region72
        $region71: #{qwen25vl_forward.2} parent=67 // pred_region
          %519 = dma.done %s512, 3072
        $region72: #{qwen25vl_forward.2} parent=67 // pred_fallthru
          _
        %s520 = sand.u32 %s31, 1
        %s521 = scalar_lea.sflag [#allocation5], %s520
        %s522 = sand.u32 %s216, 1
        %s523 = smul.addr %s522, 256
        %s524 = scalar_lea.vmem [#allocation4], %s523
        // Predicated region
        $region73: #{qwen25vl_forward.2} parent=67 // pred_check
          %p525 = pneg %p229
        $region74: #{qwen25vl_forward.2} parent=67 // pred_check_branch
          %527 = sbr.rel (%p525) target = $region76
        $region75: #{qwen25vl_forward.2} parent=67 // pred_region
          %528 = dma.done %s521, 4096
        $region76: #{qwen25vl_forward.2} parent=67 // pred_fallthru
          _
        %s529 = sand.u32 %s31, 1
        %s530 = scalar_lea.sflag [#allocation5], %s529
        %s531 = sand.u32 %s268, 1
        %s532 = smul.addr %s531, 256
        %s533 = scalar_lea.vmem [#allocation6], %s532
        // Predicated region
        $region77: #{qwen25vl_forward.2} parent=67 // pred_check
          %p534 = pneg %p281
        $region78: #{qwen25vl_forward.2} parent=67 // pred_check_branch
          %536 = sbr.rel (%p534) target = $region80
        $region79: #{qwen25vl_forward.2} parent=67 // pred_region
          %537 = dma.done %s530, 4096
        $region80: #{qwen25vl_forward.2} parent=67 // pred_fallthru
          _
        %p538 = pneg %p47
        %p539 = pneg %p44
        %p540 = scmp.lt.s32.totalorder %s31, 1
        %s541 = scalar_select %p540, %s31, 1
        %s542 = scalar_lea.vmem %s1, %s541
        %p543 = pneg %p73
        %p544 = pneg %p70
        %s545 = sand.u32 %s86, 1
        %s546 = scalar_lea.sflag [#allocation3], %s545
        %s547 = sand.u32 %s86, 1
        %s548 = smul.addr %s547, 192
        %s549 = scalar_lea.vmem [#allocation2], %s548
        %p550 = pneg %p99
        %p551 = pneg %p96
        %p552 = scmp.lt.s32.totalorder %s31, 1
        %s553 = scalar_select %p552, %s31, 1
        %s554 = smul.addr %s553, 3
        %s555 = scalar_lea.vmem %s3, %s554
        %p556 = pneg %p125
        %p557 = pneg %p122
        %p558 = scmp.lt.s32.totalorder %s31, 1
        %s559 = scalar_select %p558, %s31, 1
        %s560 = smul.addr %s559, 16
        %s561 = smul.addr %s560, 4
        %s562 = scalar_lea.vmem %s4, %s561
        %p563 = pneg %p151
        %p564 = pneg %p148
        %p565 = scmp.lt.s32.totalorder %s31, 1
        %s566 = scalar_select %p565, %s31, 1
        %s567 = scalar_lea.vmem %s5, %s566
        %p568 = pneg %p177
        %p569 = pneg %p174
        %p570 = scmp.lt.s32.totalorder %s31, 1
        %s571 = scalar_select %p570, %s31, 1
        %s572 = scalar_lea.vmem %s6, %s571
        %p573 = pneg %p203
        %p574 = pneg %p200
        %s575 = sand.u32 %s31, 1
        %s576 = scalar_lea.sflag [#allocation5], %s575
        %s577 = sand.u32 %s216, 1
        %s578 = smul.addr %s577, 256
        %s579 = scalar_lea.vmem [#allocation4], %s578
        %p580 = pneg %p229
        %p581 = pneg %p226
        %p582 = scmp.lt.s32.totalorder %s31, 1
        %s583 = scalar_select %p582, %s31, 1
        %s584 = smul.addr %s583, 4
        %s585 = scalar_lea.vmem %s8, %s584
        %p586 = pneg %p255
        %p587 = pneg %p252
        %s588 = sand.u32 %s31, 1
        %s589 = scalar_lea.sflag [#allocation5], %s588
        %s590 = sand.u32 %s268, 1
        %s591 = smul.addr %s590, 256
        %s592 = scalar_lea.vmem [#allocation6], %s591
        %p593 = pneg %p281
        %p594 = pneg %p278
        %p595 = scmp.lt.s32.totalorder %s31, 1
        %s596 = scalar_select %p595, %s31, 1
        %s597 = scalar_lea.vmem %s10, %s596
        %p598 = pneg %p307
        %p599 = pneg %p304
        %p600 = pneg %p328
        %p601 = pneg %p325
        %p602 = pneg %p349
        %p603 = pneg %p346
        %p604 = pneg %p370
        %p605 = pneg %p367
        %p606 = scmp.lt.s32.totalorder %s31, 1
        %s607 = scalar_select %p606, %s31, 1
        %s608 = scalar_lea.vmem %s1, %s607
        %p609 = scmp.lt.s32.totalorder %s31, 1
        %s610 = scalar_select %p609, %s31, 1
        %s611 = smul.addr %s610, 3
        %s612 = scalar_lea.vmem %s3, %s611
        %p613 = scmp.lt.s32.totalorder %s31, 1
        %s614 = scalar_select %p613, %s31, 1
        %s615 = smul.addr %s614, 16
        %s616 = smul.addr %s615, 4
        %s617 = scalar_lea.vmem %s4, %s616
        %p618 = scmp.lt.s32.totalorder %s31, 1
        %s619 = scalar_select %p618, %s31, 1
        %s620 = scalar_lea.vmem %s5, %s619
        %p621 = scmp.lt.s32.totalorder %s31, 1
        %s622 = scalar_select %p621, %s31, 1
        %s623 = scalar_lea.vmem %s6, %s622
        %p624 = scmp.lt.s32.totalorder %s31, 1
        %s625 = scalar_select %p624, %s31, 1
        %s626 = smul.addr %s625, 4
        %s627 = scalar_lea.vmem %s8, %s626
        %p628 = scmp.lt.s32.totalorder %s31, 1
        %s629 = scalar_select %p628, %s31, 1
        %s630 = scalar_lea.vmem %s10, %s629
        %p632 = scmp.eq.s32.totalorder %s31, 0
        // Predicated region
        $region81: #{qwen25vl_forward.2} parent=67 // pred_check
          %p633 = pneg %p632
        $region82: #{qwen25vl_forward.2} parent=67 // pred_check_branch
          %635 = sbr.rel (%p633) target = $region84
        $region83: #{qwen25vl_forward.2} parent=67 // pred_region
          %v636 = vld [vmem:[%s0] sm:$0xff]
          %v637 = vld [vmem:[%s0 + $0x8] sm:$0xff]
          %638 = vst [vmem:[%s12] sm:$0xff] %v636
          %639 = vst [vmem:[%s12 + $0x8] sm:$0xff] %v637
        $region84: #{qwen25vl_forward.2} parent=67 // pred_fallthru
          _
        %v640 = vld [vmem:[%s12] sm:$0xff]
        %v641 = vld [vmem:[%s12 + $0x8] sm:$0xff]
        %v642 = vld [vmem:[%s608] sm:$0x1]
        %v643 = vmul.f32 %v640, %v640
        %v644 = vmul.f32 %v641, %v641
        %645 = vadd.xlane.f32.xlu0 %v643
        %v646 = vpop.xlane.xlu0 %645
        %647 = vadd.xlane.f32.xlu0 %v644
        %v648 = vpop.xlane.xlu0 %647
        %v649 = vrcp.pop 128.0
        %v650 = vmul.f32 %v646, %v649
        %v651 = vmul.f32 %v648, %v649
        %v652 = vadd.f32 %v650, 1e-06
        %v653 = vadd.f32 %v651, 1e-06
        %v654 = vrsqrt.pop %v652
        %v655 = vrsqrt.pop %v653
        %v656 = vmul.f32 %v640, %v654
        %v657 = vmul.f32 %v641, %v655
        %v659 = vlaneseq
        %v660 = vshrl.u32 %v659, 7
        %v661 = vsub.s32 0, %v660
        %v662 = vrot.slane %v642, %v661
        %v664 = vmul.f32 %v656, %v662
        %v665 = vmul.f32 %v657, %v662
        %v666 = vpack.c.bf16 %v665, %v664
        %v667 = vld [vmem:[%s515] sm:$0xff]
        %v668 = vld [vmem:[%s515 + $0x8] sm:$0xf]
        %v669 = vld [vmem:[%s515 + $0xc] sm:$0xff]
        %v670 = vld [vmem:[%s515 + $0x14] sm:$0xf]
        %v671 = vld [vmem:[%s515 + $0x18] sm:$0xff]
        %v672 = vld [vmem:[%s515 + $0x20] sm:$0xf]
        %v673 = vld [vmem:[%s515 + $0x24] sm:$0xff]
        %v674 = vld [vmem:[%s515 + $0x2c] sm:$0xf]
        %v675 = vld [vmem:[%s515 + $0x30] sm:$0xff]
        %v676 = vld [vmem:[%s515 + $0x38] sm:$0xf]
        %v677 = vld [vmem:[%s515 + $0x3c] sm:$0xff]
        %v678 = vld [vmem:[%s515 + $0x44] sm:$0xf]
        %v679 = vld [vmem:[%s515 + $0x48] sm:$0xff]
        %v680 = vld [vmem:[%s515 + $0x50] sm:$0xf]
        %v681 = vld [vmem:[%s515 + $0x54] sm:$0xff]
        %v682 = vld [vmem:[%s515 + $0x5c] sm:$0xf]
        %v683 = vld [vmem:[%s515 + $0x60] sm:$0xff]
        %v684 = vld [vmem:[%s515 + $0x68] sm:$0xf]
        %v685 = vld [vmem:[%s515 + $0x6c] sm:$0xff]
        %v686 = vld [vmem:[%s515 + $0x74] sm:$0xf]
        %v687 = vld [vmem:[%s515 + $0x78] sm:$0xff]
        %v688 = vld [vmem:[%s515 + $0x80] sm:$0xf]
        %v689 = vld [vmem:[%s515 + $0x84] sm:$0xff]
        %v690 = vld [vmem:[%s515 + $0x8c] sm:$0xf]
        %v691 = vld [vmem:[%s515 + $0x90] sm:$0xff]
        %v692 = vld [vmem:[%s515 + $0x98] sm:$0xf]
        %v693 = vld [vmem:[%s515 + $0x9c] sm:$0xff]
        %v694 = vld [vmem:[%s515 + $0xa4] sm:$0xf]
        %v695 = vld [vmem:[%s515 + $0xa8] sm:$0xff]
        %v696 = vld [vmem:[%s515 + $0xb0] sm:$0xf]
        %v697 = vld [vmem:[%s515 + $0xb4] sm:$0xff]
        %v698 = vld [vmem:[%s515 + $0xbc] sm:$0xf]
        %v699 = vld [vmem:[%s612] sm:$0x7]
        %v701 = vlaneseq
        %v702 = vshrl.u32 %v701, 7
        %v703 = vsub.s32 0, %v702
        %v704 = vrot.slane %v699, %v703
        %v705 = vlaneseq
        %v706 = vshrl.u32 %v705, 7
        %v707 = vsub.s32 1, %v706
        %v708 = vrot.slane %v699, %v707
        %v709 = vlaneseq
        %v710 = vshrl.u32 %v709, 7
        %v711 = vsub.s32 2, %v710
        %v712 = vrot.slane %v699, %v711
        %v748 = vunpack.c.l.b16 %v667
        %v749 = vunpack.c.h.b16 %v667
        %v750 = vunpack.c.l.b16 %v668
        %v751 = vunpack.c.l.b16 %v669
        %v752 = vunpack.c.h.b16 %v669
        %v753 = vunpack.c.l.b16 %v670
        %v754 = vunpack.c.l.b16 %v671
        %v755 = vunpack.c.h.b16 %v671
        %v756 = vunpack.c.l.b16 %v672
        %v757 = vunpack.c.l.b16 %v673
        %v758 = vunpack.c.h.b16 %v673
        %v759 = vunpack.c.l.b16 %v674
        %v760 = vunpack.c.l.b16 %v675
        %v761 = vunpack.c.h.b16 %v675
        %v762 = vunpack.c.l.b16 %v676
        %v763 = vunpack.c.l.b16 %v677
        %v764 = vunpack.c.h.b16 %v677
        %v765 = vunpack.c.l.b16 %v678
        %v766 = vunpack.c.l.b16 %v679
        %v767 = vunpack.c.h.b16 %v679
        %v768 = vunpack.c.l.b16 %v680
        %v769 = vunpack.c.l.b16 %v681
        %v770 = vunpack.c.h.b16 %v681
        %v771 = vunpack.c.l.b16 %v682
        %v772 = vunpack.c.l.b16 %v683
        %v773 = vunpack.c.h.b16 %v683
        %v774 = vunpack.c.l.b16 %v684
        %v775 = vunpack.c.l.b16 %v685
        %v776 = vunpack.c.h.b16 %v685
        %v777 = vunpack.c.l.b16 %v686
        %v778 = vunpack.c.l.b16 %v687
        %v779 = vunpack.c.h.b16 %v687
        %v780 = vunpack.c.l.b16 %v688
        %v781 = vunpack.c.l.b16 %v689
        %v782 = vunpack.c.h.b16 %v689
        %v783 = vunpack.c.l.b16 %v690
        %v784 = vunpack.c.l.b16 %v691
        %v785 = vunpack.c.h.b16 %v691
        %v786 = vunpack.c.l.b16 %v692
        %v787 = vunpack.c.l.b16 %v693
        %v788 = vunpack.c.h.b16 %v693
        %v789 = vunpack.c.l.b16 %v694
        %v790 = vunpack.c.l.b16 %v695
        %v791 = vunpack.c.h.b16 %v695
        %v792 = vunpack.c.l.b16 %v696
        %v793 = vunpack.c.l.b16 %v697
        %v794 = vunpack.c.h.b16 %v697
        %v795 = vunpack.c.l.b16 %v698
        %v796 = vpack.c.b16 %v751, %v748
        %v797 = vpack.c.b16 %v752, %v749
        %v798 = vpack.c.b16 %v753, %v750
        %v799 = vpack.c.b16 %v757, %v754
        %v800 = vpack.c.b16 %v758, %v755
        %v801 = vpack.c.b16 %v759, %v756
        %v802 = vpack.c.b16 %v763, %v760
        %v803 = vpack.c.b16 %v764, %v761
        %v804 = vpack.c.b16 %v765, %v762
        %v805 = vpack.c.b16 %v769, %v766
        %v806 = vpack.c.b16 %v770, %v767
        %v807 = vpack.c.b16 %v771, %v768
        %v808 = vpack.c.b16 %v775, %v772
        %v809 = vpack.c.b16 %v776, %v773
        %v810 = vpack.c.b16 %v777, %v774
        %v811 = vpack.c.b16 %v781, %v778
        %v812 = vpack.c.b16 %v782, %v779
        %v813 = vpack.c.b16 %v783, %v780
        %v814 = vpack.c.b16 %v787, %v784
        %v815 = vpack.c.b16 %v788, %v785
        %v816 = vpack.c.b16 %v789, %v786
        %v817 = vpack.c.b16 %v793, %v790
        %v818 = vpack.c.b16 %v794, %v791
        %v819 = vpack.c.b16 %v795, %v792
        %844 = vmatprep.subr.bf16.mxu0 %v797
        %845 = vmatpush1.bf16.msra.mxu0 %v796
        %846 = vmatprep.subr.bf16.mxu0 %v800
        %847 = vmatpush1.bf16.msra.mxu0 %v799
        %848 = vmatprep.subr.bf16.mxu0 %v803
        %849 = vmatpush1.bf16.msra.mxu0 %v802
        %850 = vmatprep.subr.bf16.mxu0 %v806
        %851 = vmatpush1.bf16.msra.mxu0 %v805
        %852 = vmatprep.subr.bf16.mxu0 %v809
        %853 = vmatpush1.bf16.msra.mxu0 %v808
        %854 = vmatprep.subr.bf16.mxu0 %v812
        %855 = vmatpush1.bf16.msra.mxu0 %v811
        %856 = vmatprep.subr.bf16.mxu0 %v815
        %857 = vmatpush1.bf16.msra.mxu0 %v814
        %858 = vmatprep.subr.bf16.mxu0 %v818
        %859 = vmatpush1.bf16.msra.mxu0 %v817
        %860 = vmatprep.subr.bf16.mxu0 0
        %861 = vmatpush1.bf16.msra.mxu0 0
        %862 = vmatprep.subr.bf16.mxu0 0
        %863 = vmatpush1.bf16.msra.mxu0 0
        %864 = vmatprep.subr.bf16.mxu0 0
        %865 = vmatpush1.bf16.msra.mxu0 0
        %866 = vmatprep.subr.bf16.mxu0 0
        %867 = vmatpush1.bf16.msra.mxu0 0
        %868 = vmatprep.subr.bf16.mxu0 0
        %869 = vmatpush1.bf16.msra.mxu0 0
        %870 = vmatprep.subr.bf16.mxu0 0
        %871 = vmatpush1.bf16.msra.mxu0 0
        %872 = vmatprep.subr.bf16.mxu0 0
        %873 = vmatpush1.bf16.msra.mxu0 0
        %874 = vmatprep.subr.bf16.mxu0 0
        %875 = vmatpush1.bf16.msra.mxu0 0
        %876 = vmatprep.mubr.bf16.mxu0 0
        %877 = vmatmul.mubr.bf16.gmra.mrb[0].mxu0 %v666
        %v878 = vpop.f32.mrb[0].mxu0
        %v879 = vadd.f32 %v704, %v878
        %v880 = vpop.f32.mrb[0].mxu0
        %v881 = vadd.f32 %v708, %v880
        %v882 = vpop.f32.mrb[0].mxu0
        %v883 = vadd.f32 %v704, %v882
        %v884 = vpop.f32.mrb[0].mxu0
        %v885 = vadd.f32 %v708, %v884
        %886 = vdwg.mxu0
        %887 = vmatprep.subr.bf16.mxu0 0
        %888 = vmatpush1.bf16.msra.mxu0 %v798
        %889 = vmatprep.subr.bf16.mxu0 0
        %890 = vmatpush1.bf16.msra.mxu0 %v801
        %891 = vmatprep.subr.bf16.mxu0 0
        %892 = vmatpush1.bf16.msra.mxu0 %v804
        %893 = vmatprep.subr.bf16.mxu0 0
        %894 = vmatpush1.bf16.msra.mxu0 %v807
        %895 = vmatprep.subr.bf16.mxu0 0
        %896 = vmatpush1.bf16.msra.mxu0 %v810
        %897 = vmatprep.subr.bf16.mxu0 0
        %898 = vmatpush1.bf16.msra.mxu0 %v813
        %899 = vmatprep.subr.bf16.mxu0 0
        %900 = vmatpush1.bf16.msra.mxu0 %v816
        %901 = vmatprep.subr.bf16.mxu0 0
        %902 = vmatpush1.bf16.msra.mxu0 %v819
        %903 = vmatprep.subr.bf16.mxu0 0
        %904 = vmatpush1.bf16.msra.mxu0 0
        %905 = vmatprep.subr.bf16.mxu0 0
        %906 = vmatpush1.bf16.msra.mxu0 0
        %907 = vmatprep.subr.bf16.mxu0 0
        %908 = vmatpush1.bf16.msra.mxu0 0
        %909 = vmatprep.subr.bf16.mxu0 0
        %910 = vmatpush1.bf16.msra.mxu0 0
        %911 = vmatprep.subr.bf16.mxu0 0
        %912 = vmatpush1.bf16.msra.mxu0 0
        %913 = vmatprep.subr.bf16.mxu0 0
        %914 = vmatpush1.bf16.msra.mxu0 0
        %915 = vmatprep.subr.bf16.mxu0 0
        %916 = vmatpush1.bf16.msra.mxu0 0
        %917 = vmatprep.subr.bf16.mxu0 0
        %918 = vmatpush1.bf16.msra.mxu0 0
        %919 = vmatprep.mubr.bf16.mxu0 0
        %920 = vmatmul.mubr.bf16.gmra.mrb[0].mxu0 %v666
        %v921 = vpop.f32.mrb[0].mxu0
        %v922 = vadd.f32 %v712, %v921
        %v923 = vpop.f32.mrb[0].mxu0
        %v924 = vpop.f32.mrb[0].mxu0
        %v925 = vadd.f32 %v712, %v924
        %v926 = vpop.f32.mrb[0].mxu0
        %927 = vdwg.mxu0
        %v928 = vpack.c.bf16 %v879, %v879
        %v929 = vpack.c.bf16 %v883, %v883
        %v930 = vpack.c.bf16 %v881, %v881
        %v931 = vpack.c.bf16 %v885, %v885
        %v932 = vpack.c.bf16 %v922, %v922
        %v933 = vpack.c.bf16 %v925, %v925
        %vm934 = vcmask 261120
        %v936 = vsel %vm934, %v928, 0
        %v939 = vsel %vm934, %v930, 0
        %941 = vmatprep.subr.bf16.mxu0 0
        %942 = vmatpush1.bf16.xpose.msra.mxu0 %v939
        %943 = vmatprep.subr.bf16.mxu0 0
        %944 = vmatpush1.bf16.xpose.msra.mxu0 0
        %945 = vmatprep.subr.bf16.mxu0 0
        %946 = vmatpush1.bf16.xpose.msra.mxu0 0
        %947 = vmatprep.subr.bf16.mxu0 0
        %948 = vmatpush1.bf16.xpose.msra.mxu0 0
        %949 = vmatprep.subr.bf16.mxu0 0
        %950 = vmatpush1.bf16.xpose.msra.mxu0 0
        %951 = vmatprep.subr.bf16.mxu0 0
        %952 = vmatpush1.bf16.xpose.msra.mxu0 0
        %953 = vmatprep.subr.bf16.mxu0 0
        %954 = vmatpush1.bf16.xpose.msra.mxu0 0
        %955 = vmatprep.subr.bf16.mxu0 0
        %956 = vmatpush1.bf16.xpose.msra.mxu0 0
        %957 = vmatprep.subr.bf16.mxu0 0
        %958 = vmatpush1.bf16.xpose.msra.mxu0 0
        %959 = vmatprep.subr.bf16.mxu0 0
        %960 = vmatpush1.bf16.xpose.msra.mxu0 0
        %961 = vmatprep.subr.bf16.mxu0 0
        %962 = vmatpush1.bf16.xpose.msra.mxu0 0
        %963 = vmatprep.subr.bf16.mxu0 0
        %964 = vmatpush1.bf16.xpose.msra.mxu0 0
        %965 = vmatprep.subr.bf16.mxu0 0
        %966 = vmatpush1.bf16.xpose.msra.mxu0 0
        %967 = vmatprep.subr.bf16.mxu0 0
        %968 = vmatpush1.bf16.xpose.msra.mxu0 0
        %969 = vmatprep.subr.bf16.mxu0 0
        %970 = vmatpush1.bf16.xpose.msra.mxu0 0
        %971 = vmatprep.subr.bf16.mxu0 0
        %972 = vmatpush1.bf16.xpose.msra.mxu0 0
        %973 = vmatprep.mubr.bf16.mxu0 0
        %974 = vmatmul.mubr.bf16.gmra.mrb[0].mxu0 %v936
        %v975 = vpop.f32.mrb[0].mxu0
        %v976 = vadd.f32 0.0, %v975
        %v977 = vpop.f32.mrb[0].mxu0
        %v978 = vpop.f32.mrb[0].mxu0
        %v979 = vpop.f32.mrb[0].mxu0
        %980 = vdwg.mxu0
        %v982 = vsel %vm934, %v929, 0
        %v985 = vsel %vm934, %v931, 0
        %987 = vmatprep.subr.bf16.mxu0 0
        %988 = vmatpush1.bf16.xpose.msra.mxu0 %v985
        %989 = vmatprep.subr.bf16.mxu0 0
        %990 = vmatpush1.bf16.xpose.msra.mxu0 0
        %991 = vmatprep.subr.bf16.mxu0 0
        %992 = vmatpush1.bf16.xpose.msra.mxu0 0
        %993 = vmatprep.subr.bf16.mxu0 0
        %994 = vmatpush1.bf16.xpose.msra.mxu0 0
        %995 = vmatprep.subr.bf16.mxu0 0
        %996 = vmatpush1.bf16.xpose.msra.mxu0 0
        %997 = vmatprep.subr.bf16.mxu0 0
        %998 = vmatpush1.bf16.xpose.msra.mxu0 0
        %999 = vmatprep.subr.bf16.mxu0 0
        %1000 = vmatpush1.bf16.xpose.msra.mxu0 0
        %1001 = vmatprep.subr.bf16.mxu0 0
        %1002 = vmatpush1.bf16.xpose.msra.mxu0 0
        %1003 = vmatprep.subr.bf16.mxu0 0
        %1004 = vmatpush1.bf16.xpose.msra.mxu0 0
        %1005 = vmatprep.subr.bf16.mxu0 0
        %1006 = vmatpush1.bf16.xpose.msra.mxu0 0
        %1007 = vmatprep.subr.bf16.mxu0 0
        %1008 = vmatpush1.bf16.xpose.msra.mxu0 0
        %1009 = vmatprep.subr.bf16.mxu0 0
        %1010 = vmatpush1.bf16.xpose.msra.mxu0 0
        %1011 = vmatprep.subr.bf16.mxu0 0
        %1012 = vmatpush1.bf16.xpose.msra.mxu0 0
        %1013 = vmatprep.subr.bf16.mxu0 0
        %1014 = vmatpush1.bf16.xpose.msra.mxu0 0
        %1015 = vmatprep.subr.bf16.mxu0 0
        %1016 = vmatpush1.bf16.xpose.msra.mxu0 0
        %1017 = vmatprep.subr.bf16.mxu0 0
        %1018 = vmatpush1.bf16.xpose.msra.mxu0 0
        %1019 = vmatprep.mubr.bf16.mxu0 0
        %1020 = vmatmul.mubr.bf16.gmra.mrb[0].mxu0 %v982
        %v1021 = vpop.f32.mrb[0].mxu0
        %v1022 = vadd.f32 0.0, %v1021
        %v1023 = vpop.f32.mrb[0].mxu0
        %v1024 = vpop.f32.mrb[0].mxu0
        %v1025 = vpop.f32.mrb[0].mxu0
        %1026 = vdwg.mxu0
        %vm1027 = vcmask 64512
        %v1028 = vsel %vm1027, %v976, -inf
        %1029 = vmax.xlane.f32.xlu0 %v1028
        %v1030 = vpop.xlane.xlu0 %1029
        %v1031 = vsel %vm1027, %v1022, -inf
        %1032 = vmax.xlane.f32.xlu0 %v1031
        %v1033 = vpop.xlane.xlu0 %1032
        %v1034 = vsub.f32 %v976, %v1030
        %v1035 = vsub.f32 %v1022, %v1033
        %v1036 = vmul.f32 %v1034, 1.442695
        %v1037 = vpow.pop %v1036
        %v1038 = vmul.f32 %v1035, 1.442695
        %v1039 = vpow.pop %v1038
        %v1040 = vsel %vm1027, %v1037, 0.0
        %1041 = vadd.xlane.f32.xlu0 %v1040
        %v1042 = vpop.xlane.xlu0 %1041
        %v1043 = vsel %vm1027, %v1039, 0.0
        %1044 = vadd.xlane.f32.xlu0 %v1043
        %v1045 = vpop.xlane.xlu0 %1044
        %v1046 = vrcp.pop %v1042
        %v1047 = vrcp.pop %v1045
        %v1048 = vmul.f32 %v1037, %v1046
        %v1049 = vmul.f32 %v1039, %v1047
        %v1050 = vpack.c.bf16 %v1048, %v1048
        %v1051 = vpack.c.bf16 %v1049, %v1049
        %v1053 = vsel %vm1027, %v1050, 0
        %vm1055 = vcmask 1043456
        %v1057 = vsel %vm1055, %v932, 0
        %1059 = vmatprep.subr.bf16.mxu0 0
        %1060 = vmatpush1.bf16.msra.mxu0 %v1057
        %1061 = vmatprep.subr.bf16.mxu0 0
        %1062 = vmatpush1.bf16.msra.mxu0 0
        %1063 = vmatprep.subr.bf16.mxu0 0
        %1064 = vmatpush1.bf16.msra.mxu0 0
        %1065 = vmatprep.subr.bf16.mxu0 0
        %1066 = vmatpush1.bf16.msra.mxu0 0
        %1067 = vmatprep.subr.bf16.mxu0 0
        %1068 = vmatpush1.bf16.msra.mxu0 0
        %1069 = vmatprep.subr.bf16.mxu0 0
        %1070 = vmatpush1.bf16.msra.mxu0 0
        %1071 = vmatprep.subr.bf16.mxu0 0
        %1072 = vmatpush1.bf16.msra.mxu0 0
        %1073 = vmatprep.subr.bf16.mxu0 0
        %1074 = vmatpush1.bf16.msra.mxu0 0
        %1075 = vmatprep.subr.bf16.mxu0 0
        %1076 = vmatpush1.bf16.msra.mxu0 0
        %1077 = vmatprep.subr.bf16.mxu0 0
        %1078 = vmatpush1.bf16.msra.mxu0 0
        %1079 = vmatprep.subr.bf16.mxu0 0
        %1080 = vmatpush1.bf16.msra.mxu0 0
        %1081 = vmatprep.subr.bf16.mxu0 0
        %1082 = vmatpush1.bf16.msra.mxu0 0
        %1083 = vmatprep.subr.bf16.mxu0 0
        %1084 = vmatpush1.bf16.msra.mxu0 0
        %1085 = vmatprep.subr.bf16.mxu0 0
        %1086 = vmatpush1.bf16.msra.mxu0 0
        %1087 = vmatprep.subr.bf16.mxu0 0
        %1088 = vmatpush1.bf16.msra.mxu0 0
        %1089 = vmatprep.subr.bf16.mxu0 0
        %1090 = vmatpush1.bf16.msra.mxu0 0
        %1091 = vmatprep.mubr.bf16.mxu0 0
        %1092 = vmatmul.mubr.bf16.gmra.mrb[0].mxu0 %v1053
        %v1093 = vpop.f32.mrb[0].mxu0
        %v1094 = vadd.f32 0.0, %v1093
        %v1095 = vpop.f32.mrb[0].mxu0
        %v1096 = vpop.f32.mrb[0].mxu0
        %v1097 = vpop.f32.mrb[0].mxu0
        %1098 = vdwg.mxu0
        %v1100 = vsel %vm1027, %v1051, 0
        %v1103 = vsel %vm1055, %v933, 0
        %1105 = vmatprep.subr.bf16.mxu0 0
        %1106 = vmatpush1.bf16.msra.mxu0 %v1103
        %1107 = vmatprep.subr.bf16.mxu0 0
        %1108 = vmatpush1.bf16.msra.mxu0 0
        %1109 = vmatprep.subr.bf16.mxu0 0
        %1110 = vmatpush1.bf16.msra.mxu0 0
        %1111 = vmatprep.subr.bf16.mxu0 0
        %1112 = vmatpush1.bf16.msra.mxu0 0
        %1113 = vmatprep.subr.bf16.mxu0 0
        %1114 = vmatpush1.bf16.msra.mxu0 0
        %1115 = vmatprep.subr.bf16.mxu0 0
        %1116 = vmatpush1.bf16.msra.mxu0 0
        %1117 = vmatprep.subr.bf16.mxu0 0
        %1118 = vmatpush1.bf16.msra.mxu0 0
        %1119 = vmatprep.subr.bf16.mxu0 0
        %1120 = vmatpush1.bf16.msra.mxu0 0
        %1121 = vmatprep.subr.bf16.mxu0 0
        %1122 = vmatpush1.bf16.msra.mxu0 0
        %1123 = vmatprep.subr.bf16.mxu0 0
        %1124 = vmatpush1.bf16.msra.mxu0 0
        %1125 = vmatprep.subr.bf16.mxu0 0
        %1126 = vmatpush1.bf16.msra.mxu0 0
        %1127 = vmatprep.subr.bf16.mxu0 0
        %1128 = vmatpush1.bf16.msra.mxu0 0
        %1129 = vmatprep.subr.bf16.mxu0 0
        %1130 = vmatpush1.bf16.msra.mxu0 0
        %1131 = vmatprep.subr.bf16.mxu0 0
        %1132 = vmatpush1.bf16.msra.mxu0 0
        %1133 = vmatprep.subr.bf16.mxu0 0
        %1134 = vmatpush1.bf16.msra.mxu0 0
        %1135 = vmatprep.subr.bf16.mxu0 0
        %1136 = vmatpush1.bf16.msra.mxu0 0
        %1137 = vmatprep.mubr.bf16.mxu0 0
        %1138 = vmatmul.mubr.bf16.gmra.mrb[0].mxu0 %v1100
        %v1139 = vpop.f32.mrb[0].mxu0
        %v1140 = vadd.f32 0.0, %v1139
        %v1141 = vpop.f32.mrb[0].mxu0
        %v1142 = vpop.f32.mrb[0].mxu0
        %v1143 = vpop.f32.mrb[0].mxu0
        %1144 = vdwg.mxu0
        %1146 = vrot.lane.b32.xlu0 %v928, 96
        %v1147 = vpop.permute.xlu0 %1146
        %1149 = vrot.lane.b32.xlu0 %v930, 96
        %v1150 = vpop.permute.xlu0 %1149
        %v1152 = vsel %vm934, %v1147, 0
        %v1155 = vsel %vm934, %v1150, 0
        %1157 = vmatprep.subr.bf16.mxu0 0
        %1158 = vmatpush1.bf16.xpose.msra.mxu0 %v1155
        %1159 = vmatprep.subr.bf16.mxu0 0
        %1160 = vmatpush1.bf16.xpose.msra.mxu0 0
        %1161 = vmatprep.subr.bf16.mxu0 0
        %1162 = vmatpush1.bf16.xpose.msra.mxu0 0
        %1163 = vmatprep.subr.bf16.mxu0 0
        %1164 = vmatpush1.bf16.xpose.msra.mxu0 0
        %1165 = vmatprep.subr.bf16.mxu0 0
        %1166 = vmatpush1.bf16.xpose.msra.mxu0 0
        %1167 = vmatprep.subr.bf16.mxu0 0
        %1168 = vmatpush1.bf16.xpose.msra.mxu0 0
        %1169 = vmatprep.subr.bf16.mxu0 0
        %1170 = vmatpush1.bf16.xpose.msra.mxu0 0
        %1171 = vmatprep.subr.bf16.mxu0 0
        %1172 = vmatpush1.bf16.xpose.msra.mxu0 0
        %1173 = vmatprep.subr.bf16.mxu0 0
        %1174 = vmatpush1.bf16.xpose.msra.mxu0 0
        %1175 = vmatprep.subr.bf16.mxu0 0
        %1176 = vmatpush1.bf16.xpose.msra.mxu0 0
        %1177 = vmatprep.subr.bf16.mxu0 0
        %1178 = vmatpush1.bf16.xpose.msra.mxu0 0
        %1179 = vmatprep.subr.bf16.mxu0 0
        %1180 = vmatpush1.bf16.xpose.msra.mxu0 0
        %1181 = vmatprep.subr.bf16.mxu0 0
        %1182 = vmatpush1.bf16.xpose.msra.mxu0 0
        %1183 = vmatprep.subr.bf16.mxu0 0
        %1184 = vmatpush1.bf16.xpose.msra.mxu0 0
        %1185 = vmatprep.subr.bf16.mxu0 0
        %1186 = vmatpush1.bf16.xpose.msra.mxu0 0
        %1187 = vmatprep.subr.bf16.mxu0 0
        %1188 = vmatpush1.bf16.xpose.msra.mxu0 0
        %1189 = vmatprep.mubr.bf16.mxu0 0
        %1190 = vmatmul.mubr.bf16.gmra.mrb[0].mxu0 %v1152
        %v1191 = vpop.f32.mrb[0].mxu0
        %v1192 = vadd.f32 0.0, %v1191
        %v1193 = vpop.f32.mrb[0].mxu0
        %v1194 = vpop.f32.mrb[0].mxu0
        %v1195 = vpop.f32.mrb[0].mxu0
        %1196 = vdwg.mxu0
        %1198 = vrot.lane.b32.xlu0 %v929, 96
        %v1199 = vpop.permute.xlu0 %1198
        %1201 = vrot.lane.b32.xlu0 %v931, 96
        %v1202 = vpop.permute.xlu0 %1201
        %v1204 = vsel %vm934, %v1199, 0
        %v1207 = vsel %vm934, %v1202, 0
        %1209 = vmatprep.subr.bf16.mxu0 0
        %1210 = vmatpush1.bf16.xpose.msra.mxu0 %v1207
        %1211 = vmatprep.subr.bf16.mxu0 0
        %1212 = vmatpush1.bf16.xpose.msra.mxu0 0
        %1213 = vmatprep.subr.bf16.mxu0 0
        %1214 = vmatpush1.bf16.xpose.msra.mxu0 0
        %1215 = vmatprep.subr.bf16.mxu0 0
        %1216 = vmatpush1.bf16.xpose.msra.mxu0 0
        %1217 = vmatprep.subr.bf16.mxu0 0
        %1218 = vmatpush1.bf16.xpose.msra.mxu0 0
        %1219 = vmatprep.subr.bf16.mxu0 0
        %1220 = vmatpush1.bf16.xpose.msra.mxu0 0
        %1221 = vmatprep.subr.bf16.mxu0 0
        %1222 = vmatpush1.bf16.xpose.msra.mxu0 0
        %1223 = vmatprep.subr.bf16.mxu0 0
        %1224 = vmatpush1.bf16.xpose.msra.mxu0 0
        %1225 = vmatprep.subr.bf16.mxu0 0
        %1226 = vmatpush1.bf16.xpose.msra.mxu0 0
        %1227 = vmatprep.subr.bf16.mxu0 0
        %1228 = vmatpush1.bf16.xpose.msra.mxu0 0
        %1229 = vmatprep.subr.bf16.mxu0 0
        %1230 = vmatpush1.bf16.xpose.msra.mxu0 0
        %1231 = vmatprep.subr.bf16.mxu0 0
        %1232 = vmatpush1.bf16.xpose.msra.mxu0 0
        %1233 = vmatprep.subr.bf16.mxu0 0
        %1234 = vmatpush1.bf16.xpose.msra.mxu0 0
        %1235 = vmatprep.subr.bf16.mxu0 0
        %1236 = vmatpush1.bf16.xpose.msra.mxu0 0
        %1237 = vmatprep.subr.bf16.mxu0 0
        %1238 = vmatpush1.bf16.xpose.msra.mxu0 0
        %1239 = vmatprep.subr.bf16.mxu0 0
        %1240 = vmatpush1.bf16.xpose.msra.mxu0 0
        %1241 = vmatprep.mubr.bf16.mxu0 0
        %1242 = vmatmul.mubr.bf16.gmra.mrb[0].mxu0 %v1204
        %v1243 = vpop.f32.mrb[0].mxu0
        %v1244 = vadd.f32 0.0, %v1243
        %v1245 = vpop.f32.mrb[0].mxu0
        %v1246 = vpop.f32.mrb[0].mxu0
        %v1247 = vpop.f32.mrb[0].mxu0
        %1248 = vdwg.mxu0
        %v1249 = vsel %vm1027, %v1192, -inf
        %1250 = vmax.xlane.f32.xlu0 %v1249
        %v1251 = vpop.xlane.xlu0 %1250
        %v1252 = vsel %vm1027, %v1244, -inf
        %1253 = vmax.xlane.f32.xlu0 %v1252
        %v1254 = vpop.xlane.xlu0 %1253
        %v1255 = vsub.f32 %v1192, %v1251
        %v1256 = vsub.f32 %v1244, %v1254
        %v1257 = vmul.f32 %v1255, 1.442695
        %v1258 = vpow.pop %v1257
        %v1259 = vmul.f32 %v1256, 1.442695
        %v1260 = vpow.pop %v1259
        %v1261 = vsel %vm1027, %v1258, 0.0
        %1262 = vadd.xlane.f32.xlu0 %v1261
        %v1263 = vpop.xlane.xlu0 %1262
        %v1264 = vsel %vm1027, %v1260, 0.0
        %1265 = vadd.xlane.f32.xlu0 %v1264
        %v1266 = vpop.xlane.xlu0 %1265
        %v1267 = vrcp.pop %v1263
        %v1268 = vrcp.pop %v1266
        %v1269 = vmul.f32 %v1258, %v1267
        %v1270 = vmul.f32 %v1260, %v1268
        %v1271 = vpack.c.bf16 %v1269, %v1269
        %v1272 = vpack.c.bf16 %v1270, %v1270
        %1274 = vrot.lane.b32.xlu0 %v932, 96
        %v1275 = vpop.permute.xlu0 %1274
        %v1277 = vsel %vm1027, %v1271, 0
        %v1280 = vsel %vm1055, %v1275, 0
        %1282 = vmatprep.subr.bf16.mxu0 0
        %1283 = vmatpush1.bf16.msra.mxu0 %v1280
        %1284 = vmatprep.subr.bf16.mxu0 0
        %1285 = vmatpush1.bf16.msra.mxu0 0
        %1286 = vmatprep.subr.bf16.mxu0 0
        %1287 = vmatpush1.bf16.msra.mxu0 0
        %1288 = vmatprep.subr.bf16.mxu0 0
        %1289 = vmatpush1.bf16.msra.mxu0 0
        %1290 = vmatprep.subr.bf16.mxu0 0
        %1291 = vmatpush1.bf16.msra.mxu0 0
        %1292 = vmatprep.subr.bf16.mxu0 0
        %1293 = vmatpush1.bf16.msra.mxu0 0
        %1294 = vmatprep.subr.bf16.mxu0 0
        %1295 = vmatpush1.bf16.msra.mxu0 0
        %1296 = vmatprep.subr.bf16.mxu0 0
        %1297 = vmatpush1.bf16.msra.mxu0 0
        %1298 = vmatprep.subr.bf16.mxu0 0
        %1299 = vmatpush1.bf16.msra.mxu0 0
        %1300 = vmatprep.subr.bf16.mxu0 0
        %1301 = vmatpush1.bf16.msra.mxu0 0
        %1302 = vmatprep.subr.bf16.mxu0 0
        %1303 = vmatpush1.bf16.msra.mxu0 0
        %1304 = vmatprep.subr.bf16.mxu0 0
        %1305 = vmatpush1.bf16.msra.mxu0 0
        %1306 = vmatprep.subr.bf16.mxu0 0
        %1307 = vmatpush1.bf16.msra.mxu0 0
        %1308 = vmatprep.subr.bf16.mxu0 0
        %1309 = vmatpush1.bf16.msra.mxu0 0
        %1310 = vmatprep.subr.bf16.mxu0 0
        %1311 = vmatpush1.bf16.msra.mxu0 0
        %1312 = vmatprep.subr.bf16.mxu0 0
        %1313 = vmatpush1.bf16.msra.mxu0 0
        %1314 = vmatprep.mubr.bf16.mxu0 0
        %1315 = vmatmul.mubr.bf16.gmra.mrb[0].mxu0 %v1277
        %v1316 = vpop.f32.mrb[0].mxu0
        %v1317 = vadd.f32 0.0, %v1316
        %v1318 = vpop.f32.mrb[0].mxu0
        %v1319 = vpop.f32.mrb[0].mxu0
        %v1320 = vpop.f32.mrb[0].mxu0
        %1321 = vdwg.mxu0
        %1323 = vrot.lane.b32.xlu0 %v933, 96
        %v1324 = vpop.permute.xlu0 %1323
        %v1326 = vsel %vm1027, %v1272, 0
        %v1329 = vsel %vm1055, %v1324, 0
        %1331 = vmatprep.subr.bf16.mxu0 0
        %1332 = vmatpush1.bf16.msra.mxu0 %v1329
        %1333 = vmatprep.subr.bf16.mxu0 0
        %1334 = vmatpush1.bf16.msra.mxu0 0
        %1335 = vmatprep.subr.bf16.mxu0 0
        %1336 = vmatpush1.bf16.msra.mxu0 0
        %1337 = vmatprep.subr.bf16.mxu0 0
        %1338 = vmatpush1.bf16.msra.mxu0 0
        %1339 = vmatprep.subr.bf16.mxu0 0
        %1340 = vmatpush1.bf16.msra.mxu0 0
        %1341 = vmatprep.subr.bf16.mxu0 0
        %1342 = vmatpush1.bf16.msra.mxu0 0
        %1343 = vmatprep.subr.bf16.mxu0 0
        %1344 = vmatpush1.bf16.msra.mxu0 0
        %1345 = vmatprep.subr.bf16.mxu0 0
        %1346 = vmatpush1.bf16.msra.mxu0 0
        %1347 = vmatprep.subr.bf16.mxu0 0
        %1348 = vmatpush1.bf16.msra.mxu0 0
        %1349 = vmatprep.subr.bf16.mxu0 0
        %1350 = vmatpush1.bf16.msra.mxu0 0
        %1351 = vmatprep.subr.bf16.mxu0 0
        %1352 = vmatpush1.bf16.msra.mxu0 0
        %1353 = vmatprep.subr.bf16.mxu0 0
        %1354 = vmatpush1.bf16.msra.mxu0 0
        %1355 = vmatprep.subr.bf16.mxu0 0
        %1356 = vmatpush1.bf16.msra.mxu0 0
        %1357 = vmatprep.subr.bf16.mxu0 0
        %1358 = vmatpush1.bf16.msra.mxu0 0
        %1359 = vmatprep.subr.bf16.mxu0 0
        %1360 = vmatpush1.bf16.msra.mxu0 0
        %1361 = vmatprep.subr.bf16.mxu0 0
        %1362 = vmatpush1.bf16.msra.mxu0 0
        %1363 = vmatprep.mubr.bf16.mxu0 0
        %1364 = vmatmul.mubr.bf16.gmra.mrb[0].mxu0 %v1326
        %v1365 = vpop.f32.mrb[0].mxu0
        %v1366 = vadd.f32 0.0, %v1365
        %v1367 = vpop.f32.mrb[0].mxu0
        %v1368 = vpop.f32.mrb[0].mxu0
        %v1369 = vpop.f32.mrb[0].mxu0
        %1370 = vdwg.mxu0
        %1371 = vrot.lane.b32.xlu0 %v928, 64
        %v1372 = vpop.permute.xlu0 %1371
        %1373 = vrot.lane.b32.xlu0 %v930, 64
        %v1374 = vpop.permute.xlu0 %1373
        %v1376 = vsel %vm934, %v1372, 0
        %v1379 = vsel %vm934, %v1374, 0
        %1381 = vmatprep.subr.bf16.mxu0 0
        %1382 = vmatpush1.bf16.xpose.msra.mxu0 %v1379
        %1383 = vmatprep.subr.bf16.mxu0 0
        %1384 = vmatpush1.bf16.xpose.msra.mxu0 0
        %1385 = vmatprep.subr.bf16.mxu0 0
        %1386 = vmatpush1.bf16.xpose.msra.mxu0 0
        %1387 = vmatprep.subr.bf16.mxu0 0
        %1388 = vmatpush1.bf16.xpose.msra.mxu0 0
        %1389 = vmatprep.subr.bf16.mxu0 0
        %1390 = vmatpush1.bf16.xpose.msra.mxu0 0
        %1391 = vmatprep.subr.bf16.mxu0 0
        %1392 = vmatpush1.bf16.xpose.msra.mxu0 0
        %1393 = vmatprep.subr.bf16.mxu0 0
        %1394 = vmatpush1.bf16.xpose.msra.mxu0 0
        %1395 = vmatprep.subr.bf16.mxu0 0
        %1396 = vmatpush1.bf16.xpose.msra.mxu0 0
        %1397 = vmatprep.subr.bf16.mxu0 0
        %1398 = vmatpush1.bf16.xpose.msra.mxu0 0
        %1399 = vmatprep.subr.bf16.mxu0 0
        %1400 = vmatpush1.bf16.xpose.msra.mxu0 0
        %1401 = vmatprep.subr.bf16.mxu0 0
        %1402 = vmatpush1.bf16.xpose.msra.mxu0 0
        %1403 = vmatprep.subr.bf16.mxu0 0
        %1404 = vmatpush1.bf16.xpose.msra.mxu0 0
        %1405 = vmatprep.subr.bf16.mxu0 0
        %1406 = vmatpush1.bf16.xpose.msra.mxu0 0
        %1407 = vmatprep.subr.bf16.mxu0 0
        %1408 = vmatpush1.bf16.xpose.msra.mxu0 0
        %1409 = vmatprep.subr.bf16.mxu0 0
        %1410 = vmatpush1.bf16.xpose.msra.mxu0 0
        %1411 = vmatprep.subr.bf16.mxu0 0
        %1412 = vmatpush1.bf16.xpose.msra.mxu0 0
        %1413 = vmatprep.mubr.bf16.mxu0 0
        %1414 = vmatmul.mubr.bf16.gmra.mrb[0].mxu0 %v1376
        %v1415 = vpop.f32.mrb[0].mxu0
        %v1416 = vadd.f32 0.0, %v1415
        %v1417 = vpop.f32.mrb[0].mxu0
        %v1418 = vpop.f32.mrb[0].mxu0
        %v1419 = vpop.f32.mrb[0].mxu0
        %1420 = vdwg.mxu0
        %1421 = vrot.lane.b32.xlu0 %v929, 64
        %v1422 = vpop.permute.xlu0 %1421
        %1423 = vrot.lane.b32.xlu0 %v931, 64
        %v1424 = vpop.permute.xlu0 %1423
        %v1426 = vsel %vm934, %v1422, 0
        %v1429 = vsel %vm934, %v1424, 0
        %1431 = vmatprep.subr.bf16.mxu0 0
        %1432 = vmatpush1.bf16.xpose.msra.mxu0 %v1429
        %1433 = vmatprep.subr.bf16.mxu0 0
        %1434 = vmatpush1.bf16.xpose.msra.mxu0 0
        %1435 = vmatprep.subr.bf16.mxu0 0
        %1436 = vmatpush1.bf16.xpose.msra.mxu0 0
        %1437 = vmatprep.subr.bf16.mxu0 0
        %1438 = vmatpush1.bf16.xpose.msra.mxu0 0
        %1439 = vmatprep.subr.bf16.mxu0 0
        %1440 = vmatpush1.bf16.xpose.msra.mxu0 0
        %1441 = vmatprep.subr.bf16.mxu0 0
        %1442 = vmatpush1.bf16.xpose.msra.mxu0 0
        %1443 = vmatprep.subr.bf16.mxu0 0
        %1444 = vmatpush1.bf16.xpose.msra.mxu0 0
        %1445 = vmatprep.subr.bf16.mxu0 0
        %1446 = vmatpush1.bf16.xpose.msra.mxu0 0
        %1447 = vmatprep.subr.bf16.mxu0 0
        %1448 = vmatpush1.bf16.xpose.msra.mxu0 0
        %1449 = vmatprep.subr.bf16.mxu0 0
        %1450 = vmatpush1.bf16.xpose.msra.mxu0 0
        %1451 = vmatprep.subr.bf16.mxu0 0
        %1452 = vmatpush1.bf16.xpose.msra.mxu0 0
        %1453 = vmatprep.subr.bf16.mxu0 0
        %1454 = vmatpush1.bf16.xpose.msra.mxu0 0
        %1455 = vmatprep.subr.bf16.mxu0 0
        %1456 = vmatpush1.bf16.xpose.msra.mxu0 0
        %1457 = vmatprep.subr.bf16.mxu0 0
        %1458 = vmatpush1.bf16.xpose.msra.mxu0 0
        %1459 = vmatprep.subr.bf16.mxu0 0
        %1460 = vmatpush1.bf16.xpose.msra.mxu0 0
        %1461 = vmatprep.subr.bf16.mxu0 0
        %1462 = vmatpush1.bf16.xpose.msra.mxu0 0
        %1463 = vmatprep.mubr.bf16.mxu0 0
        %1464 = vmatmul.mubr.bf16.gmra.mrb[0].mxu0 %v1426
        %v1465 = vpop.f32.mrb[0].mxu0
        %v1466 = vadd.f32 0.0, %v1465
        %v1467 = vpop.f32.mrb[0].mxu0
        %v1468 = vpop.f32.mrb[0].mxu0
        %v1469 = vpop.f32.mrb[0].mxu0
        %1470 = vdwg.mxu0
        %v1471 = vsel %vm1027, %v1416, -inf
        %1472 = vmax.xlane.f32.xlu0 %v1471
        %v1473 = vpop.xlane.xlu0 %1472
        %v1474 = vsel %vm1027, %v1466, -inf
        %1475 = vmax.xlane.f32.xlu0 %v1474
        %v1476 = vpop.xlane.xlu0 %1475
        %v1477 = vsub.f32 %v1416, %v1473
        %v1478 = vsub.f32 %v1466, %v1476
        %v1479 = vmul.f32 %v1477, 1.442695
        %v1480 = vpow.pop %v1479
        %v1481 = vmul.f32 %v1478, 1.442695
        %v1482 = vpow.pop %v1481
        %v1483 = vsel %vm1027, %v1480, 0.0
        %1484 = vadd.xlane.f32.xlu0 %v1483
        %v1485 = vpop.xlane.xlu0 %1484
        %v1486 = vsel %vm1027, %v1482, 0.0
        %1487 = vadd.xlane.f32.xlu0 %v1486
        %v1488 = vpop.xlane.xlu0 %1487
        %v1489 = vrcp.pop %v1485
        %v1490 = vrcp.pop %v1488
        %v1491 = vmul.f32 %v1480, %v1489
        %v1492 = vmul.f32 %v1482, %v1490
        %v1493 = vpack.c.bf16 %v1491, %v1491
        %v1494 = vpack.c.bf16 %v1492, %v1492
        %1495 = vrot.lane.b32.xlu0 %v932, 64
        %v1496 = vpop.permute.xlu0 %1495
        %v1498 = vsel %vm1027, %v1493, 0
        %v1501 = vsel %vm1055, %v1496, 0
        %1503 = vmatprep.subr.bf16.mxu0 0
        %1504 = vmatpush1.bf16.msra.mxu0 %v1501
        %1505 = vmatprep.subr.bf16.mxu0 0
        %1506 = vmatpush1.bf16.msra.mxu0 0
        %1507 = vmatprep.subr.bf16.mxu0 0
        %1508 = vmatpush1.bf16.msra.mxu0 0
        %1509 = vmatprep.subr.bf16.mxu0 0
        %1510 = vmatpush1.bf16.msra.mxu0 0
        %1511 = vmatprep.subr.bf16.mxu0 0
        %1512 = vmatpush1.bf16.msra.mxu0 0
        %1513 = vmatprep.subr.bf16.mxu0 0
        %1514 = vmatpush1.bf16.msra.mxu0 0
        %1515 = vmatprep.subr.bf16.mxu0 0
        %1516 = vmatpush1.bf16.msra.mxu0 0
        %1517 = vmatprep.subr.bf16.mxu0 0
        %1518 = vmatpush1.bf16.msra.mxu0 0
        %1519 = vmatprep.subr.bf16.mxu0 0
        %1520 = vmatpush1.bf16.msra.mxu0 0
        %1521 = vmatprep.subr.bf16.mxu0 0
        %1522 = vmatpush1.bf16.msra.mxu0 0
        %1523 = vmatprep.subr.bf16.mxu0 0
        %1524 = vmatpush1.bf16.msra.mxu0 0
        %1525 = vmatprep.subr.bf16.mxu0 0
        %1526 = vmatpush1.bf16.msra.mxu0 0
        %1527 = vmatprep.subr.bf16.mxu0 0
        %1528 = vmatpush1.bf16.msra.mxu0 0
        %1529 = vmatprep.subr.bf16.mxu0 0
        %1530 = vmatpush1.bf16.msra.mxu0 0
        %1531 = vmatprep.subr.bf16.mxu0 0
        %1532 = vmatpush1.bf16.msra.mxu0 0
        %1533 = vmatprep.subr.bf16.mxu0 0
        %1534 = vmatpush1.bf16.msra.mxu0 0
        %1535 = vmatprep.mubr.bf16.mxu0 0
        %1536 = vmatmul.mubr.bf16.gmra.mrb[0].mxu0 %v1498
        %v1537 = vpop.f32.mrb[0].mxu0
        %v1538 = vadd.f32 0.0, %v1537
        %v1539 = vpop.f32.mrb[0].mxu0
        %v1540 = vpop.f32.mrb[0].mxu0
        %v1541 = vpop.f32.mrb[0].mxu0
        %1542 = vdwg.mxu0
        %1543 = vrot.lane.b32.xlu0 %v933, 64
        %v1544 = vpop.permute.xlu0 %1543
        %v1546 = vsel %vm1027, %v1494, 0
        %v1549 = vsel %vm1055, %v1544, 0
        %1551 = vmatprep.subr.bf16.mxu0 0
        %1552 = vmatpush1.bf16.msra.mxu0 %v1549
        %1553 = vmatprep.subr.bf16.mxu0 0
        %1554 = vmatpush1.bf16.msra.mxu0 0
        %1555 = vmatprep.subr.bf16.mxu0 0
        %1556 = vmatpush1.bf16.msra.mxu0 0
        %1557 = vmatprep.subr.bf16.mxu0 0
        %1558 = vmatpush1.bf16.msra.mxu0 0
        %1559 = vmatprep.subr.bf16.mxu0 0
        %1560 = vmatpush1.bf16.msra.mxu0 0
        %1561 = vmatprep.subr.bf16.mxu0 0
        %1562 = vmatpush1.bf16.msra.mxu0 0
        %1563 = vmatprep.subr.bf16.mxu0 0
        %1564 = vmatpush1.bf16.msra.mxu0 0
        %1565 = vmatprep.subr.bf16.mxu0 0
        %1566 = vmatpush1.bf16.msra.mxu0 0
        %1567 = vmatprep.subr.bf16.mxu0 0
        %1568 = vmatpush1.bf16.msra.mxu0 0
        %1569 = vmatprep.subr.bf16.mxu0 0
        %1570 = vmatpush1.bf16.msra.mxu0 0
        %1571 = vmatprep.subr.bf16.mxu0 0
        %1572 = vmatpush1.bf16.msra.mxu0 0
        %1573 = vmatprep.subr.bf16.mxu0 0
        %1574 = vmatpush1.bf16.msra.mxu0 0
        %1575 = vmatprep.subr.bf16.mxu0 0
        %1576 = vmatpush1.bf16.msra.mxu0 0
        %1577 = vmatprep.subr.bf16.mxu0 0
        %1578 = vmatpush1.bf16.msra.mxu0 0
        %1579 = vmatprep.subr.bf16.mxu0 0
        %1580 = vmatpush1.bf16.msra.mxu0 0
        %1581 = vmatprep.subr.bf16.mxu0 0
        %1582 = vmatpush1.bf16.msra.mxu0 0
        %1583 = vmatprep.mubr.bf16.mxu0 0
        %1584 = vmatmul.mubr.bf16.gmra.mrb[0].mxu0 %v1546
        %v1585 = vpop.f32.mrb[0].mxu0
        %v1586 = vadd.f32 0.0, %v1585
        %v1587 = vpop.f32.mrb[0].mxu0
        %v1588 = vpop.f32.mrb[0].mxu0
        %v1589 = vpop.f32.mrb[0].mxu0
        %1590 = vdwg.mxu0
        %1591 = vrot.lane.b32.xlu0 %v928, 32
        %v1592 = vpop.permute.xlu0 %1591
        %1593 = vrot.lane.b32.xlu0 %v930, 32
        %v1594 = vpop.permute.xlu0 %1593
        %v1596 = vsel %vm934, %v1592, 0
        %v1599 = vsel %vm934, %v1594, 0
        %1601 = vmatprep.subr.bf16.mxu0 0
        %1602 = vmatpush1.bf16.xpose.msra.mxu0 %v1599
        %1603 = vmatprep.subr.bf16.mxu0 0
        %1604 = vmatpush1.bf16.xpose.msra.mxu0 0
        %1605 = vmatprep.subr.bf16.mxu0 0
        %1606 = vmatpush1.bf16.xpose.msra.mxu0 0
        %1607 = vmatprep.subr.bf16.mxu0 0
        %1608 = vmatpush1.bf16.xpose.msra.mxu0 0
        %1609 = vmatprep.subr.bf16.mxu0 0
        %1610 = vmatpush1.bf16.xpose.msra.mxu0 0
        %1611 = vmatprep.subr.bf16.mxu0 0
        %1612 = vmatpush1.bf16.xpose.msra.mxu0 0
        %1613 = vmatprep.subr.bf16.mxu0 0
        %1614 = vmatpush1.bf16.xpose.msra.mxu0 0
        %1615 = vmatprep.subr.bf16.mxu0 0
        %1616 = vmatpush1.bf16.xpose.msra.mxu0 0
        %1617 = vmatprep.subr.bf16.mxu0 0
        %1618 = vmatpush1.bf16.xpose.msra.mxu0 0
        %1619 = vmatprep.subr.bf16.mxu0 0
        %1620 = vmatpush1.bf16.xpose.msra.mxu0 0
        %1621 = vmatprep.subr.bf16.mxu0 0
        %1622 = vmatpush1.bf16.xpose.msra.mxu0 0
        %1623 = vmatprep.subr.bf16.mxu0 0
        %1624 = vmatpush1.bf16.xpose.msra.mxu0 0
        %1625 = vmatprep.subr.bf16.mxu0 0
        %1626 = vmatpush1.bf16.xpose.msra.mxu0 0
        %1627 = vmatprep.subr.bf16.mxu0 0
        %1628 = vmatpush1.bf16.xpose.msra.mxu0 0
        %1629 = vmatprep.subr.bf16.mxu0 0
        %1630 = vmatpush1.bf16.xpose.msra.mxu0 0
        %1631 = vmatprep.subr.bf16.mxu0 0
        %1632 = vmatpush1.bf16.xpose.msra.mxu0 0
        %1633 = vmatprep.mubr.bf16.mxu0 0
        %1634 = vmatmul.mubr.bf16.gmra.mrb[0].mxu0 %v1596
        %v1635 = vpop.f32.mrb[0].mxu0
        %v1636 = vadd.f32 0.0, %v1635
        %v1637 = vpop.f32.mrb[0].mxu0
        %v1638 = vpop.f32.mrb[0].mxu0
        %v1639 = vpop.f32.mrb[0].mxu0
        %1640 = vdwg.mxu0
        %1641 = vrot.lane.b32.xlu0 %v929, 32
        %v1642 = vpop.permute.xlu0 %1641
        %1643 = vrot.lane.b32.xlu0 %v931, 32
        %v1644 = vpop.permute.xlu0 %1643
        %v1646 = vsel %vm934, %v1642, 0
        %v1649 = vsel %vm934, %v1644, 0
        %1651 = vmatprep.subr.bf16.mxu0 0
        %1652 = vmatpush1.bf16.xpose.msra.mxu0 %v1649
        %1653 = vmatprep.subr.bf16.mxu0 0
        %1654 = vmatpush1.bf16.xpose.msra.mxu0 0
        %1655 = vmatprep.subr.bf16.mxu0 0
        %1656 = vmatpush1.bf16.xpose.msra.mxu0 0
        %1657 = vmatprep.subr.bf16.mxu0 0
        %1658 = vmatpush1.bf16.xpose.msra.mxu0 0
        %1659 = vmatprep.subr.bf16.mxu0 0
        %1660 = vmatpush1.bf16.xpose.msra.mxu0 0
        %1661 = vmatprep.subr.bf16.mxu0 0
        %1662 = vmatpush1.bf16.xpose.msra.mxu0 0
        %1663 = vmatprep.subr.bf16.mxu0 0
        %1664 = vmatpush1.bf16.xpose.msra.mxu0 0
        %1665 = vmatprep.subr.bf16.mxu0 0
        %1666 = vmatpush1.bf16.xpose.msra.mxu0 0
        %1667 = vmatprep.subr.bf16.mxu0 0
        %1668 = vmatpush1.bf16.xpose.msra.mxu0 0
        %1669 = vmatprep.subr.bf16.mxu0 0
        %1670 = vmatpush1.bf16.xpose.msra.mxu0 0
        %1671 = vmatprep.subr.bf16.mxu0 0
        %1672 = vmatpush1.bf16.xpose.msra.mxu0 0
        %1673 = vmatprep.subr.bf16.mxu0 0
        %1674 = vmatpush1.bf16.xpose.msra.mxu0 0
        %1675 = vmatprep.subr.bf16.mxu0 0
        %1676 = vmatpush1.bf16.xpose.msra.mxu0 0
        %1677 = vmatprep.subr.bf16.mxu0 0
        %1678 = vmatpush1.bf16.xpose.msra.mxu0 0
        %1679 = vmatprep.subr.bf16.mxu0 0
        %1680 = vmatpush1.bf16.xpose.msra.mxu0 0
        %1681 = vmatprep.subr.bf16.mxu0 0
        %1682 = vmatpush1.bf16.xpose.msra.mxu0 0
        %1683 = vmatprep.mubr.bf16.mxu0 0
        %1684 = vmatmul.mubr.bf16.gmra.mrb[0].mxu0 %v1646
        %v1685 = vpop.f32.mrb[0].mxu0
        %v1686 = vadd.f32 0.0, %v1685
        %v1687 = vpop.f32.mrb[0].mxu0
        %v1688 = vpop.f32.mrb[0].mxu0
        %v1689 = vpop.f32.mrb[0].mxu0
        %1690 = vdwg.mxu0
        %v1691 = vsel %vm1027, %v1636, -inf
        %1692 = vmax.xlane.f32.xlu0 %v1691
        %v1693 = vpop.xlane.xlu0 %1692
        %v1694 = vsel %vm1027, %v1686, -inf
        %1695 = vmax.xlane.f32.xlu0 %v1694
        %v1696 = vpop.xlane.xlu0 %1695
        %v1697 = vsub.f32 %v1636, %v1693
        %v1698 = vsub.f32 %v1686, %v1696
        %v1699 = vmul.f32 %v1697, 1.442695
        %v1700 = vpow.pop %v1699
        %v1701 = vmul.f32 %v1698, 1.442695
        %v1702 = vpow.pop %v1701
        %v1703 = vsel %vm1027, %v1700, 0.0
        %1704 = vadd.xlane.f32.xlu0 %v1703
        %v1705 = vpop.xlane.xlu0 %1704
        %v1706 = vsel %vm1027, %v1702, 0.0
        %1707 = vadd.xlane.f32.xlu0 %v1706
        %v1708 = vpop.xlane.xlu0 %1707
        %v1709 = vrcp.pop %v1705
        %v1710 = vrcp.pop %v1708
        %v1711 = vmul.f32 %v1700, %v1709
        %v1712 = vmul.f32 %v1702, %v1710
        %v1713 = vpack.c.bf16 %v1711, %v1711
        %v1714 = vpack.c.bf16 %v1712, %v1712
        %1715 = vrot.lane.b32.xlu0 %v932, 32
        %v1716 = vpop.permute.xlu0 %1715
        %v1718 = vsel %vm1027, %v1713, 0
        %v1721 = vsel %vm1055, %v1716, 0
        %1723 = vmatprep.subr.bf16.mxu0 0
        %1724 = vmatpush1.bf16.msra.mxu0 %v1721
        %1725 = vmatprep.subr.bf16.mxu0 0
        %1726 = vmatpush1.bf16.msra.mxu0 0
        %1727 = vmatprep.subr.bf16.mxu0 0
        %1728 = vmatpush1.bf16.msra.mxu0 0
        %1729 = vmatprep.subr.bf16.mxu0 0
        %1730 = vmatpush1.bf16.msra.mxu0 0
        %1731 = vmatprep.subr.bf16.mxu0 0
        %1732 = vmatpush1.bf16.msra.mxu0 0
        %1733 = vmatprep.subr.bf16.mxu0 0
        %1734 = vmatpush1.bf16.msra.mxu0 0
        %1735 = vmatprep.subr.bf16.mxu0 0
        %1736 = vmatpush1.bf16.msra.mxu0 0
        %1737 = vmatprep.subr.bf16.mxu0 0
        %1738 = vmatpush1.bf16.msra.mxu0 0
        %1739 = vmatprep.subr.bf16.mxu0 0
        %1740 = vmatpush1.bf16.msra.mxu0 0
        %1741 = vmatprep.subr.bf16.mxu0 0
        %1742 = vmatpush1.bf16.msra.mxu0 0
        %1743 = vmatprep.subr.bf16.mxu0 0
        %1744 = vmatpush1.bf16.msra.mxu0 0
        %1745 = vmatprep.subr.bf16.mxu0 0
        %1746 = vmatpush1.bf16.msra.mxu0 0
        %1747 = vmatprep.subr.bf16.mxu0 0
        %1748 = vmatpush1.bf16.msra.mxu0 0
        %1749 = vmatprep.subr.bf16.mxu0 0
        %1750 = vmatpush1.bf16.msra.mxu0 0
        %1751 = vmatprep.subr.bf16.mxu0 0
        %1752 = vmatpush1.bf16.msra.mxu0 0
        %1753 = vmatprep.subr.bf16.mxu0 0
        %1754 = vmatpush1.bf16.msra.mxu0 0
        %1755 = vmatprep.mubr.bf16.mxu0 0
        %1756 = vmatmul.mubr.bf16.gmra.mrb[0].mxu0 %v1718
        %v1757 = vpop.f32.mrb[0].mxu0
        %v1758 = vadd.f32 0.0, %v1757
        %v1759 = vpop.f32.mrb[0].mxu0
        %v1760 = vpop.f32.mrb[0].mxu0
        %v1761 = vpop.f32.mrb[0].mxu0
        %1762 = vdwg.mxu0
        %1763 = vrot.lane.b32.xlu0 %v933, 32
        %v1764 = vpop.permute.xlu0 %1763
        %v1766 = vsel %vm1027, %v1714, 0
        %v1769 = vsel %vm1055, %v1764, 0
        %1771 = vmatprep.subr.bf16.mxu0 0
        %1772 = vmatpush1.bf16.msra.mxu0 %v1769
        %1773 = vmatprep.subr.bf16.mxu0 0
        %1774 = vmatpush1.bf16.msra.mxu0 0
        %1775 = vmatprep.subr.bf16.mxu0 0
        %1776 = vmatpush1.bf16.msra.mxu0 0
        %1777 = vmatprep.subr.bf16.mxu0 0
        %1778 = vmatpush1.bf16.msra.mxu0 0
        %1779 = vmatprep.subr.bf16.mxu0 0
        %1780 = vmatpush1.bf16.msra.mxu0 0
        %1781 = vmatprep.subr.bf16.mxu0 0
        %1782 = vmatpush1.bf16.msra.mxu0 0
        %1783 = vmatprep.subr.bf16.mxu0 0
        %1784 = vmatpush1.bf16.msra.mxu0 0
        %1785 = vmatprep.subr.bf16.mxu0 0
        %1786 = vmatpush1.bf16.msra.mxu0 0
        %1787 = vmatprep.subr.bf16.mxu0 0
        %1788 = vmatpush1.bf16.msra.mxu0 0
        %1789 = vmatprep.subr.bf16.mxu0 0
        %1790 = vmatpush1.bf16.msra.mxu0 0
        %1791 = vmatprep.subr.bf16.mxu0 0
        %1792 = vmatpush1.bf16.msra.mxu0 0
        %1793 = vmatprep.subr.bf16.mxu0 0
        %1794 = vmatpush1.bf16.msra.mxu0 0
        %1795 = vmatprep.subr.bf16.mxu0 0
        %1796 = vmatpush1.bf16.msra.mxu0 0
        %1797 = vmatprep.subr.bf16.mxu0 0
        %1798 = vmatpush1.bf16.msra.mxu0 0
        %1799 = vmatprep.subr.bf16.mxu0 0
        %1800 = vmatpush1.bf16.msra.mxu0 0
        %1801 = vmatprep.subr.bf16.mxu0 0
        %1802 = vmatpush1.bf16.msra.mxu0 0
        %1803 = vmatprep.mubr.bf16.mxu0 0
        %1804 = vmatmul.mubr.bf16.gmra.mrb[0].mxu0 %v1766
        %v1805 = vpop.f32.mrb[0].mxu0
        %v1806 = vadd.f32 0.0, %v1805
        %v1807 = vpop.f32.mrb[0].mxu0
        %v1808 = vpop.f32.mrb[0].mxu0
        %v1809 = vpop.f32.mrb[0].mxu0
        %1810 = vdwg.mxu0
        %1813 = vrot.lane.b32.xlu0 %v1317, 32
        %v1814 = vpop.permute.xlu0 %1813
        %1815 = vrot.lane.b32.xlu0 %v1366, 32
        %v1816 = vpop.permute.xlu0 %1815
        %1821 = vrot.lane.b32.xlu0 %v1538, 64
        %v1822 = vpop.permute.xlu0 %1821
        %1823 = vrot.lane.b32.xlu0 %v1586, 64
        %v1824 = vpop.permute.xlu0 %1823
        %1829 = vrot.lane.b32.xlu0 %v1758, 96
        %v1830 = vpop.permute.xlu0 %1829
        %1831 = vrot.lane.b32.xlu0 %v1806, 96
        %v1832 = vpop.permute.xlu0 %1831
        %v1835 = vsel %vm934, %v1094, %v1814
        %v1836 = vsel %vm934, %v1140, %v1816
        %vm1837 = vcmask 523264
        %v1838 = vsel %vm1837, %v1835, %v1822
        %v1839 = vsel %vm1837, %v1836, %v1824
        %vm1840 = vcmask 785408
        %v1841 = vsel %vm1840, %v1838, %v1830
        %v1842 = vsel %vm1840, %v1839, %v1832
        %v1843 = vpack.c.bf16 %v1842, %v1841
        %v1844 = vld [vmem:[%s617] sm:$0xf]
        %v1845 = vld [vmem:[%s617 + $0x4] sm:$0xf]
        %v1846 = vld [vmem:[%s617 + $0x8] sm:$0xf]
        %v1847 = vld [vmem:[%s617 + $0xc] sm:$0xf]
        %v1848 = vld [vmem:[%s617 + $0x10] sm:$0xf]
        %v1849 = vld [vmem:[%s617 + $0x14] sm:$0xf]
        %v1850 = vld [vmem:[%s617 + $0x18] sm:$0xf]
        %v1851 = vld [vmem:[%s617 + $0x1c] sm:$0xf]
        %v1852 = vld [vmem:[%s617 + $0x20] sm:$0xf]
        %v1853 = vld [vmem:[%s617 + $0x24] sm:$0xf]
        %v1854 = vld [vmem:[%s617 + $0x28] sm:$0xf]
        %v1855 = vld [vmem:[%s617 + $0x2c] sm:$0xf]
        %v1856 = vld [vmem:[%s617 + $0x30] sm:$0xf]
        %v1857 = vld [vmem:[%s617 + $0x34] sm:$0xf]
        %v1858 = vld [vmem:[%s617 + $0x38] sm:$0xf]
        %v1859 = vld [vmem:[%s617 + $0x3c] sm:$0xf]
        %v1860 = vld [vmem:[%s620] sm:$0x1]
        %v1862 = vlaneseq
        %v1863 = vshrl.u32 %v1862, 7
        %v1864 = vsub.s32 0, %v1863
        %v1865 = vrot.slane %v1860, %v1864
        %v1883 = vunpack.c.l.b16 %v1844
        %v1884 = vunpack.c.l.b16 %v1845
        %v1885 = vunpack.c.l.b16 %v1846
        %v1886 = vunpack.c.l.b16 %v1847
        %v1887 = vunpack.c.l.b16 %v1848
        %v1888 = vunpack.c.l.b16 %v1849
        %v1889 = vunpack.c.l.b16 %v1850
        %v1890 = vunpack.c.l.b16 %v1851
        %v1891 = vunpack.c.l.b16 %v1852
        %v1892 = vunpack.c.l.b16 %v1853
        %v1893 = vunpack.c.l.b16 %v1854
        %v1894 = vunpack.c.l.b16 %v1855
        %v1895 = vunpack.c.l.b16 %v1856
        %v1896 = vunpack.c.l.b16 %v1857
        %v1897 = vunpack.c.l.b16 %v1858
        %v1898 = vunpack.c.l.b16 %v1859
        %v1899 = vpack.c.b16 %v1884, %v1883
        %v1900 = vpack.c.b16 %v1886, %v1885
        %v1901 = vpack.c.b16 %v1888, %v1887
        %v1902 = vpack.c.b16 %v1890, %v1889
        %v1903 = vpack.c.b16 %v1892, %v1891
        %v1904 = vpack.c.b16 %v1894, %v1893
        %v1905 = vpack.c.b16 %v1896, %v1895
        %v1906 = vpack.c.b16 %v1898, %v1897
        %1915 = vmatprep.subr.bf16.mxu0 0
        %1916 = vmatpush1.bf16.msra.mxu0 %v1899
        %1917 = vmatprep.subr.bf16.mxu0 0
        %1918 = vmatpush1.bf16.msra.mxu0 %v1900
        %1919 = vmatprep.subr.bf16.mxu0 0
        %1920 = vmatpush1.bf16.msra.mxu0 %v1901
        %1921 = vmatprep.subr.bf16.mxu0 0
        %1922 = vmatpush1.bf16.msra.mxu0 %v1902
        %1923 = vmatprep.subr.bf16.mxu0 0
        %1924 = vmatpush1.bf16.msra.mxu0 %v1903
        %1925 = vmatprep.subr.bf16.mxu0 0
        %1926 = vmatpush1.bf16.msra.mxu0 %v1904
        %1927 = vmatprep.subr.bf16.mxu0 0
        %1928 = vmatpush1.bf16.msra.mxu0 %v1905
        %1929 = vmatprep.subr.bf16.mxu0 0
        %1930 = vmatpush1.bf16.msra.mxu0 %v1906
        %1931 = vmatprep.subr.bf16.mxu0 0
        %1932 = vmatpush1.bf16.msra.mxu0 0
        %1933 = vmatprep.subr.bf16.mxu0 0
        %1934 = vmatpush1.bf16.msra.mxu0 0
        %1935 = vmatprep.subr.bf16.mxu0 0
        %1936 = vmatpush1.bf16.msra.mxu0 0
        %1937 = vmatprep.subr.bf16.mxu0 0
        %1938 = vmatpush1.bf16.msra.mxu0 0
        %1939 = vmatprep.subr.bf16.mxu0 0
        %1940 = vmatpush1.bf16.msra.mxu0 0
        %1941 = vmatprep.subr.bf16.mxu0 0
        %1942 = vmatpush1.bf16.msra.mxu0 0
        %1943 = vmatprep.subr.bf16.mxu0 0
        %1944 = vmatpush1.bf16.msra.mxu0 0
        %1945 = vmatprep.subr.bf16.mxu0 0
        %1946 = vmatpush1.bf16.msra.mxu0 0
        %1947 = vmatprep.mubr.bf16.mxu0 0
        %1948 = vmatmul.mubr.bf16.gmra.mrb[0].mxu0 %v1843
        %v1949 = vpop.f32.mrb[0].mxu0
        %v1950 = vadd.f32 %v1865, %v1949
        %v1951 = vpop.f32.mrb[0].mxu0
        %v1952 = vpop.f32.mrb[0].mxu0
        %v1953 = vadd.f32 %v1865, %v1952
        %v1954 = vpop.f32.mrb[0].mxu0
        %1955 = vdwg.mxu0
        %v1956 = vadd.f32 %v640, %v1950
        %v1957 = vadd.f32 %v641, %v1953
        %v1958 = vld [vmem:[%s623] sm:$0x1]
        %v1959 = vmul.f32 %v1956, %v1956
        %v1960 = vmul.f32 %v1957, %v1957
        %1961 = vadd.xlane.f32.xlu0 %v1959
        %v1962 = vpop.xlane.xlu0 %1961
        %1963 = vadd.xlane.f32.xlu0 %v1960
        %v1964 = vpop.xlane.xlu0 %1963
        %v1965 = vmul.f32 %v1962, %v649
        %v1966 = vmul.f32 %v1964, %v649
        %v1967 = vadd.f32 %v1965, 1e-06
        %v1968 = vadd.f32 %v1966, 1e-06
        %v1969 = vrsqrt.pop %v1967
        %v1970 = vrsqrt.pop %v1968
        %v1971 = vmul.f32 %v1956, %v1969
        %v1972 = vmul.f32 %v1957, %v1970
        %v1974 = vlaneseq
        %v1975 = vshrl.u32 %v1974, 7
        %v1976 = vsub.s32 0, %v1975
        %v1977 = vrot.slane %v1958, %v1976
        %v1979 = vmul.f32 %v1971, %v1977
        %v1980 = vmul.f32 %v1972, %v1977
        %v1981 = vpack.c.bf16 %v1980, %v1979
        %v1982 = vld [vmem:[%s524] sm:$0xff]
        %v1983 = vld [vmem:[%s524 + $0x8] sm:$0xff]
        %v1984 = vld [vmem:[%s524 + $0x10] sm:$0xff]
        %v1985 = vld [vmem:[%s524 + $0x18] sm:$0xff]
        %v1986 = vld [vmem:[%s524 + $0x20] sm:$0xff]
        %v1987 = vld [vmem:[%s524 + $0x28] sm:$0xff]
        %v1988 = vld [vmem:[%s524 + $0x30] sm:$0xff]
        %v1989 = vld [vmem:[%s524 + $0x38] sm:$0xff]
        %v1990 = vld [vmem:[%s524 + $0x40] sm:$0xff]
        %v1991 = vld [vmem:[%s524 + $0x48] sm:$0xff]
        %v1992 = vld [vmem:[%s524 + $0x50] sm:$0xff]
        %v1993 = vld [vmem:[%s524 + $0x58] sm:$0xff]
        %v1994 = vld [vmem:[%s524 + $0x60] sm:$0xff]
        %v1995 = vld [vmem:[%s524 + $0x68] sm:$0xff]
        %v1996 = vld [vmem:[%s524 + $0x70] sm:$0xff]
        %v1997 = vld [vmem:[%s524 + $0x78] sm:$0xff]
        %v1998 = vld [vmem:[%s524 + $0x80] sm:$0xff]
        %v1999 = vld [vmem:[%s524 + $0x88] sm:$0xff]
        %v2000 = vld [vmem:[%s524 + $0x90] sm:$0xff]
        %v2001 = vld [vmem:[%s524 + $0x98] sm:$0xff]
        %v2002 = vld [vmem:[%s524 + $0xa0] sm:$0xff]
        %v2003 = vld [vmem:[%s524 + $0xa8] sm:$0xff]
        %v2004 = vld [vmem:[%s524 + $0xb0] sm:$0xff]
        %v2005 = vld [vmem:[%s524 + $0xb8] sm:$0xff]
        %v2006 = vld [vmem:[%s524 + $0xc0] sm:$0xff]
        %v2007 = vld [vmem:[%s524 + $0xc8] sm:$0xff]
        %v2008 = vld [vmem:[%s524 + $0xd0] sm:$0xff]
        %v2009 = vld [vmem:[%s524 + $0xd8] sm:$0xff]
        %v2010 = vld [vmem:[%s524 + $0xe0] sm:$0xff]
        %v2011 = vld [vmem:[%s524 + $0xe8] sm:$0xff]
        %v2012 = vld [vmem:[%s524 + $0xf0] sm:$0xff]
        %v2013 = vld [vmem:[%s524 + $0xf8] sm:$0xff]
        %v2014 = vld [vmem:[%s627] sm:$0xf]
        %v2016 = vlaneseq
        %v2017 = vshrl.u32 %v2016, 7
        %v2018 = vsub.s32 0, %v2017
        %v2019 = vrot.slane %v2014, %v2018
        %v2020 = vlaneseq
        %v2021 = vshrl.u32 %v2020, 7
        %v2022 = vsub.s32 1, %v2021
        %v2023 = vrot.slane %v2014, %v2022
        %v2024 = vlaneseq
        %v2025 = vshrl.u32 %v2024, 7
        %v2026 = vsub.s32 2, %v2025
        %v2027 = vrot.slane %v2014, %v2026
        %v2028 = vlaneseq
        %v2029 = vshrl.u32 %v2028, 7
        %v2030 = vsub.s32 3, %v2029
        %v2031 = vrot.slane %v2014, %v2030
        %v2068 = vunpack.c.l.b16 %v1982
        %v2069 = vunpack.c.h.b16 %v1982
        %v2070 = vunpack.c.l.b16 %v1983
        %v2071 = vunpack.c.h.b16 %v1983
        %v2072 = vunpack.c.l.b16 %v1984
        %v2073 = vunpack.c.h.b16 %v1984
        %v2074 = vunpack.c.l.b16 %v1985
        %v2075 = vunpack.c.h.b16 %v1985
        %v2076 = vunpack.c.l.b16 %v1986
        %v2077 = vunpack.c.h.b16 %v1986
        %v2078 = vunpack.c.l.b16 %v1987
        %v2079 = vunpack.c.h.b16 %v1987
        %v2080 = vunpack.c.l.b16 %v1988
        %v2081 = vunpack.c.h.b16 %v1988
        %v2082 = vunpack.c.l.b16 %v1989
        %v2083 = vunpack.c.h.b16 %v1989
        %v2084 = vunpack.c.l.b16 %v1990
        %v2085 = vunpack.c.h.b16 %v1990
        %v2086 = vunpack.c.l.b16 %v1991
        %v2087 = vunpack.c.h.b16 %v1991
        %v2088 = vunpack.c.l.b16 %v1992
        %v2089 = vunpack.c.h.b16 %v1992
        %v2090 = vunpack.c.l.b16 %v1993
        %v2091 = vunpack.c.h.b16 %v1993
        %v2092 = vunpack.c.l.b16 %v1994
        %v2093 = vunpack.c.h.b16 %v1994
        %v2094 = vunpack.c.l.b16 %v1995
        %v2095 = vunpack.c.h.b16 %v1995
        %v2096 = vunpack.c.l.b16 %v1996
        %v2097 = vunpack.c.h.b16 %v1996
        %v2098 = vunpack.c.l.b16 %v1997
        %v2099 = vunpack.c.h.b16 %v1997
        %v2100 = vunpack.c.l.b16 %v1998
        %v2101 = vunpack.c.h.b16 %v1998
        %v2102 = vunpack.c.l.b16 %v1999
        %v2103 = vunpack.c.h.b16 %v1999
        %v2104 = vunpack.c.l.b16 %v2000
        %v2105 = vunpack.c.h.b16 %v2000
        %v2106 = vunpack.c.l.b16 %v2001
        %v2107 = vunpack.c.h.b16 %v2001
        %v2108 = vunpack.c.l.b16 %v2002
        %v2109 = vunpack.c.h.b16 %v2002
        %v2110 = vunpack.c.l.b16 %v2003
        %v2111 = vunpack.c.h.b16 %v2003
        %v2112 = vunpack.c.l.b16 %v2004
        %v2113 = vunpack.c.h.b16 %v2004
        %v2114 = vunpack.c.l.b16 %v2005
        %v2115 = vunpack.c.h.b16 %v2005
        %v2116 = vunpack.c.l.b16 %v2006
        %v2117 = vunpack.c.h.b16 %v2006
        %v2118 = vunpack.c.l.b16 %v2007
        %v2119 = vunpack.c.h.b16 %v2007
        %v2120 = vunpack.c.l.b16 %v2008
        %v2121 = vunpack.c.h.b16 %v2008
        %v2122 = vunpack.c.l.b16 %v2009
        %v2123 = vunpack.c.h.b16 %v2009
        %v2124 = vunpack.c.l.b16 %v2010
        %v2125 = vunpack.c.h.b16 %v2010
        %v2126 = vunpack.c.l.b16 %v2011
        %v2127 = vunpack.c.h.b16 %v2011
        %v2128 = vunpack.c.l.b16 %v2012
        %v2129 = vunpack.c.h.b16 %v2012
        %v2130 = vunpack.c.l.b16 %v2013
        %v2131 = vunpack.c.h.b16 %v2013
        %v2132 = vpack.c.b16 %v2072, %v2068
        %v2133 = vpack.c.b16 %v2073, %v2069
        %v2134 = vpack.c.b16 %v2074, %v2070
        %v2135 = vpack.c.b16 %v2075, %v2071
        %v2136 = vpack.c.b16 %v2080, %v2076
        %v2137 = vpack.c.b16 %v2081, %v2077
        %v2138 = vpack.c.b16 %v2082, %v2078
        %v2139 = vpack.c.b16 %v2083, %v2079
        %v2140 = vpack.c.b16 %v2088, %v2084
        %v2141 = vpack.c.b16 %v2089, %v2085
        %v2142 = vpack.c.b16 %v2090, %v2086
        %v2143 = vpack.c.b16 %v2091, %v2087
        %v2144 = vpack.c.b16 %v2096, %v2092
        %v2145 = vpack.c.b16 %v2097, %v2093
        %v2146 = vpack.c.b16 %v2098, %v2094
        %v2147 = vpack.c.b16 %v2099, %v2095
        %v2148 = vpack.c.b16 %v2104, %v2100
        %v2149 = vpack.c.b16 %v2105, %v2101
        %v2150 = vpack.c.b16 %v2106, %v2102
        %v2151 = vpack.c.b16 %v2107, %v2103
        %v2152 = vpack.c.b16 %v2112, %v2108
        %v2153 = vpack.c.b16 %v2113, %v2109
        %v2154 = vpack.c.b16 %v2114, %v2110
        %v2155 = vpack.c.b16 %v2115, %v2111
        %v2156 = vpack.c.b16 %v2120, %v2116
        %v2157 = vpack.c.b16 %v2121, %v2117
        %v2158 = vpack.c.b16 %v2122, %v2118
        %v2159 = vpack.c.b16 %v2123, %v2119
        %v2160 = vpack.c.b16 %v2128, %v2124
        %v2161 = vpack.c.b16 %v2129, %v2125
        %v2162 = vpack.c.b16 %v2130, %v2126
        %v2163 = vpack.c.b16 %v2131, %v2127
        %2196 = vmatprep.subr.bf16.mxu0 %v2133
        %2197 = vmatpush1.bf16.msra.mxu0 %v2132
        %2198 = vmatprep.subr.bf16.mxu0 %v2137
        %2199 = vmatpush1.bf16.msra.mxu0 %v2136
        %2200 = vmatprep.subr.bf16.mxu0 %v2141
        %2201 = vmatpush1.bf16.msra.mxu0 %v2140
        %2202 = vmatprep.subr.bf16.mxu0 %v2145
        %2203 = vmatpush1.bf16.msra.mxu0 %v2144
        %2204 = vmatprep.subr.bf16.mxu0 %v2149
        %2205 = vmatpush1.bf16.msra.mxu0 %v2148
        %2206 = vmatprep.subr.bf16.mxu0 %v2153
        %2207 = vmatpush1.bf16.msra.mxu0 %v2152
        %2208 = vmatprep.subr.bf16.mxu0 %v2157
        %2209 = vmatpush1.bf16.msra.mxu0 %v2156
        %2210 = vmatprep.subr.bf16.mxu0 %v2161
        %2211 = vmatpush1.bf16.msra.mxu0 %v2160
        %2212 = vmatprep.subr.bf16.mxu0 0
        %2213 = vmatpush1.bf16.msra.mxu0 0
        %2214 = vmatprep.subr.bf16.mxu0 0
        %2215 = vmatpush1.bf16.msra.mxu0 0
        %2216 = vmatprep.subr.bf16.mxu0 0
        %2217 = vmatpush1.bf16.msra.mxu0 0
        %2218 = vmatprep.subr.bf16.mxu0 0
        %2219 = vmatpush1.bf16.msra.mxu0 0
        %2220 = vmatprep.subr.bf16.mxu0 0
        %2221 = vmatpush1.bf16.msra.mxu0 0
        %2222 = vmatprep.subr.bf16.mxu0 0
        %2223 = vmatpush1.bf16.msra.mxu0 0
        %2224 = vmatprep.subr.bf16.mxu0 0
        %2225 = vmatpush1.bf16.msra.mxu0 0
        %2226 = vmatprep.subr.bf16.mxu0 0
        %2227 = vmatpush1.bf16.msra.mxu0 0
        %2228 = vmatprep.mubr.bf16.mxu0 0
        %2229 = vmatmul.mubr.bf16.gmra.mrb[0].mxu0 %v1981
        %v2230 = vpop.f32.mrb[0].mxu0
        %v2231 = vadd.f32 %v2019, %v2230
        %v2232 = vpop.f32.mrb[0].mxu0
        %v2233 = vadd.f32 %v2023, %v2232
        %v2234 = vpop.f32.mrb[0].mxu0
        %v2235 = vadd.f32 %v2019, %v2234
        %v2236 = vpop.f32.mrb[0].mxu0
        %v2237 = vadd.f32 %v2023, %v2236
        %2238 = vdwg.mxu0
        %2239 = vmatprep.subr.bf16.mxu0 %v2135
        %2240 = vmatpush1.bf16.msra.mxu0 %v2134
        %2241 = vmatprep.subr.bf16.mxu0 %v2139
        %2242 = vmatpush1.bf16.msra.mxu0 %v2138
        %2243 = vmatprep.subr.bf16.mxu0 %v2143
        %2244 = vmatpush1.bf16.msra.mxu0 %v2142
        %2245 = vmatprep.subr.bf16.mxu0 %v2147
        %2246 = vmatpush1.bf16.msra.mxu0 %v2146
        %2247 = vmatprep.subr.bf16.mxu0 %v2151
        %2248 = vmatpush1.bf16.msra.mxu0 %v2150
        %2249 = vmatprep.subr.bf16.mxu0 %v2155
        %2250 = vmatpush1.bf16.msra.mxu0 %v2154
        %2251 = vmatprep.subr.bf16.mxu0 %v2159
        %2252 = vmatpush1.bf16.msra.mxu0 %v2158
        %2253 = vmatprep.subr.bf16.mxu0 %v2163
        %2254 = vmatpush1.bf16.msra.mxu0 %v2162
        %2255 = vmatprep.subr.bf16.mxu0 0
        %2256 = vmatpush1.bf16.msra.mxu0 0
        %2257 = vmatprep.subr.bf16.mxu0 0
        %2258 = vmatpush1.bf16.msra.mxu0 0
        %2259 = vmatprep.subr.bf16.mxu0 0
        %2260 = vmatpush1.bf16.msra.mxu0 0
        %2261 = vmatprep.subr.bf16.mxu0 0
        %2262 = vmatpush1.bf16.msra.mxu0 0
        %2263 = vmatprep.subr.bf16.mxu0 0
        %2264 = vmatpush1.bf16.msra.mxu0 0
        %2265 = vmatprep.subr.bf16.mxu0 0
        %2266 = vmatpush1.bf16.msra.mxu0 0
        %2267 = vmatprep.subr.bf16.mxu0 0
        %2268 = vmatpush1.bf16.msra.mxu0 0
        %2269 = vmatprep.subr.bf16.mxu0 0
        %2270 = vmatpush1.bf16.msra.mxu0 0
        %2271 = vmatprep.mubr.bf16.mxu0 0
        %2272 = vmatmul.mubr.bf16.gmra.mrb[0].mxu0 %v1981
        %v2273 = vpop.f32.mrb[0].mxu0
        %v2274 = vadd.f32 %v2027, %v2273
        %v2275 = vpop.f32.mrb[0].mxu0
        %v2276 = vadd.f32 %v2031, %v2275
        %v2277 = vpop.f32.mrb[0].mxu0
        %v2278 = vadd.f32 %v2027, %v2277
        %v2279 = vpop.f32.mrb[0].mxu0
        %v2280 = vadd.f32 %v2031, %v2279
        %2281 = vdwg.mxu0
        %v2282 = vmul.f32 %v2231, %v2231
        %v2283 = vmul.f32 %v2233, %v2233
        %v2284 = vmul.f32 %v2274, %v2274
        %v2285 = vmul.f32 %v2276, %v2276
        %v2286 = vmul.f32 %v2235, %v2235
        %v2287 = vmul.f32 %v2237, %v2237
        %v2288 = vmul.f32 %v2278, %v2278
        %v2289 = vmul.f32 %v2280, %v2280
        %v2290 = vmul.f32 %v2231, %v2282
        %v2291 = vmul.f32 %v2233, %v2283
        %v2292 = vmul.f32 %v2274, %v2284
        %v2293 = vmul.f32 %v2276, %v2285
        %v2294 = vmul.f32 %v2235, %v2286
        %v2295 = vmul.f32 %v2237, %v2287
        %v2296 = vmul.f32 %v2278, %v2288
        %v2297 = vmul.f32 %v2280, %v2289
        %v2298 = vmul.f32 %v2290, 0.044715
        %v2299 = vmul.f32 %v2291, 0.044715
        %v2300 = vmul.f32 %v2292, 0.044715
        %v2301 = vmul.f32 %v2293, 0.044715
        %v2302 = vmul.f32 %v2294, 0.044715
        %v2303 = vmul.f32 %v2295, 0.044715
        %v2304 = vmul.f32 %v2296, 0.044715
        %v2305 = vmul.f32 %v2297, 0.044715
        %v2306 = vadd.f32 %v2231, %v2298
        %v2307 = vadd.f32 %v2233, %v2299
        %v2308 = vadd.f32 %v2274, %v2300
        %v2309 = vadd.f32 %v2276, %v2301
        %v2310 = vadd.f32 %v2235, %v2302
        %v2311 = vadd.f32 %v2237, %v2303
        %v2312 = vadd.f32 %v2278, %v2304
        %v2313 = vadd.f32 %v2280, %v2305
        %v2314 = vmul.f32 %v2306, 0.7978846
        %v2315 = vmul.f32 %v2307, 0.7978846
        %v2316 = vmul.f32 %v2308, 0.7978846
        %v2317 = vmul.f32 %v2309, 0.7978846
        %v2318 = vmul.f32 %v2310, 0.7978846
        %v2319 = vmul.f32 %v2311, 0.7978846
        %v2320 = vmul.f32 %v2312, 0.7978846
        %v2321 = vmul.f32 %v2313, 0.7978846
        %v2322 = vtanh.pop %v2314
        %v2323 = vtanh.pop %v2315
        %v2324 = vtanh.pop %v2316
        %v2325 = vtanh.pop %v2317
        %v2326 = vtanh.pop %v2318
        %v2327 = vtanh.pop %v2319
        %v2328 = vtanh.pop %v2320
        %v2329 = vtanh.pop %v2321
        %v2330 = vadd.f32 %v2322, 1.0
        %v2331 = vadd.f32 %v2323, 1.0
        %v2332 = vadd.f32 %v2324, 1.0
        %v2333 = vadd.f32 %v2325, 1.0
        %v2334 = vadd.f32 %v2326, 1.0
        %v2335 = vadd.f32 %v2327, 1.0
        %v2336 = vadd.f32 %v2328, 1.0
        %v2337 = vadd.f32 %v2329, 1.0
        %v2338 = vmul.f32 %v2330, 0.5
        %v2339 = vmul.f32 %v2331, 0.5
        %v2340 = vmul.f32 %v2332, 0.5
        %v2341 = vmul.f32 %v2333, 0.5
        %v2342 = vmul.f32 %v2334, 0.5
        %v2343 = vmul.f32 %v2335, 0.5
        %v2344 = vmul.f32 %v2336, 0.5
        %v2345 = vmul.f32 %v2337, 0.5
        %v2346 = vmul.f32 %v2231, %v2338
        %v2347 = vmul.f32 %v2233, %v2339
        %v2348 = vmul.f32 %v2274, %v2340
        %v2349 = vmul.f32 %v2276, %v2341
        %v2350 = vmul.f32 %v2235, %v2342
        %v2351 = vmul.f32 %v2237, %v2343
        %v2352 = vmul.f32 %v2278, %v2344
        %v2353 = vmul.f32 %v2280, %v2345
        %v2354 = vpack.c.bf16 %v2350, %v2346
        %v2355 = vpack.c.bf16 %v2351, %v2347
        %v2356 = vpack.c.bf16 %v2352, %v2348
        %v2357 = vpack.c.bf16 %v2353, %v2349
        %v2358 = vld [vmem:[%s533] sm:$0xf]
        %v2359 = vld [vmem:[%s533 + $0x4] sm:$0xf]
        %v2360 = vld [vmem:[%s533 + $0x8] sm:$0xf]
        %v2361 = vld [vmem:[%s533 + $0xc] sm:$0xf]
        %v2362 = vld [vmem:[%s533 + $0x10] sm:$0xf]
        %v2363 = vld [vmem:[%s533 + $0x14] sm:$0xf]
        %v2364 = vld [vmem:[%s533 + $0x18] sm:$0xf]
        %v2365 = vld [vmem:[%s533 + $0x1c] sm:$0xf]
        %v2366 = vld [vmem:[%s533 + $0x20] sm:$0xf]
        %v2367 = vld [vmem:[%s533 + $0x24] sm:$0xf]
        %v2368 = vld [vmem:[%s533 + $0x28] sm:$0xf]
        %v2369 = vld [vmem:[%s533 + $0x2c] sm:$0xf]
        %v2370 = vld [vmem:[%s533 + $0x30] sm:$0xf]
        %v2371 = vld [vmem:[%s533 + $0x34] sm:$0xf]
        %v2372 = vld [vmem:[%s533 + $0x38] sm:$0xf]
        %v2373 = vld [vmem:[%s533 + $0x3c] sm:$0xf]
        %v2374 = vld [vmem:[%s533 + $0x40] sm:$0xf]
        %v2375 = vld [vmem:[%s533 + $0x44] sm:$0xf]
        %v2376 = vld [vmem:[%s533 + $0x48] sm:$0xf]
        %v2377 = vld [vmem:[%s533 + $0x4c] sm:$0xf]
        %v2378 = vld [vmem:[%s533 + $0x50] sm:$0xf]
        %v2379 = vld [vmem:[%s533 + $0x54] sm:$0xf]
        %v2380 = vld [vmem:[%s533 + $0x58] sm:$0xf]
        %v2381 = vld [vmem:[%s533 + $0x5c] sm:$0xf]
        %v2382 = vld [vmem:[%s533 + $0x60] sm:$0xf]
        %v2383 = vld [vmem:[%s533 + $0x64] sm:$0xf]
        %v2384 = vld [vmem:[%s533 + $0x68] sm:$0xf]
        %v2385 = vld [vmem:[%s533 + $0x6c] sm:$0xf]
        %v2386 = vld [vmem:[%s533 + $0x70] sm:$0xf]
        %v2387 = vld [vmem:[%s533 + $0x74] sm:$0xf]
        %v2388 = vld [vmem:[%s533 + $0x78] sm:$0xf]
        %v2389 = vld [vmem:[%s533 + $0x7c] sm:$0xf]
        %v2390 = vld [vmem:[%s533 + $0x80] sm:$0xf]
        %v2391 = vld [vmem:[%s533 + $0x84] sm:$0xf]
        %v2392 = vld [vmem:[%s533 + $0x88] sm:$0xf]
        %v2393 = vld [vmem:[%s533 + $0x8c] sm:$0xf]
        %v2394 = vld [vmem:[%s533 + $0x90] sm:$0xf]
        %v2395 = vld [vmem:[%s533 + $0x94] sm:$0xf]
        %v2396 = vld [vmem:[%s533 + $0x98] sm:$0xf]
        %v2397 = vld [vmem:[%s533 + $0x9c] sm:$0xf]
        %v2398 = vld [vmem:[%s533 + $0xa0] sm:$0xf]
        %v2399 = vld [vmem:[%s533 + $0xa4] sm:$0xf]
        %v2400 = vld [vmem:[%s533 + $0xa8] sm:$0xf]
        %v2401 = vld [vmem:[%s533 + $0xac] sm:$0xf]
        %v2402 = vld [vmem:[%s533 + $0xb0] sm:$0xf]
        %v2403 = vld [vmem:[%s533 + $0xb4] sm:$0xf]
        %v2404 = vld [vmem:[%s533 + $0xb8] sm:$0xf]
        %v2405 = vld [vmem:[%s533 + $0xbc] sm:$0xf]
        %v2406 = vld [vmem:[%s533 + $0xc0] sm:$0xf]
        %v2407 = vld [vmem:[%s533 + $0xc4] sm:$0xf]
        %v2408 = vld [vmem:[%s533 + $0xc8] sm:$0xf]
        %v2409 = vld [vmem:[%s533 + $0xcc] sm:$0xf]
        %v2410 = vld [vmem:[%s533 + $0xd0] sm:$0xf]
        %v2411 = vld [vmem:[%s533 + $0xd4] sm:$0xf]
        %v2412 = vld [vmem:[%s533 + $0xd8] sm:$0xf]
        %v2413 = vld [vmem:[%s533 + $0xdc] sm:$0xf]
        %v2414 = vld [vmem:[%s533 + $0xe0] sm:$0xf]
        %v2415 = vld [vmem:[%s533 + $0xe4] sm:$0xf]
        %v2416 = vld [vmem:[%s533 + $0xe8] sm:$0xf]
        %v2417 = vld [vmem:[%s533 + $0xec] sm:$0xf]
        %v2418 = vld [vmem:[%s533 + $0xf0] sm:$0xf]
        %v2419 = vld [vmem:[%s533 + $0xf4] sm:$0xf]
        %v2420 = vld [vmem:[%s533 + $0xf8] sm:$0xf]
        %v2421 = vld [vmem:[%s533 + $0xfc] sm:$0xf]
        %v2422 = vld [vmem:[%s630] sm:$0x1]
        %v2424 = vlaneseq
        %v2425 = vshrl.u32 %v2424, 7
        %v2426 = vsub.s32 0, %v2425
        %v2427 = vrot.slane %v2422, %v2426
        %v2493 = vunpack.c.l.b16 %v2358
        %v2494 = vunpack.c.l.b16 %v2359
        %v2495 = vunpack.c.l.b16 %v2360
        %v2496 = vunpack.c.l.b16 %v2361
        %v2497 = vunpack.c.l.b16 %v2362
        %v2498 = vunpack.c.l.b16 %v2363
        %v2499 = vunpack.c.l.b16 %v2364
        %v2500 = vunpack.c.l.b16 %v2365
        %v2501 = vunpack.c.l.b16 %v2366
        %v2502 = vunpack.c.l.b16 %v2367
        %v2503 = vunpack.c.l.b16 %v2368
        %v2504 = vunpack.c.l.b16 %v2369
        %v2505 = vunpack.c.l.b16 %v2370
        %v2506 = vunpack.c.l.b16 %v2371
        %v2507 = vunpack.c.l.b16 %v2372
        %v2508 = vunpack.c.l.b16 %v2373
        %v2509 = vunpack.c.l.b16 %v2374
        %v2510 = vunpack.c.l.b16 %v2375
        %v2511 = vunpack.c.l.b16 %v2376
        %v2512 = vunpack.c.l.b16 %v2377
        %v2513 = vunpack.c.l.b16 %v2378
        %v2514 = vunpack.c.l.b16 %v2379
        %v2515 = vunpack.c.l.b16 %v2380
        %v2516 = vunpack.c.l.b16 %v2381
        %v2517 = vunpack.c.l.b16 %v2382
        %v2518 = vunpack.c.l.b16 %v2383
        %v2519 = vunpack.c.l.b16 %v2384
        %v2520 = vunpack.c.l.b16 %v2385
        %v2521 = vunpack.c.l.b16 %v2386
        %v2522 = vunpack.c.l.b16 %v2387
        %v2523 = vunpack.c.l.b16 %v2388
        %v2524 = vunpack.c.l.b16 %v2389
        %v2525 = vunpack.c.l.b16 %v2390
        %v2526 = vunpack.c.l.b16 %v2391
        %v2527 = vunpack.c.l.b16 %v2392
        %v2528 = vunpack.c.l.b16 %v2393
        %v2529 = vunpack.c.l.b16 %v2394
        %v2530 = vunpack.c.l.b16 %v2395
        %v2531 = vunpack.c.l.b16 %v2396
        %v2532 = vunpack.c.l.b16 %v2397
        %v2533 = vunpack.c.l.b16 %v2398
        %v2534 = vunpack.c.l.b16 %v2399
        %v2535 = vunpack.c.l.b16 %v2400
        %v2536 = vunpack.c.l.b16 %v2401
        %v2537 = vunpack.c.l.b16 %v2402
        %v2538 = vunpack.c.l.b16 %v2403
        %v2539 = vunpack.c.l.b16 %v2404
        %v2540 = vunpack.c.l.b16 %v2405
        %v2541 = vunpack.c.l.b16 %v2406
        %v2542 = vunpack.c.l.b16 %v2407
        %v2543 = vunpack.c.l.b16 %v2408
        %v2544 = vunpack.c.l.b16 %v2409
        %v2545 = vunpack.c.l.b16 %v2410
        %v2546 = vunpack.c.l.b16 %v2411
        %v2547 = vunpack.c.l.b16 %v2412
        %v2548 = vunpack.c.l.b16 %v2413
        %v2549 = vunpack.c.l.b16 %v2414
        %v2550 = vunpack.c.l.b16 %v2415
        %v2551 = vunpack.c.l.b16 %v2416
        %v2552 = vunpack.c.l.b16 %v2417
        %v2553 = vunpack.c.l.b16 %v2418
        %v2554 = vunpack.c.l.b16 %v2419
        %v2555 = vunpack.c.l.b16 %v2420
        %v2556 = vunpack.c.l.b16 %v2421
        %v2557 = vpack.c.b16 %v2494, %v2493
        %v2558 = vpack.c.b16 %v2496, %v2495
        %v2559 = vpack.c.b16 %v2498, %v2497
        %v2560 = vpack.c.b16 %v2500, %v2499
        %v2561 = vpack.c.b16 %v2502, %v2501
        %v2562 = vpack.c.b16 %v2504, %v2503
        %v2563 = vpack.c.b16 %v2506, %v2505
        %v2564 = vpack.c.b16 %v2508, %v2507
        %v2565 = vpack.c.b16 %v2510, %v2509
        %v2566 = vpack.c.b16 %v2512, %v2511
        %v2567 = vpack.c.b16 %v2514, %v2513
        %v2568 = vpack.c.b16 %v2516, %v2515
        %v2569 = vpack.c.b16 %v2518, %v2517
        %v2570 = vpack.c.b16 %v2520, %v2519
        %v2571 = vpack.c.b16 %v2522, %v2521
        %v2572 = vpack.c.b16 %v2524, %v2523
        %v2573 = vpack.c.b16 %v2526, %v2525
        %v2574 = vpack.c.b16 %v2528, %v2527
        %v2575 = vpack.c.b16 %v2530, %v2529
        %v2576 = vpack.c.b16 %v2532, %v2531
        %v2577 = vpack.c.b16 %v2534, %v2533
        %v2578 = vpack.c.b16 %v2536, %v2535
        %v2579 = vpack.c.b16 %v2538, %v2537
        %v2580 = vpack.c.b16 %v2540, %v2539
        %v2581 = vpack.c.b16 %v2542, %v2541
        %v2582 = vpack.c.b16 %v2544, %v2543
        %v2583 = vpack.c.b16 %v2546, %v2545
        %v2584 = vpack.c.b16 %v2548, %v2547
        %v2585 = vpack.c.b16 %v2550, %v2549
        %v2586 = vpack.c.b16 %v2552, %v2551
        %v2587 = vpack.c.b16 %v2554, %v2553
        %v2588 = vpack.c.b16 %v2556, %v2555
        %2621 = vmatprep.subr.bf16.mxu0 0
        %2622 = vmatpush1.bf16.msra.mxu0 %v2557
        %2623 = vmatprep.subr.bf16.mxu0 0
        %2624 = vmatpush1.bf16.msra.mxu0 %v2558
        %2625 = vmatprep.subr.bf16.mxu0 0
        %2626 = vmatpush1.bf16.msra.mxu0 %v2559
        %2627 = vmatprep.subr.bf16.mxu0 0
        %2628 = vmatpush1.bf16.msra.mxu0 %v2560
        %2629 = vmatprep.subr.bf16.mxu0 0
        %2630 = vmatpush1.bf16.msra.mxu0 %v2561
        %2631 = vmatprep.subr.bf16.mxu0 0
        %2632 = vmatpush1.bf16.msra.mxu0 %v2562
        %2633 = vmatprep.subr.bf16.mxu0 0
        %2634 = vmatpush1.bf16.msra.mxu0 %v2563
        %2635 = vmatprep.subr.bf16.mxu0 0
        %2636 = vmatpush1.bf16.msra.mxu0 %v2564
        %2637 = vmatprep.subr.bf16.mxu0 0
        %2638 = vmatpush1.bf16.msra.mxu0 %v2565
        %2639 = vmatprep.subr.bf16.mxu0 0
        %2640 = vmatpush1.bf16.msra.mxu0 %v2566
        %2641 = vmatprep.subr.bf16.mxu0 0
        %2642 = vmatpush1.bf16.msra.mxu0 %v2567
        %2643 = vmatprep.subr.bf16.mxu0 0
        %2644 = vmatpush1.bf16.msra.mxu0 %v2568
        %2645 = vmatprep.subr.bf16.mxu0 0
        %2646 = vmatpush1.bf16.msra.mxu0 %v2569
        %2647 = vmatprep.subr.bf16.mxu0 0
        %2648 = vmatpush1.bf16.msra.mxu0 %v2570
        %2649 = vmatprep.subr.bf16.mxu0 0
        %2650 = vmatpush1.bf16.msra.mxu0 %v2571
        %2651 = vmatprep.subr.bf16.mxu0 0
        %2652 = vmatpush1.bf16.msra.mxu0 %v2572
        %2653 = vmatprep.mubr.bf16.mxu0 %v2355
        %2654 = vmatmul.mubr.bf16.gmra.mrb[0].mxu0 %v2354
        %v2655 = vpop.f32.mrb[0].mxu0
        %v2656 = vadd.f32 %v2427, %v2655
        %v2657 = vpop.f32.mrb[0].mxu0
        %v2658 = vpop.f32.mrb[0].mxu0
        %v2659 = vadd.f32 %v2427, %v2658
        %v2660 = vpop.f32.mrb[0].mxu0
        %2661 = vdwg.mxu0
        %2662 = vmatprep.subr.bf16.mxu0 0
        %2663 = vmatpush1.bf16.msra.mxu0 %v2573
        %2664 = vmatprep.subr.bf16.mxu0 0
        %2665 = vmatpush1.bf16.msra.mxu0 %v2574
        %2666 = vmatprep.subr.bf16.mxu0 0
        %2667 = vmatpush1.bf16.msra.mxu0 %v2575
        %2668 = vmatprep.subr.bf16.mxu0 0
        %2669 = vmatpush1.bf16.msra.mxu0 %v2576
        %2670 = vmatprep.subr.bf16.mxu0 0
        %2671 = vmatpush1.bf16.msra.mxu0 %v2577
        %2672 = vmatprep.subr.bf16.mxu0 0
        %2673 = vmatpush1.bf16.msra.mxu0 %v2578
        %2674 = vmatprep.subr.bf16.mxu0 0
        %2675 = vmatpush1.bf16.msra.mxu0 %v2579
        %2676 = vmatprep.subr.bf16.mxu0 0
        %2677 = vmatpush1.bf16.msra.mxu0 %v2580
        %2678 = vmatprep.subr.bf16.mxu0 0
        %2679 = vmatpush1.bf16.msra.mxu0 %v2581
        %2680 = vmatprep.subr.bf16.mxu0 0
        %2681 = vmatpush1.bf16.msra.mxu0 %v2582
        %2682 = vmatprep.subr.bf16.mxu0 0
        %2683 = vmatpush1.bf16.msra.mxu0 %v2583
        %2684 = vmatprep.subr.bf16.mxu0 0
        %2685 = vmatpush1.bf16.msra.mxu0 %v2584
        %2686 = vmatprep.subr.bf16.mxu0 0
        %2687 = vmatpush1.bf16.msra.mxu0 %v2585
        %2688 = vmatprep.subr.bf16.mxu0 0
        %2689 = vmatpush1.bf16.msra.mxu0 %v2586
        %2690 = vmatprep.subr.bf16.mxu0 0
        %2691 = vmatpush1.bf16.msra.mxu0 %v2587
        %2692 = vmatprep.subr.bf16.mxu0 0
        %2693 = vmatpush1.bf16.msra.mxu0 %v2588
        %2694 = vmatprep.mubr.bf16.mxu0 %v2357
        %2695 = vmatmul.mubr.bf16.gmra.mrb[0].mxu0 %v2356
        %v2696 = vpop.f32.mrb[0].mxu0
        %v2697 = vadd.f32 %v2656, %v2696
        %v2698 = vpop.f32.mrb[0].mxu0
        %v2699 = vpop.f32.mrb[0].mxu0
        %v2700 = vadd.f32 %v2659, %v2699
        %v2701 = vpop.f32.mrb[0].mxu0
        %2702 = vdwg.mxu0
        %v2703 = vadd.f32 %v1956, %v2697
        %v2704 = vadd.f32 %v1957, %v2700
        %2705 = vst [vmem:[%s12] sm:$0xff] %v2703
        %2706 = vst [vmem:[%s12 + $0x8] sm:$0xff] %v2704
        %p2707 = scmp.eq.s32.totalorder %s31, 1
        // Predicated region
        $region85: #{qwen25vl_forward.2} parent=67 // pred_check
          %p2708 = pneg %p2707
        $region86: #{qwen25vl_forward.2} parent=67 // pred_check_branch
          %2710 = sbr.rel (%p2708) target = $region88
        $region87: #{qwen25vl_forward.2} parent=67 // pred_region
          %v2711 = vld [vmem:[%s11] sm:$0x1]
          %v2712 = vmul.f32 %v2703, %v2703
          %v2713 = vmul.f32 %v2704, %v2704
          %2714 = vadd.xlane.f32.xlu0 %v2712
          %v2715 = vpop.xlane.xlu0 %2714
          %2716 = vadd.xlane.f32.xlu0 %v2713
          %v2717 = vpop.xlane.xlu0 %2716
          %v2718 = vmul.f32 %v2715, %v649
          %v2719 = vmul.f32 %v2717, %v649
          %v2720 = vadd.f32 %v2718, 1e-06
          %v2721 = vadd.f32 %v2719, 1e-06
          %v2722 = vrsqrt.pop %v2720
          %v2723 = vrsqrt.pop %v2721
          %v2724 = vmul.f32 %v2703, %v2722
          %v2725 = vmul.f32 %v2704, %v2723
          %v2727 = vlaneseq
          %v2728 = vshrl.u32 %v2727, 7
          %v2729 = vsub.s32 0, %v2728
          %v2730 = vrot.slane %v2711, %v2729
          %v2732 = vmul.f32 %v2724, %v2730
          %v2733 = vmul.f32 %v2725, %v2730
          %2734 = vst [vmem:[%s12] sm:$0xff] %v2732
          %2735 = vst [vmem:[%s12 + $0x8] sm:$0xff] %v2733
          %v2736 = vpack.c.bf16 %v2733, %v2732
          %v2738 = vunpack.c.l.b16 %v2736
          %v2739 = vunpack.c.h.b16 %v2736
          %v2740 = vpack.c.b16 %v2738, %v2738
          %v2741 = vpack.c.b16 %v2739, %v2739
          %2744 = vst [vmem:[%s13] sm:$0xf] %v2740
          %2745 = vst [vmem:[%s13 + $0x4] sm:$0xf] %v2741
        $region88: #{qwen25vl_forward.2} parent=67 // pred_fallthru
          _
        // Predicated region
        $region89: #{qwen25vl_forward.2} parent=67 // pred_check
          %p2746 = pneg %p346
        $region90: #{qwen25vl_forward.2} parent=67 // pred_check_branch
          %2748 = sbr.rel (%p2746) target = $region92
        $region91: #{qwen25vl_forward.2} parent=67 // pred_region
          _
        $region92: #{qwen25vl_forward.2} parent=67 // pred_fallthru
          _
        // Predicated region
        $region93: #{qwen25vl_forward.2} parent=67 // pred_check
          %p2749 = pneg %p367
        $region94: #{qwen25vl_forward.2} parent=67 // pred_check_branch
          %2751 = sbr.rel (%p2749) target = $region96
        $region95: #{qwen25vl_forward.2} parent=67 // pred_region
          _
        $region96: #{qwen25vl_forward.2} parent=67 // pred_fallthru
          _
        // Predicated region
        $region97: #{qwen25vl_forward.2} parent=67 // pred_check
          %p2752 = pneg %p346
        $region98: #{qwen25vl_forward.2} parent=67 // pred_check_branch
          %2754 = sbr.rel (%p2752) target = $region100
        $region99: #{qwen25vl_forward.2} parent=67 // pred_region
          _
        $region100: #{qwen25vl_forward.2} parent=67 // pred_fallthru
          _
        // Predicated region
        $region101: #{qwen25vl_forward.2} parent=67 // pred_check
          %p2755 = pneg %p367
        $region102: #{qwen25vl_forward.2} parent=67 // pred_check_branch
          %2757 = sbr.rel (%p2755) target = $region104
        $region103: #{qwen25vl_forward.2} parent=67 // pred_region
          _
        $region104: #{qwen25vl_forward.2} parent=67 // pred_fallthru
          _
      $region68: #{qwen25vl_forward.2} parent=5 // pred_fallthru
        _
      %p2758 = scmp.le.s32.totalorder 2, %s26
      // Predicated region
      $region105: #{qwen25vl_forward.2} parent=5 // pred_check
        %p2759 = pneg %p2758
      $region106: #{qwen25vl_forward.2} parent=5 // pred_check_branch
        %2761 = sbr.rel (%p2759) target = $region108
      $region107: #{qwen25vl_forward.2} parent=5 // pred_region
        %s2762 = ssub.s32 %s26, 2
      $region108: #{qwen25vl_forward.2} parent=5 // pred_fallthru
        _
    $region6: #{qwen25vl_forward.2} parent=1 // loop_footer
      %s30 = sadd.s32 1, %s26
    $region7: #{qwen25vl_forward.2} parent=1 // loop_footer_branch
      %25 = sbr.rel target = $region3
    $region8: #{qwen25vl_forward.2} parent=1 // loop_exit
      _
    %2763 = vsyncpa [#allocation3], 1
    %s2764 = scalar_lea.sflag [#allocation3], 1
    %2765 = vsyncpa %s2764, 1
    %2766 = vsyncpa [#allocation5], 1
    %s2767 = scalar_lea.sflag [#allocation5], 1
    %2768 = vsyncpa %s2767, 1

</llo_original>
